<compile_context>
chip_gen: v7x
topology: tpu7x:2x2x1
jax: 0.10.0
libtpu: 0.0.40
codegen_flags: <defaults>
</compile_context>

<pallas_src>
import functools

import jax
import jax.numpy as jnp
from jax.experimental import pallas as pl
from jax.experimental.pallas import tpu as pltpu


# ---------------------------------------------------------------------------
# Fused Pallas kernel: matmul(conv-as-im2col) [+ bias] [+ BN] [+ LeakyReLU]
# ---------------------------------------------------------------------------
def _fused_layer_kernel(*refs, has_bias, has_bn, apply_lrelu, eps, neg_slope):
    """out = act( BN( patches @ W [+ b] ) ), all in one kernel.

    patches/W are bf16 (MXU-native); accumulation + BN + LeakyReLU in f32.
    """
    idx = 0
    p_ref = refs[idx]; idx += 1
    w_ref = refs[idx]; idx += 1
    b_ref = None
    if has_bias:
        b_ref = refs[idx]; idx += 1
    g_ref = beta_ref = None
    if has_bn:
        g_ref = refs[idx]; beta_ref = refs[idx + 1]; idx += 2
    o_ref = refs[idx]

    acc = jnp.dot(p_ref[...], w_ref[...],
                  preferred_element_type=jnp.float32)        # (Mb, Cout) f32
    if has_bias:
        acc = acc + b_ref[...]                               # (1, Cout) broadcast

    if has_bn:
        # Training-mode BatchNorm over all M = N*Ho*Wo rows (single block).
        m = acc.shape[0]
        mean = jnp.sum(acc, axis=0, keepdims=True) * (1.0 / m)
        xc = acc - mean
        var = jnp.sum(xc * xc, axis=0, keepdims=True) * (1.0 / m)   # biased
        scale = g_ref[...] * jax.lax.rsqrt(var + eps)                # EUP rsqrt
        acc = xc * scale + beta_ref[...]

    if apply_lrelu:
        # LeakyReLU(0.2): max(x, 0.2*x) — one mul + one max on the VPU.
        acc = jnp.maximum(acc, neg_slope * acc)

    o_ref[...] = acc.astype(o_ref.dtype)


def fused_conv_layer(patches, w_mat, bias=None, gamma=None, beta=None, *,
                     apply_lrelu, out_dtype, eps=1e-5, neg_slope=0.2,
                     row_block_cap=256):
    """Single pallas_call: conv (as matmul) [+ bias] [+ BN] [+ LeakyReLU]."""
    M, K = patches.shape
    Cout = w_mat.shape[1]
    has_bn = gamma is not None
    has_bias = bias is not None

    # BN needs full-M batch statistics -> single block.  Otherwise tile M
    # (row blocks, multiple of 8) so big inputs pipeline / shard across cores.
    if has_bn or M <= row_block_cap:
        block_m = M
    else:
        block_m = row_block_cap
    num_blocks = pl.cdiv(M, block_m)

    kernel = functools.partial(_fused_layer_kernel, has_bias=has_bias,
                               has_bn=has_bn, apply_lrelu=apply_lrelu,
                               eps=eps, neg_slope=neg_slope)

    in_specs = [pl.BlockSpec((block_m, K), lambda i: (i, 0)),
                pl.BlockSpec((K, Cout), lambda i: (0, 0))]
    args = [patches, w_mat]
    if has_bias:
        in_specs.append(pl.BlockSpec((1, Cout), lambda i: (0, 0)))
        args.append(bias)
    if has_bn:
        in_specs += [pl.BlockSpec((1, Cout), lambda i: (0, 0)),
                     pl.BlockSpec((1, Cout), lambda i: (0, 0))]
        args += [gamma, beta]

    sem = "parallel" if num_blocks > 1 else "arbitrary"
    return pl.pallas_call(
        kernel,
        out_shape=jax.ShapeDtypeStruct((M, Cout), out_dtype),
        grid=(num_blocks,),
        in_specs=in_specs,
        out_specs=pl.BlockSpec((block_m, Cout), lambda i: (i, 0)),
        compiler_params=pltpu.CompilerParams(dimension_semantics=(sem,)),
    )(*args)


# ---------------------------------------------------------------------------
# Glue: im2col, spectral norm, layouts (runs under the same jit as the calls)
# ---------------------------------------------------------------------------
def im2col(x_nhwc, k, stride, pad):
    """k x k patches -> (N*Ho*Wo, k*k*Cin), tap order (kh, kw, cin)."""
    x = jnp.pad(x_nhwc, ((0, 0), (pad, pad), (pad, pad), (0, 0)))
    N, Hp, Wp, C = x.shape
    Ho = (Hp - k) // stride + 1
    Wo = (Wp - k) // stride + 1
    cols = []
    for kh in range(k):
        for kw in range(k):
            cols.append(x[:, kh:kh + stride * Ho:stride,
                          kw:kw + stride * Wo:stride, :])
    patches = jnp.concatenate(cols, axis=-1)               # (N, Ho, Wo, k*k*C)
    return patches.reshape(N * Ho * Wo, k * k * C), (N, Ho, Wo)


def spectral_normalize(w_oihw, u, n_power_iterations=1, eps=1e-12):
    """Mirror torch.nn.utils.spectral_norm: W / sigma, 1 power iteration."""
    cout = w_oihw.shape[0]
    wm = w_oihw.reshape(cout, -1).astype(jnp.float32)
    v = None
    for _ in range(n_power_iterations):
        v = wm.T @ u
        v = v / (jnp.linalg.norm(v) + eps)
        u = wm @ v
        u = u / (jnp.linalg.norm(u) + eps)
    sigma = u @ (wm @ v)
    return w_oihw / sigma


def torch_weight_to_matmul(w_oihw):
    """(Cout, Cin, kh, kw) -> (kh*kw*Cin, Cout), matching im2col tap order."""
    k = w_oihw.shape[-1]
    cin, cout = w_oihw.shape[1], w_oihw.shape[0]
    return jnp.transpose(w_oihw, (2, 3, 1, 0)).reshape(k * k * cin, cout)


# ---------------------------------------------------------------------------
# Layer configuration / parameter construction / one-time preprocessing
# ---------------------------------------------------------------------------
def layer_configs(input_nc=3, ndf=16, n_layers=3):
    """Static per-layer config mirroring the PyTorch module structure."""
    cfgs = [dict(cin=input_nc, cout=ndf, stride=2, has_bn=False,
                 lrelu=True, pad_cin_to=8)]          # lane-align K to 128
    nf = 1
    for n in range(1, n_layers):
        nf_prev, nf = nf, min(2 ** n, 8)
        cfgs.append(dict(cin=ndf * nf_prev, cout=ndf * nf, stride=2,
                         has_bn=True, lrelu=True, pad_cin_to=None))
    nf_prev, nf = nf, min(2 ** n_layers, 8)
    cfgs.append(dict(cin=ndf * nf_prev, cout=ndf * nf, stride=1,
                     has_bn=True, lrelu=True, pad_cin_to=None))
    cfgs.append(dict(cin=ndf * nf, cout=1, stride=1,
                     has_bn=False, lrelu=False, pad_cin_to=None))
    return cfgs


def build_params(key, cfgs, k=4):
    """Raw torch-like parameters (OIHW weights, bias, spectral-norm u, BN affine)."""
    keys = jax.random.split(key, len(cfgs))
    layers = []
    for cfg, kk in zip(cfgs, keys):
        kw_, kb_, ku_ = jax.random.split(kk, 3)
        cin, cout = cfg["cin"], cfg["cout"]
        w = jax.random.normal(kw_, (cout, cin, k, k), jnp.float32) * 0.05
        b = jax.random.normal(kb_, (cout,), jnp.float32) * 0.01
        u = jax.random.normal(ku_, (cout,), jnp.float32)
        u = u / (jnp.linalg.norm(u) + 1e-12)
        layer = {"w": w, "b": b, "u": u}
        if cfg["has_bn"]:
            layer["gamma"] = jnp.ones((cout,), jnp.float32)   # torch BN init
            layer["beta"] = jnp.zeros((cout,), jnp.float32)
        layers.append(layer)
    return layers


def prepare_params(raw_layers, cfgs):
    """One-time weight preprocessing, hoisted out of the per-forward path."""
    prepared = []
    for layer, cfg in zip(raw_layers, cfgs):
        w = spectral_normalize(layer["w"], layer["u"])
        pad_to = cfg["pad_cin_to"]
        if pad_to is not None and pad_to > w.shape[1]:
            w = jnp.pad(w, ((0, 0), (0, pad_to - w.shape[1]), (0, 0), (0, 0)))
        entry = dict(w_mat=torch_weight_to_matmul(w).astype(jnp.bfloat16))
        if cfg["has_bn"]:
            # Conv bias is cancelled by training-mode BN (mean subtraction);
            # drop it entirely for these layers.
            entry["gamma"] = layer["gamma"].reshape(1, -1).astype(jnp.float32)
            entry["beta"] = layer["beta"].reshape(1, -1).astype(jnp.float32)
        else:
            entry["bias"] = layer["b"].reshape(1, -1).astype(jnp.float32)
        prepared.append(entry)
    return prepared


# ---------------------------------------------------------------------------
# Full forward pass (one jit: im2col glue + 5 fused Pallas layer kernels)
# ---------------------------------------------------------------------------
def make_forward(cfgs):
    n_layers_total = len(cfgs)

    @jax.jit
    def forward(x_nchw, prepared):
        x = jnp.transpose(x_nchw, (0, 2, 3, 1)).astype(jnp.bfloat16)  # NCHW->NHWC
        pad_to = cfgs[0]["pad_cin_to"]
        if pad_to is not None and pad_to > x.shape[-1]:               # 3 -> 8 channels
            x = jnp.pad(x, ((0, 0), (0, 0), (0, 0), (0, pad_to - x.shape[-1])))

        for idx, (cfg, p) in enumerate(zip(cfgs, prepared)):
            patches, (N, Ho, Wo) = im2col(x, 4, cfg["stride"], 1)
            is_last = idx == n_layers_total - 1
            out_dtype = jnp.float32 if is_last else jnp.bfloat16
            y = fused_conv_layer(
                patches, p["w_mat"],
                bias=p.get("bias"),
                gamma=p.get("gamma"), beta=p.get("beta"),
                apply_lrelu=cfg["lrelu"], out_dtype=out_dtype)
            x = y.reshape(N, Ho, Wo, -1)

        return jnp.transpose(x, (0, 3, 1, 2)).astype(jnp.float32)     # NHWC->NCHW

    return forward


if __name__ == "__main__":
    key = jax.random.PRNGKey(0)
    k_x, k_p = jax.random.split(key)

    # Small shapes consistent with the module: batch=2, input_nc=3, spatial=32
    # (3 stride-2 convs + two k4 s1 p1 convs -> 2x2 PatchGAN logit map).
    x = jax.random.normal(k_x, (2, 3, 32, 32), jnp.float32)

    cfgs = layer_configs(input_nc=3, ndf=16, n_layers=3)
    raw_params = build_params(k_p, cfgs)
    prepared = prepare_params(raw_params, cfgs)   # hoisted: once per weight update
    forward = make_forward(cfgs)

    out = forward(x, prepared)
    out = jax.block_until_ready(out)

    assert out.shape == (2, 1, 2, 2), out.shape   # PatchGAN logit map (NCHW)
    assert bool(jnp.all(jnp.isfinite(out)))
    print("KERNEL_OK")
</pallas_src>

<mosaic_0001>
module attributes {stable_mosaic.version = 11 : i64} {
  func.func @_fused_layer_kernel(%arg0: i32, %arg1: memref<256x128xbf16, #tpu.memory_space<vmem>>, %arg2: memref<128x16xbf16, #tpu.memory_space<vmem>>, %arg3: memref<1x16xf32, #tpu.memory_space<vmem>>, %arg4: memref<256x16xbf16, #tpu.memory_space<vmem>>) attributes {dimension_semantics = [#tpu.dimension_semantics<parallel>], iteration_bounds = array<i64: 2>, scalar_prefetch = 0 : i64, scratch_operands = 0 : i64, tpu.core_type = #tpu.core_type<tc>, window_params = [{transform_indices = @transform_0, window_bounds = array<i64: 256, 128>}, {pipeline_mode = #tpu.pipeline_mode<synchronous>, transform_indices = @transform_1, window_bounds = array<i64: 128, 16>}, {pipeline_mode = #tpu.pipeline_mode<synchronous>, transform_indices = @transform_2, window_bounds = array<i64: 1, 16>}, {transform_indices = @transform_3, window_bounds = array<i64: 256, 16>}]} {
    %c0 = arith.constant 0 : index
    %c0_0 = arith.constant 0 : index
    %0 = vector.load %arg1[%c0, %c0_0] : memref<256x128xbf16, #tpu.memory_space<vmem>>, vector<256x128xbf16>
    %c0_1 = arith.constant 0 : index
    %c0_2 = arith.constant 0 : index
    %1 = vector.load %arg2[%c0_1, %c0_2] : memref<128x16xbf16, #tpu.memory_space<vmem>>, vector<128x16xbf16>
    %cst = arith.constant dense<0.000000e+00> : vector<256x16xf32>
    %2 = tpu.matmul %0, %1, %cst {dimension_numbers = #tpu.dot_dimension_numbers<[1], [0], [0], [1], [0, 0, 1, 1], [], []>} : vector<256x128xbf16>, vector<128x16xbf16>, vector<256x16xf32> -> vector<256x16xf32>
    %c0_3 = arith.constant 0 : index
    %c0_4 = arith.constant 0 : index
    %3 = vector.load %arg3[%c0_3, %c0_4] : memref<1x16xf32, #tpu.memory_space<vmem>>, vector<1x16xf32>
    %4 = vector.broadcast %3 : vector<1x16xf32> to vector<256x16xf32>
    %5 = arith.addf %2, %4 : vector<256x16xf32>
    %cst_5 = arith.constant 2.000000e-01 : f32
    %6 = vector.broadcast %cst_5 : f32 to vector<256x16xf32>
    %7 = arith.mulf %6, %5 : vector<256x16xf32>
    %8 = arith.maximumf %5, %7 : vector<256x16xf32>
    %9 = arith.truncf %8 : vector<256x16xf32> to vector<256x16xbf16>
    %c0_6 = arith.constant 0 : index
    %c0_7 = arith.constant 0 : index
    %10 = vector.load %arg4[%c0_6, %c0_7] : memref<256x16xbf16, #tpu.memory_space<vmem>>, vector<256x16xbf16>
    tpu.vector_store %arg4[%c0_6, %c0_7], %9 {strides = array<i32>} : memref<256x16xbf16, #tpu.memory_space<vmem>>, vector<256x16xbf16>,
    return
  }
  func.func @transform_0(%arg0: i32) -> (i32, i32) {
    %c0_i32 = arith.constant 0 : i32
    %c0_i32_0 = arith.constant 0 : i32
    return %arg0, %c0_i32 : i32, i32
  }
  func.func @transform_1(%arg0: i32) -> (i32, i32) {
    %c0_i32 = arith.constant 0 : i32
    %c0_i32_0 = arith.constant 0 : i32
    %c0_i32_1 = arith.constant 0 : i32
    return %c0_i32, %c0_i32_0 : i32, i32
  }
  func.func @transform_2(%arg0: i32) -> (i32, i32) {
    %c0_i32 = arith.constant 0 : i32
    %c0_i32_0 = arith.constant 0 : i32
    %c0_i32_1 = arith.constant 0 : i32
    return %c0_i32, %c0_i32_0 : i32, i32
  }
  func.func @transform_3(%arg0: i32) -> (i32, i32) {
    %c0_i32 = arith.constant 0 : i32
    %c0_i32_0 = arith.constant 0 : i32
    return %arg0, %c0_i32 : i32, i32
  }
}

module attributes {stable_mosaic.version = 11 : i64} {
  func.func @_fused_layer_kernel(%arg0: i32, %arg1: memref<128x256xbf16, #tpu.memory_space<vmem>>, %arg2: memref<256x32xbf16, #tpu.memory_space<vmem>>, %arg3: memref<1x32xf32, #tpu.memory_space<vmem>>, %arg4: memref<1x32xf32, #tpu.memory_space<vmem>>, %arg5: memref<128x32xbf16, #tpu.memory_space<vmem>>) attributes {dimension_semantics = [#tpu.dimension_semantics<arbitrary>], iteration_bounds = array<i64: 1>, scalar_prefetch = 0 : i64, scratch_operands = 0 : i64, tpu.core_type = #tpu.core_type<tc>, window_params = [{transform_indices = @transform_0, window_bounds = array<i64: 128, 256>}, {pipeline_mode = #tpu.pipeline_mode<synchronous>, transform_indices = @transform_1, window_bounds = array<i64: 256, 32>}, {pipeline_mode = #tpu.pipeline_mode<synchronous>, transform_indices = @transform_2, window_bounds = array<i64: 1, 32>}, {pipeline_mode = #tpu.pipeline_mode<synchronous>, transform_indices = @transform_3, window_bounds = array<i64: 1, 32>}, {transform_indices = @transform_4, window_bounds = array<i64: 128, 32>}]} {
    %c0 = arith.constant 0 : index
    %c0_0 = arith.constant 0 : index
    %0 = vector.load %arg1[%c0, %c0_0] : memref<128x256xbf16, #tpu.memory_space<vmem>>, vector<128x256xbf16>
    %c0_1 = arith.constant 0 : index
    %c0_2 = arith.constant 0 : index
    %1 = vector.load %arg2[%c0_1, %c0_2] : memref<256x32xbf16, #tpu.memory_space<vmem>>, vector<256x32xbf16>
    %cst = arith.constant dense<0.000000e+00> : vector<128x32xf32>
    %2 = tpu.matmul %0, %1, %cst {dimension_numbers = #tpu.dot_dimension_numbers<[1], [0], [0], [1], [0, 0, 1, 1], [], []>} : vector<128x256xbf16>, vector<256x32xbf16>, vector<128x32xf32> -> vector<128x32xf32>
    %cst_3 = arith.constant dense<0.000000e+00> : vector<32xf32>
    %3 = vector.multi_reduction <add>, %2, %cst_3 [0] : vector<128x32xf32> to vector<32xf32>
    %4 = vector.shape_cast %3 : vector<32xf32> to vector<1x32xf32>
    %cst_4 = arith.constant 7.812500e-03 : f32
    %5 = vector.broadcast %cst_4 : f32 to vector<1x32xf32>
    %6 = arith.mulf %4, %5 : vector<1x32xf32>
    %7 = vector.broadcast %6 : vector<1x32xf32> to vector<128x32xf32>
    %8 = arith.subf %2, %7 : vector<128x32xf32>
    %9 = arith.mulf %8, %8 : vector<128x32xf32>
    %cst_5 = arith.constant dense<0.000000e+00> : vector<32xf32>
    %10 = vector.multi_reduction <add>, %9, %cst_5 [0] : vector<128x32xf32> to vector<32xf32>
    %11 = vector.shape_cast %10 : vector<32xf32> to vector<1x32xf32>
    %cst_6 = arith.constant 7.812500e-03 : f32
    %12 = vector.broadcast %cst_6 : f32 to vector<1x32xf32>
    %13 = arith.mulf %11, %12 : vector<1x32xf32>
    %c0_7 = arith.constant 0 : index
    %c0_8 = arith.constant 0 : index
    %14 = vector.load %arg3[%c0_7, %c0_8] : memref<1x32xf32, #tpu.memory_space<vmem>>, vector<1x32xf32>
    %cst_9 = arith.constant 9.99999974E-6 : f32
    %15 = vector.broadcast %cst_9 : f32 to vector<1x32xf32>
    %16 = arith.addf %13, %15 : vector<1x32xf32>
    %17 = math.rsqrt %16 : vector<1x32xf32>
    %18 = arith.mulf %14, %17 : vector<1x32xf32>
    %19 = vector.broadcast %18 : vector<1x32xf32> to vector<128x32xf32>
    %20 = arith.mulf %8, %19 : vector<128x32xf32>
    %c0_10 = arith.constant 0 : index
    %c0_11 = arith.constant 0 : index
    %21 = vector.load %arg4[%c0_10, %c0_11] : memref<1x32xf32, #tpu.memory_space<vmem>>, vector<1x32xf32>
    %22 = vector.broadcast %21 : vector<1x32xf32> to vector<128x32xf32>
    %23 = arith.addf %20, %22 : vector<128x32xf32>
    %cst_12 = arith.constant 2.000000e-01 : f32
    %24 = vector.broadcast %cst_12 : f32 to vector<128x32xf32>
    %25 = arith.mulf %24, %23 : vector<128x32xf32>
    %26 = arith.maximumf %23, %25 : vector<128x32xf32>
    %27 = arith.truncf %26 : vector<128x32xf32> to vector<128x32xbf16>
    %c0_13 = arith.constant 0 : index
    %c0_14 = arith.constant 0 : index
    %28 = vector.load %arg5[%c0_13, %c0_14] : memref<128x32xbf16, #tpu.memory_space<vmem>>, vector<128x32xbf16>
    tpu.vector_store %arg5[%c0_13, %c0_14], %27 {strides = array<i32>} : memref<128x32xbf16, #tpu.memory_space<vmem>>, vector<128x32xbf16>,
    return
  }
  func.func @transform_0(%arg0: i32) -> (i32, i32) {
    %c0_i32 = arith.constant 0 : i32
    %c0_i32_0 = arith.constant 0 : i32
    return %arg0, %c0_i32 : i32, i32
  }
  func.func @transform_1(%arg0: i32) -> (i32, i32) {
    %c0_i32 = arith.constant 0 : i32
    %c0_i32_0 = arith.constant 0 : i32
    %c0_i32_1 = arith.constant 0 : i32
    return %c0_i32, %c0_i32_0 : i32, i32
  }
  func.func @transform_2(%arg0: i32) -> (i32, i32) {
    %c0_i32 = arith.constant 0 : i32
    %c0_i32_0 = arith.constant 0 : i32
    %c0_i32_1 = arith.constant 0 : i32
    return %c0_i32, %c0_i32_0 : i32, i32
  }
  func.func @transform_3(%arg0: i32) -> (i32, i32) {
    %c0_i32 = arith.constant 0 : i32
    %c0_i32_0 = arith.constant 0 : i32
    %c0_i32_1 = arith.constant 0 : i32
    return %c0_i32, %c0_i32_0 : i32, i32
  }
  func.func @transform_4(%arg0: i32) -> (i32, i32) {
    %c0_i32 = arith.constant 0 : i32
    %c0_i32_0 = arith.constant 0 : i32
    return %arg0, %c0_i32 : i32, i32
  }
}

module attributes {stable_mosaic.version = 11 : i64} {
  func.func @_fused_layer_kernel(%arg0: i32, %arg1: memref<32x512xbf16, #tpu.memory_space<vmem>>, %arg2: memref<512x64xbf16, #tpu.memory_space<vmem>>, %arg3: memref<1x64xf32, #tpu.memory_space<vmem>>, %arg4: memref<1x64xf32, #tpu.memory_space<vmem>>, %arg5: memref<32x64xbf16, #tpu.memory_space<vmem>>) attributes {dimension_semantics = [#tpu.dimension_semantics<arbitrary>], iteration_bounds = array<i64: 1>, scalar_prefetch = 0 : i64, scratch_operands = 0 : i64, tpu.core_type = #tpu.core_type<tc>, window_params = [{transform_indices = @transform_0, window_bounds = array<i64: 32, 512>}, {pipeline_mode = #tpu.pipeline_mode<synchronous>, transform_indices = @transform_1, window_bounds = array<i64: 512, 64>}, {pipeline_mode = #tpu.pipeline_mode<synchronous>, transform_indices = @transform_2, window_bounds = array<i64: 1, 64>}, {pipeline_mode = #tpu.pipeline_mode<synchronous>, transform_indices = @transform_3, window_bounds = array<i64: 1, 64>}, {transform_indices = @transform_4, window_bounds = array<i64: 32, 64>}]} {
    %c0 = arith.constant 0 : index
    %c0_0 = arith.constant 0 : index
    %0 = vector.load %arg1[%c0, %c0_0] : memref<32x512xbf16, #tpu.memory_space<vmem>>, vector<32x512xbf16>
    %c0_1 = arith.constant 0 : index
    %c0_2 = arith.constant 0 : index
    %1 = vector.load %arg2[%c0_1, %c0_2] : memref<512x64xbf16, #tpu.memory_space<vmem>>, vector<512x64xbf16>
    %cst = arith.constant dense<0.000000e+00> : vector<32x64xf32>
    %2 = tpu.matmul %0, %1, %cst {dimension_numbers = #tpu.dot_dimension_numbers<[1], [0], [0], [1], [0, 0, 1, 1], [], []>} : vector<32x512xbf16>, vector<512x64xbf16>, vector<32x64xf32> -> vector<32x64xf32>
    %cst_3 = arith.constant dense<0.000000e+00> : vector<64xf32>
    %3 = vector.multi_reduction <add>, %2, %cst_3 [0] : vector<32x64xf32> to vector<64xf32>
    %4 = vector.shape_cast %3 : vector<64xf32> to vector<1x64xf32>
    %cst_4 = arith.constant 3.125000e-02 : f32
    %5 = vector.broadcast %cst_4 : f32 to vector<1x64xf32>
    %6 = arith.mulf %4, %5 : vector<1x64xf32>
    %7 = vector.broadcast %6 : vector<1x64xf32> to vector<32x64xf32>
    %8 = arith.subf %2, %7 : vector<32x64xf32>
    %9 = arith.mulf %8, %8 : vector<32x64xf32>
    %cst_5 = arith.constant dense<0.000000e+00> : vector<64xf32>
    %10 = vector.multi_reduction <add>, %9, %cst_5 [0] : vector<32x64xf32> to vector<64xf32>
    %11 = vector.shape_cast %10 : vector<64xf32> to vector<1x64xf32>
    %cst_6 = arith.constant 3.125000e-02 : f32
    %12 = vector.broadcast %cst_6 : f32 to vector<1x64xf32>
    %13 = arith.mulf %11, %12 : vector<1x64xf32>
    %c0_7 = arith.constant 0 : index
    %c0_8 = arith.constant 0 : index
    %14 = vector.load %arg3[%c0_7, %c0_8] : memref<1x64xf32, #tpu.memory_space<vmem>>, vector<1x64xf32>
    %cst_9 = arith.constant 9.99999974E-6 : f32
    %15 = vector.broadcast %cst_9 : f32 to vector<1x64xf32>
    %16 = arith.addf %13, %15 : vector<1x64xf32>
    %17 = math.rsqrt %16 : vector<1x64xf32>
    %18 = arith.mulf %14, %17 : vector<1x64xf32>
    %19 = vector.broadcast %18 : vector<1x64xf32> to vector<32x64xf32>
    %20 = arith.mulf %8, %19 : vector<32x64xf32>
    %c0_10 = arith.constant 0 : index
    %c0_11 = arith.constant 0 : index
    %21 = vector.load %arg4[%c0_10, %c0_11] : memref<1x64xf32, #tpu.memory_space<vmem>>, vector<1x64xf32>
    %22 = vector.broadcast %21 : vector<1x64xf32> to vector<32x64xf32>
    %23 = arith.addf %20, %22 : vector<32x64xf32>
    %cst_12 = arith.constant 2.000000e-01 : f32
    %24 = vector.broadcast %cst_12 : f32 to vector<32x64xf32>
    %25 = arith.mulf %24, %23 : vector<32x64xf32>
    %26 = arith.maximumf %23, %25 : vector<32x64xf32>
    %27 = arith.truncf %26 : vector<32x64xf32> to vector<32x64xbf16>
    %c0_13 = arith.constant 0 : index
    %c0_14 = arith.constant 0 : index
    %28 = vector.load %arg5[%c0_13, %c0_14] : memref<32x64xbf16, #tpu.memory_space<vmem>>, vector<32x64xbf16>
    tpu.vector_store %arg5[%c0_13, %c0_14], %27 {strides = array<i32>} : memref<32x64xbf16, #tpu.memory_space<vmem>>, vector<32x64xbf16>,
    return
  }
  func.func @transform_0(%arg0: i32) -> (i32, i32) {
    %c0_i32 = arith.constant 0 : i32
    %c0_i32_0 = arith.constant 0 : i32
    return %arg0, %c0_i32 : i32, i32
  }
  func.func @transform_1(%arg0: i32) -> (i32, i32) {
    %c0_i32 = arith.constant 0 : i32
    %c0_i32_0 = arith.constant 0 : i32
    %c0_i32_1 = arith.constant 0 : i32
    return %c0_i32, %c0_i32_0 : i32, i32
  }
  func.func @transform_2(%arg0: i32) -> (i32, i32) {
    %c0_i32 = arith.constant 0 : i32
    %c0_i32_0 = arith.constant 0 : i32
    %c0_i32_1 = arith.constant 0 : i32
    return %c0_i32, %c0_i32_0 : i32, i32
  }
  func.func @transform_3(%arg0: i32) -> (i32, i32) {
    %c0_i32 = arith.constant 0 : i32
    %c0_i32_0 = arith.constant 0 : i32
    %c0_i32_1 = arith.constant 0 : i32
    return %c0_i32, %c0_i32_0 : i32, i32
  }
  func.func @transform_4(%arg0: i32) -> (i32, i32) {
    %c0_i32 = arith.constant 0 : i32
    %c0_i32_0 = arith.constant 0 : i32
    return %arg0, %c0_i32 : i32, i32
  }
}

module attributes {stable_mosaic.version = 11 : i64} {
  func.func @_fused_layer_kernel(%arg0: i32, %arg1: memref<18x1024xbf16, #tpu.memory_space<vmem>>, %arg2: memref<1024x128xbf16, #tpu.memory_space<vmem>>, %arg3: memref<1x128xf32, #tpu.memory_space<vmem>>, %arg4: memref<1x128xf32, #tpu.memory_space<vmem>>, %arg5: memref<18x128xbf16, #tpu.memory_space<vmem>>) attributes {dimension_semantics = [#tpu.dimension_semantics<arbitrary>], iteration_bounds = array<i64: 1>, scalar_prefetch = 0 : i64, scratch_operands = 0 : i64, tpu.core_type = #tpu.core_type<tc>, window_params = [{transform_indices = @transform_0, window_bounds = array<i64: 18, 1024>}, {pipeline_mode = #tpu.pipeline_mode<synchronous>, transform_indices = @transform_1, window_bounds = array<i64: 1024, 128>}, {pipeline_mode = #tpu.pipeline_mode<synchronous>, transform_indices = @transform_2, window_bounds = array<i64: 1, 128>}, {pipeline_mode = #tpu.pipeline_mode<synchronous>, transform_indices = @transform_3, window_bounds = array<i64: 1, 128>}, {transform_indices = @transform_4, window_bounds = array<i64: 18, 128>}]} {
    %c0 = arith.constant 0 : index
    %c0_0 = arith.constant 0 : index
    %0 = vector.load %arg1[%c0, %c0_0] : memref<18x1024xbf16, #tpu.memory_space<vmem>>, vector<18x1024xbf16>
    %c0_1 = arith.constant 0 : index
    %c0_2 = arith.constant 0 : index
    %1 = vector.load %arg2[%c0_1, %c0_2] : memref<1024x128xbf16, #tpu.memory_space<vmem>>, vector<1024x128xbf16>
    %cst = arith.constant dense<0.000000e+00> : vector<18x128xf32>
    %2 = tpu.matmul %0, %1, %cst {dimension_numbers = #tpu.dot_dimension_numbers<[1], [0], [0], [1], [0, 0, 1, 1], [], []>} : vector<18x1024xbf16>, vector<1024x128xbf16>, vector<18x128xf32> -> vector<18x128xf32>
    %cst_3 = arith.constant dense<0.000000e+00> : vector<128xf32>
    %3 = vector.multi_reduction <add>, %2, %cst_3 [0] : vector<18x128xf32> to vector<128xf32>
    %4 = vector.shape_cast %3 : vector<128xf32> to vector<1x128xf32>
    %cst_4 = arith.constant 0.055555556 : f32
    %5 = vector.broadcast %cst_4 : f32 to vector<1x128xf32>
    %6 = arith.mulf %4, %5 : vector<1x128xf32>
    %7 = vector.broadcast %6 : vector<1x128xf32> to vector<18x128xf32>
    %8 = arith.subf %2, %7 : vector<18x128xf32>
    %9 = arith.mulf %8, %8 : vector<18x128xf32>
    %cst_5 = arith.constant dense<0.000000e+00> : vector<128xf32>
    %10 = vector.multi_reduction <add>, %9, %cst_5 [0] : vector<18x128xf32> to vector<128xf32>
    %11 = vector.shape_cast %10 : vector<128xf32> to vector<1x128xf32>
    %cst_6 = arith.constant 0.055555556 : f32
    %12 = vector.broadcast %cst_6 : f32 to vector<1x128xf32>
    %13 = arith.mulf %11, %12 : vector<1x128xf32>
    %c0_7 = arith.constant 0 : index
    %c0_8 = arith.constant 0 : index
    %14 = vector.load %arg3[%c0_7, %c0_8] : memref<1x128xf32, #tpu.memory_space<vmem>>, vector<1x128xf32>
    %cst_9 = arith.constant 9.99999974E-6 : f32
    %15 = vector.broadcast %cst_9 : f32 to vector<1x128xf32>
    %16 = arith.addf %13, %15 : vector<1x128xf32>
    %17 = math.rsqrt %16 : vector<1x128xf32>
    %18 = arith.mulf %14, %17 : vector<1x128xf32>
    %19 = vector.broadcast %18 : vector<1x128xf32> to vector<18x128xf32>
    %20 = arith.mulf %8, %19 : vector<18x128xf32>
    %c0_10 = arith.constant 0 : index
    %c0_11 = arith.constant 0 : index
    %21 = vector.load %arg4[%c0_10, %c0_11] : memref<1x128xf32, #tpu.memory_space<vmem>>, vector<1x128xf32>
    %22 = vector.broadcast %21 : vector<1x128xf32> to vector<18x128xf32>
    %23 = arith.addf %20, %22 : vector<18x128xf32>
    %cst_12 = arith.constant 2.000000e-01 : f32
    %24 = vector.broadcast %cst_12 : f32 to vector<18x128xf32>
    %25 = arith.mulf %24, %23 : vector<18x128xf32>
    %26 = arith.maximumf %23, %25 : vector<18x128xf32>
    %27 = arith.truncf %26 : vector<18x128xf32> to vector<18x128xbf16>
    %c0_13 = arith.constant 0 : index
    %c0_14 = arith.constant 0 : index
    %28 = vector.load %arg5[%c0_13, %c0_14] : memref<18x128xbf16, #tpu.memory_space<vmem>>, vector<18x128xbf16>
    tpu.vector_store %arg5[%c0_13, %c0_14], %27 {strides = array<i32>} : memref<18x128xbf16, #tpu.memory_space<vmem>>, vector<18x128xbf16>,
    return
  }
  func.func @transform_0(%arg0: i32) -> (i32, i32) {
    %c0_i32 = arith.constant 0 : i32
    %c0_i32_0 = arith.constant 0 : i32
    return %arg0, %c0_i32 : i32, i32
  }
  func.func @transform_1(%arg0: i32) -> (i32, i32) {
    %c0_i32 = arith.constant 0 : i32
    %c0_i32_0 = arith.constant 0 : i32
    %c0_i32_1 = arith.constant 0 : i32
    return %c0_i32, %c0_i32_0 : i32, i32
  }
  func.func @transform_2(%arg0: i32) -> (i32, i32) {
    %c0_i32 = arith.constant 0 : i32
    %c0_i32_0 = arith.constant 0 : i32
    %c0_i32_1 = arith.constant 0 : i32
    return %c0_i32, %c0_i32_0 : i32, i32
  }
  func.func @transform_3(%arg0: i32) -> (i32, i32) {
    %c0_i32 = arith.constant 0 : i32
    %c0_i32_0 = arith.constant 0 : i32
    %c0_i32_1 = arith.constant 0 : i32
    return %c0_i32, %c0_i32_0 : i32, i32
  }
  func.func @transform_4(%arg0: i32) -> (i32, i32) {
    %c0_i32 = arith.constant 0 : i32
    %c0_i32_0 = arith.constant 0 : i32
    return %arg0, %c0_i32 : i32, i32
  }
}

module attributes {stable_mosaic.version = 11 : i64} {
  func.func @_fused_layer_kernel(%arg0: i32, %arg1: memref<8x2048xbf16, #tpu.memory_space<vmem>>, %arg2: memref<2048x1xbf16, #tpu.memory_space<vmem>>, %arg3: memref<1x1xf32, #tpu.memory_space<vmem>>, %arg4: memref<8x1xf32, #tpu.memory_space<vmem>>) attributes {dimension_semantics = [#tpu.dimension_semantics<arbitrary>], iteration_bounds = array<i64: 1>, scalar_prefetch = 0 : i64, scratch_operands = 0 : i64, tpu.core_type = #tpu.core_type<tc>, window_params = [{transform_indices = @transform_0, window_bounds = array<i64: 8, 2048>}, {pipeline_mode = #tpu.pipeline_mode<synchronous>, transform_indices = @transform_1, window_bounds = array<i64: 2048, 1>}, {pipeline_mode = #tpu.pipeline_mode<synchronous>, transform_indices = @transform_2, window_bounds = array<i64: 1, 1>}, {transform_indices = @transform_3, window_bounds = array<i64: 8, 1>}]} {
    %c0 = arith.constant 0 : index
    %c0_0 = arith.constant 0 : index
    %0 = vector.load %arg1[%c0, %c0_0] : memref<8x2048xbf16, #tpu.memory_space<vmem>>, vector<8x2048xbf16>
    %c0_1 = arith.constant 0 : index
    %c0_2 = arith.constant 0 : index
    %1 = vector.load %arg2[%c0_1, %c0_2] : memref<2048x1xbf16, #tpu.memory_space<vmem>>, vector<2048x1xbf16>
    %cst = arith.constant dense<0.000000e+00> : vector<8x1xf32>
    %2 = tpu.matmul %0, %1, %cst {dimension_numbers = #tpu.dot_dimension_numbers<[1], [0], [0], [1], [0, 0, 1, 1], [], []>} : vector<8x2048xbf16>, vector<2048x1xbf16>, vector<8x1xf32> -> vector<8x1xf32>
    %c0_3 = arith.constant 0 : index
    %c0_4 = arith.constant 0 : index
    %3 = vector.load %arg3[%c0_3, %c0_4] : memref<1x1xf32, #tpu.memory_space<vmem>>, vector<1x1xf32>
    %4 = vector.broadcast %3 : vector<1x1xf32> to vector<8x1xf32>
    %5 = arith.addf %2, %4 : vector<8x1xf32>
    %c0_5 = arith.constant 0 : index
    %c0_6 = arith.constant 0 : index
    %6 = vector.load %arg4[%c0_5, %c0_6] : memref<8x1xf32, #tpu.memory_space<vmem>>, vector<8x1xf32>
    tpu.vector_store %arg4[%c0_5, %c0_6], %5 {strides = array<i32>} : memref<8x1xf32, #tpu.memory_space<vmem>>, vector<8x1xf32>,
    return
  }
  func.func @transform_0(%arg0: i32) -> (i32, i32) {
    %c0_i32 = arith.constant 0 : i32
    %c0_i32_0 = arith.constant 0 : i32
    return %arg0, %c0_i32 : i32, i32
  }
  func.func @transform_1(%arg0: i32) -> (i32, i32) {
    %c0_i32 = arith.constant 0 : i32
    %c0_i32_0 = arith.constant 0 : i32
    %c0_i32_1 = arith.constant 0 : i32
    return %c0_i32, %c0_i32_0 : i32, i32
  }
  func.func @transform_2(%arg0: i32) -> (i32, i32) {
    %c0_i32 = arith.constant 0 : i32
    %c0_i32_0 = arith.constant 0 : i32
    %c0_i32_1 = arith.constant 0 : i32
    return %c0_i32, %c0_i32_0 : i32, i32
  }
  func.func @transform_3(%arg0: i32) -> (i32, i32) {
    %c0_i32 = arith.constant 0 : i32
    %c0_i32_0 = arith.constant 0 : i32
    return %arg0, %c0_i32 : i32, i32
  }
}

</mosaic_0001>

<llo_original>
// kernel: forward.5
$region0: #{forward.5}
  #allocation0 [shape = 'u32[]', space=smem, size = 0x4, offset = 0x4, fixed_abs, tag = 'smem constant byte address 0x4 - core index']
  #allocation1 [shape = 'u32[144,128]{1,0:T(1,128)}', space=vmem, size = 0x12000, scoped, tag = 'internal scratch']
  %s0 = inlined_call_operand.vmem [shape: bf16[512,128], index: 0, kind: input, shape index: {}]
  %s1 = inlined_call_operand.vmem [shape: bf16[128,16], index: 1, kind: input, shape index: {}]
  %s2 = inlined_call_operand.vmem [shape: f32[1,16], index: 2, kind: input, shape index: {}]
  %s3 = inlined_call_operand.vmem [shape: bf16[512,16], index: 3, kind: output, shape index: {}]
  %s4 = sld [smem:[#allocation0]]
  $region45: #{forward.5} parent=0
    _
  %s6 = ssub.s32 1, %s4
  %s7 = scalar_select 0, %s6, %s4
  loop: start=0, step=1, limit=4
  $region2: #{forward.5} parent=0 // loop_pre_header
    _
  $region3: #{forward.5} parent=0 // loop_header
    %s9 = sphi 0, %s13
    %p10 = scmp.ge.s32.totalorder %s9, 4
    %s19 = sphi 0, %s21
    %s22 = sphi 0, %s19
    %s23 = sphi 0, %s22
    %s39 = sphi 0, %s23
    %s43 = sphi 0, %s43
    %s45 = sphi 0, %s43
    %s46 = sphi 0, %s45
    %s60 = sphi 0, %s46
    %s64 = sphi 0, %s64
    %s66 = sphi 0, %s64
    %s67 = sphi 0, %s66
    %s81 = sphi 0, %s67
    %s87 = sphi 0, %s89
    %s90 = sphi 0, %s87
    %s91 = sphi 0, %s90
    %s107 = sphi 0, %s91
  $region4: #{forward.5} parent=0 // loop_header_branch
    %12 = sbr.rel (%p10) target = $region8
  $region5: #{forward.5} parent=0 // loop_body
    %s14 = ssub.s32 %s9, 1
    %s15 = ssub.s32 %s9, 2
    %s16 = sadd.s32 %s9, 1
    %s17 = ssub.s32 %s9, %s16
    %p18 = scmp.eq.s32.totalorder %s17, 0
    %s20 = sadd.s32 %s19, 1
    %s21 = scalar_select %p18, %s19, %s20
    %p24 = pneg %p18
    %p25 = scmp.eq.s32.totalorder %s9, 1
    %p26 = por %p24, %p25
    %p27 = scmp.ne.s32.totalorder %s19, %s22
    %p28 = scmp.eq.s32.totalorder %s9, 0
    %p29 = por %p27, %p28
    %p30 = scmp.ne.s32.totalorder %s19, %s22
    %p31 = scmp.eq.s32.totalorder %s14, 1
    %p32 = por %p30, %p31
    %p33 = scmp.ne.s32.totalorder %s22, %s23
    %p34 = scmp.eq.s32.totalorder %s14, 0
    %p35 = por %p33, %p34
    %p36 = scmp.ne.s32.totalorder %s22, %s23
    %p37 = scmp.eq.s32.totalorder %s15, 1
    %p38 = por %p36, %p37
    %p40 = scmp.ne.s32.totalorder %s23, %s39
    %p41 = scmp.eq.s32.totalorder %s15, 0
    %p42 = por %p40, %p41
    %s44 = sadd.s32 %s43, 1
    %p47 = scmp.eq.s32.totalorder %s9, 1
    %p48 = scmp.ne.s32.totalorder %s43, %s45
    %p49 = scmp.eq.s32.totalorder %s9, 0
    %p50 = por %p48, %p49
    %p51 = scmp.ne.s32.totalorder %s43, %s45
    %p52 = scmp.eq.s32.totalorder %s14, 1
    %p53 = por %p51, %p52
    %p54 = scmp.ne.s32.totalorder %s45, %s46
    %p55 = scmp.eq.s32.totalorder %s14, 0
    %p56 = por %p54, %p55
    %p57 = scmp.ne.s32.totalorder %s45, %s46
    %p58 = scmp.eq.s32.totalorder %s15, 1
    %p59 = por %p57, %p58
    %p61 = scmp.ne.s32.totalorder %s46, %s60
    %p62 = scmp.eq.s32.totalorder %s15, 0
    %p63 = por %p61, %p62
    %s65 = sadd.s32 %s64, 1
    %p68 = scmp.eq.s32.totalorder %s9, 1
    %p69 = scmp.ne.s32.totalorder %s64, %s66
    %p70 = scmp.eq.s32.totalorder %s9, 0
    %p71 = por %p69, %p70
    %p72 = scmp.ne.s32.totalorder %s64, %s66
    %p73 = scmp.eq.s32.totalorder %s14, 1
    %p74 = por %p72, %p73
    %p75 = scmp.ne.s32.totalorder %s66, %s67
    %p76 = scmp.eq.s32.totalorder %s14, 0
    %p77 = por %p75, %p76
    %p78 = scmp.ne.s32.totalorder %s66, %s67
    %p79 = scmp.eq.s32.totalorder %s15, 1
    %p80 = por %p78, %p79
    %p82 = scmp.ne.s32.totalorder %s67, %s81
    %p83 = scmp.eq.s32.totalorder %s15, 0
    %p84 = por %p82, %p83
    %s85 = ssub.s32 %s9, %s16
    %p86 = scmp.eq.s32.totalorder %s85, 0
    %s88 = sadd.s32 %s87, 1
    %s89 = scalar_select %p86, %s87, %s88
    %p92 = pneg %p86
    %p93 = scmp.eq.s32.totalorder %s9, 1
    %p94 = por %p92, %p93
    %p95 = scmp.ne.s32.totalorder %s87, %s90
    %p96 = scmp.eq.s32.totalorder %s9, 0
    %p97 = por %p95, %p96
    %p98 = scmp.ne.s32.totalorder %s87, %s90
    %p99 = scmp.eq.s32.totalorder %s14, 1
    %p100 = por %p98, %p99
    %p101 = scmp.ne.s32.totalorder %s90, %s91
    %p102 = scmp.eq.s32.totalorder %s14, 0
    %p103 = por %p101, %p102
    %p104 = scmp.ne.s32.totalorder %s90, %s91
    %p105 = scmp.eq.s32.totalorder %s15, 1
    %p106 = por %p104, %p105
    %p108 = scmp.ne.s32.totalorder %s91, %s107
    %p109 = scmp.eq.s32.totalorder %s15, 0
    %p110 = por %p108, %p109
    %p111 = scmp.le.s32.totalorder 1, %s9
    %p112 = scmp.lt.s32.totalorder %s9, 3
    %p113 = pnand %p111, %p112
    %p114 = pneg %p113
    // Predicated region
    $region9: #{forward.5} parent=5 // pred_check
      _
    $region10: #{forward.5} parent=5 // pred_check_branch
      %116 = sbr.rel (%p113) target = $region12
    $region11: #{forward.5} parent=5 // pred_region
      %s117 = ssub.s32 %s9, 1
      // Predicated region
      $region13: #{forward.5} parent=11 // pred_check
        %p118 = pneg %p56
      $region14: #{forward.5} parent=11 // pred_check_branch
        %120 = sbr.rel (%p118) target = $region16
      $region15: #{forward.5} parent=11 // pred_region
        _
      $region16: #{forward.5} parent=11 // pred_fallthru
        _
      // Predicated region
      $region17: #{forward.5} parent=11 // pred_check
        %p121 = pneg %p77
      $region18: #{forward.5} parent=11 // pred_check_branch
        %123 = sbr.rel (%p121) target = $region20
      $region19: #{forward.5} parent=11 // pred_region
        _
      $region20: #{forward.5} parent=11 // pred_fallthru
        _
    $region12: #{forward.5} parent=5 // pred_fallthru
      _
    %p124 = scmp.lt.s32.totalorder %s9, 2
    // Predicated region
    $region21: #{forward.5} parent=5 // pred_check
      %p125 = pneg %p124
    $region22: #{forward.5} parent=5 // pred_check_branch
      %127 = sbr.rel (%p125) target = $region24
    $region23: #{forward.5} parent=5 // pred_region
      // Predicated region
      $region25: #{forward.5} parent=23 // pred_check
        %p128 = pneg %p29
      $region26: #{forward.5} parent=23 // pred_check_branch
        %130 = sbr.rel (%p128) target = $region28
      $region27: #{forward.5} parent=23 // pred_region
        %s131 = smul.u32 32, %s9
        %p132 = scmp.lt.s32.totalorder %s131, 63
        %s133 = scalar_select %p132, %s131, 63
        %s134 = smul.addr %s133, 4
        %s135 = scalar_lea.vmem %s0, %s134
        %s136 = smul.u32 32, %s9
      $region28: #{forward.5} parent=23 // pred_fallthru
        _
    $region24: #{forward.5} parent=5 // pred_fallthru
      _
    %p137 = scmp.le.s32.totalorder 1, %s9
    %p138 = scmp.lt.s32.totalorder %s9, 3
    %p139 = pnand %p137, %p138
    %p140 = pneg %p139
    // Predicated region
    $region29: #{forward.5} parent=5 // pred_check
      _
    $region30: #{forward.5} parent=5 // pred_check_branch
      %142 = sbr.rel (%p139) target = $region32
    $region31: #{forward.5} parent=5 // pred_region
      %s143 = ssub.s32 %s9, 1
      %s144 = smul.u32 32, %s14
      %p145 = scmp.lt.s32.totalorder %s144, 63
      %s146 = scalar_select %p145, %s144, 63
      %s147 = smul.addr %s146, 4
      %s148 = scalar_lea.vmem %s0, %s147
      %p149 = pneg %p35
      %p150 = pneg %p32
      %p151 = pneg %p56
      %p152 = pneg %p53
      %p153 = pneg %p77
      %p154 = pneg %p74
      %p155 = pneg %p103
      %p156 = pneg %p100
      %s157 = smul.u32 32, %s14
      %p158 = scmp.lt.s32.totalorder %s157, 63
      %s159 = scalar_select %p158, %s157, 63
      %s160 = smul.addr %s159, 4
      %s161 = scalar_lea.vmem %s3, %s160
      %s162 = smul.u32 32, %s14
      %p163 = scmp.lt.s32.totalorder %s162, 63
      %s164 = scalar_select %p163, %s162, 63
      %s165 = smul.addr %s164, 4
      %s166 = scalar_lea.vmem %s0, %s165
      %s167 = smul.u32 32, %s14
      %s168 = smul.u32 32, %s14
      %p169 = scmp.lt.s32.totalorder %s168, 63
      %s170 = scalar_select %p169, %s168, 63
      %s171 = smul.addr %s170, 4
      %s172 = scalar_lea.vmem %s3, %s171
      %s173 = smul.u32 32, %s14
      %v175 = vld [vmem:[%s166] sm:$0xf]
      %v176 = vld [vmem:[%s166 + $0x4] sm:$0xf]
      %v177 = vld [vmem:[%s166 + $0x8] sm:$0xf]
      %v178 = vld [vmem:[%s166 + $0xc] sm:$0xf]
      %v179 = vld [vmem:[%s166 + $0x10] sm:$0xf]
      %v180 = vld [vmem:[%s166 + $0x14] sm:$0xf]
      %v181 = vld [vmem:[%s166 + $0x18] sm:$0xf]
      %v182 = vld [vmem:[%s166 + $0x1c] sm:$0xf]
      %v183 = vld [vmem:[%s166 + $0x20] sm:$0xf]
      %v184 = vld [vmem:[%s166 + $0x24] sm:$0xf]
      %v185 = vld [vmem:[%s166 + $0x28] sm:$0xf]
      %v186 = vld [vmem:[%s166 + $0x2c] sm:$0xf]
      %v187 = vld [vmem:[%s166 + $0x30] sm:$0xf]
      %v188 = vld [vmem:[%s166 + $0x34] sm:$0xf]
      %v189 = vld [vmem:[%s166 + $0x38] sm:$0xf]
      %v190 = vld [vmem:[%s166 + $0x3c] sm:$0xf]
      %v191 = vld [vmem:[%s166 + $0x40] sm:$0xf]
      %v192 = vld [vmem:[%s166 + $0x44] sm:$0xf]
      %v193 = vld [vmem:[%s166 + $0x48] sm:$0xf]
      %v194 = vld [vmem:[%s166 + $0x4c] sm:$0xf]
      %v195 = vld [vmem:[%s166 + $0x50] sm:$0xf]
      %v196 = vld [vmem:[%s166 + $0x54] sm:$0xf]
      %v197 = vld [vmem:[%s166 + $0x58] sm:$0xf]
      %v198 = vld [vmem:[%s166 + $0x5c] sm:$0xf]
      %v199 = vld [vmem:[%s166 + $0x60] sm:$0xf]
      %v200 = vld [vmem:[%s166 + $0x64] sm:$0xf]
      %v201 = vld [vmem:[%s166 + $0x68] sm:$0xf]
      %v202 = vld [vmem:[%s166 + $0x6c] sm:$0xf]
      %v203 = vld [vmem:[%s166 + $0x70] sm:$0xf]
      %v204 = vld [vmem:[%s166 + $0x74] sm:$0xf]
      %v205 = vld [vmem:[%s166 + $0x78] sm:$0xf]
      %v206 = vld [vmem:[%s166 + $0x7c] sm:$0xf]
      %v207 = vld [vmem:[%s1] sm:$0xf]
      %v208 = vld [vmem:[%s1 + $0x4] sm:$0xf]
      %v209 = vld [vmem:[%s1 + $0x8] sm:$0xf]
      %v210 = vld [vmem:[%s1 + $0xc] sm:$0xf]
      %v211 = vld [vmem:[%s1 + $0x10] sm:$0xf]
      %v212 = vld [vmem:[%s1 + $0x14] sm:$0xf]
      %v213 = vld [vmem:[%s1 + $0x18] sm:$0xf]
      %v214 = vld [vmem:[%s1 + $0x1c] sm:$0xf]
      %v215 = vld [vmem:[%s1 + $0x20] sm:$0xf]
      %v216 = vld [vmem:[%s1 + $0x24] sm:$0xf]
      %v217 = vld [vmem:[%s1 + $0x28] sm:$0xf]
      %v218 = vld [vmem:[%s1 + $0x2c] sm:$0xf]
      %v219 = vld [vmem:[%s1 + $0x30] sm:$0xf]
      %v220 = vld [vmem:[%s1 + $0x34] sm:$0xf]
      %v221 = vld [vmem:[%s1 + $0x38] sm:$0xf]
      %v222 = vld [vmem:[%s1 + $0x3c] sm:$0xf]
      %v223 = vld [vmem:[%s2] sm:$0x1]
      %v225 = vlaneseq
      %v226 = vshrl.u32 %v225, 7
      %v227 = vsub.s32 0, %v226
      %v228 = vrot.slane %v223, %v227
      %v262 = vunpack.c.l.b16 %v175
      %v263 = vunpack.c.l.b16 %v176
      %v264 = vunpack.c.l.b16 %v177
      %v265 = vunpack.c.l.b16 %v178
      %v266 = vunpack.c.l.b16 %v179
      %v267 = vunpack.c.l.b16 %v180
      %v268 = vunpack.c.l.b16 %v181
      %v269 = vunpack.c.l.b16 %v182
      %v270 = vunpack.c.l.b16 %v183
      %v271 = vunpack.c.l.b16 %v184
      %v272 = vunpack.c.l.b16 %v185
      %v273 = vunpack.c.l.b16 %v186
      %v274 = vunpack.c.l.b16 %v187
      %v275 = vunpack.c.l.b16 %v188
      %v276 = vunpack.c.l.b16 %v189
      %v277 = vunpack.c.l.b16 %v190
      %v278 = vunpack.c.l.b16 %v191
      %v279 = vunpack.c.l.b16 %v192
      %v280 = vunpack.c.l.b16 %v193
      %v281 = vunpack.c.l.b16 %v194
      %v282 = vunpack.c.l.b16 %v195
      %v283 = vunpack.c.l.b16 %v196
      %v284 = vunpack.c.l.b16 %v197
      %v285 = vunpack.c.l.b16 %v198
      %v286 = vunpack.c.l.b16 %v199
      %v287 = vunpack.c.l.b16 %v200
      %v288 = vunpack.c.l.b16 %v201
      %v289 = vunpack.c.l.b16 %v202
      %v290 = vunpack.c.l.b16 %v203
      %v291 = vunpack.c.l.b16 %v204
      %v292 = vunpack.c.l.b16 %v205
      %v293 = vunpack.c.l.b16 %v206
      %v294 = vpack.c.b16 %v263, %v262
      %v295 = vpack.c.b16 %v265, %v264
      %v296 = vpack.c.b16 %v267, %v266
      %v297 = vpack.c.b16 %v269, %v268
      %v298 = vpack.c.b16 %v271, %v270
      %v299 = vpack.c.b16 %v273, %v272
      %v300 = vpack.c.b16 %v275, %v274
      %v301 = vpack.c.b16 %v277, %v276
      %v302 = vpack.c.b16 %v279, %v278
      %v303 = vpack.c.b16 %v281, %v280
      %v304 = vpack.c.b16 %v283, %v282
      %v305 = vpack.c.b16 %v285, %v284
      %v306 = vpack.c.b16 %v287, %v286
      %v307 = vpack.c.b16 %v289, %v288
      %v308 = vpack.c.b16 %v291, %v290
      %v309 = vpack.c.b16 %v293, %v292
      %v342 = vunpack.c.l.b16 %v207
      %v343 = vunpack.c.l.b16 %v208
      %v344 = vunpack.c.l.b16 %v209
      %v345 = vunpack.c.l.b16 %v210
      %v346 = vunpack.c.l.b16 %v211
      %v347 = vunpack.c.l.b16 %v212
      %v348 = vunpack.c.l.b16 %v213
      %v349 = vunpack.c.l.b16 %v214
      %v350 = vunpack.c.l.b16 %v215
      %v351 = vunpack.c.l.b16 %v216
      %v352 = vunpack.c.l.b16 %v217
      %v353 = vunpack.c.l.b16 %v218
      %v354 = vunpack.c.l.b16 %v219
      %v355 = vunpack.c.l.b16 %v220
      %v356 = vunpack.c.l.b16 %v221
      %v357 = vunpack.c.l.b16 %v222
      %v358 = vpack.c.b16 %v343, %v342
      %v359 = vpack.c.b16 %v345, %v344
      %v360 = vpack.c.b16 %v347, %v346
      %v361 = vpack.c.b16 %v349, %v348
      %v362 = vpack.c.b16 %v351, %v350
      %v363 = vpack.c.b16 %v353, %v352
      %v364 = vpack.c.b16 %v355, %v354
      %v365 = vpack.c.b16 %v357, %v356
      %374 = vmatprep.subr.bf16.mxu0 0
      %375 = vmatpush1.bf16.msra.mxu0 %v358
      %376 = vmatprep.subr.bf16.mxu0 0
      %377 = vmatpush1.bf16.msra.mxu0 %v359
      %378 = vmatprep.subr.bf16.mxu0 0
      %379 = vmatpush1.bf16.msra.mxu0 %v360
      %380 = vmatprep.subr.bf16.mxu0 0
      %381 = vmatpush1.bf16.msra.mxu0 %v361
      %382 = vmatprep.subr.bf16.mxu0 0
      %383 = vmatpush1.bf16.msra.mxu0 %v362
      %384 = vmatprep.subr.bf16.mxu0 0
      %385 = vmatpush1.bf16.msra.mxu0 %v363
      %386 = vmatprep.subr.bf16.mxu0 0
      %387 = vmatpush1.bf16.msra.mxu0 %v364
      %388 = vmatprep.subr.bf16.mxu0 0
      %389 = vmatpush1.bf16.msra.mxu0 %v365
      %390 = vmatprep.subr.bf16.mxu0 0
      %391 = vmatpush1.bf16.msra.mxu0 0
      %392 = vmatprep.subr.bf16.mxu0 0
      %393 = vmatpush1.bf16.msra.mxu0 0
      %394 = vmatprep.subr.bf16.mxu0 0
      %395 = vmatpush1.bf16.msra.mxu0 0
      %396 = vmatprep.subr.bf16.mxu0 0
      %397 = vmatpush1.bf16.msra.mxu0 0
      %398 = vmatprep.subr.bf16.mxu0 0
      %399 = vmatpush1.bf16.msra.mxu0 0
      %400 = vmatprep.subr.bf16.mxu0 0
      %401 = vmatpush1.bf16.msra.mxu0 0
      %402 = vmatprep.subr.bf16.mxu0 0
      %403 = vmatpush1.bf16.msra.mxu0 0
      %404 = vmatprep.subr.bf16.mxu0 0
      %405 = vmatpush1.bf16.msra.mxu0 0
      %406 = vmatprep.mubr.bf16.mxu0 0
      %407 = vmatmul.mubr.bf16.gmra.mrb[0].mxu0 %v294
      %v408 = vpop.f32.mrb[0].mxu0
      %v409 = vadd.f32 %v228, %v408
      %v410 = vpop.f32.mrb[0].mxu0
      %v411 = vpop.f32.mrb[0].mxu0
      %v412 = vadd.f32 %v228, %v411
      %v413 = vpop.f32.mrb[0].mxu0
      %414 = vmatprep.mubr.bf16.mxu0 0
      %415 = vmatmul.mubr.bf16.gmra.mrb[0].mxu0 %v295
      %v416 = vpop.f32.mrb[0].mxu0
      %v417 = vadd.f32 %v228, %v416
      %v418 = vpop.f32.mrb[0].mxu0
      %v419 = vpop.f32.mrb[0].mxu0
      %v420 = vadd.f32 %v228, %v419
      %v421 = vpop.f32.mrb[0].mxu0
      %422 = vmatprep.mubr.bf16.mxu0 0
      %423 = vmatmul.mubr.bf16.gmra.mrb[0].mxu0 %v296
      %v424 = vpop.f32.mrb[0].mxu0
      %v425 = vadd.f32 %v228, %v424
      %v426 = vpop.f32.mrb[0].mxu0
      %v427 = vpop.f32.mrb[0].mxu0
      %v428 = vadd.f32 %v228, %v427
      %v429 = vpop.f32.mrb[0].mxu0
      %430 = vmatprep.mubr.bf16.mxu0 0
      %431 = vmatmul.mubr.bf16.gmra.mrb[0].mxu0 %v297
      %v432 = vpop.f32.mrb[0].mxu0
      %v433 = vadd.f32 %v228, %v432
      %v434 = vpop.f32.mrb[0].mxu0
      %v435 = vpop.f32.mrb[0].mxu0
      %v436 = vadd.f32 %v228, %v435
      %v437 = vpop.f32.mrb[0].mxu0
      %438 = vmatprep.mubr.bf16.mxu0 0
      %439 = vmatmul.mubr.bf16.gmra.mrb[0].mxu0 %v298
      %v440 = vpop.f32.mrb[0].mxu0
      %v441 = vadd.f32 %v228, %v440
      %v442 = vpop.f32.mrb[0].mxu0
      %v443 = vpop.f32.mrb[0].mxu0
      %v444 = vadd.f32 %v228, %v443
      %v445 = vpop.f32.mrb[0].mxu0
      %446 = vmatprep.mubr.bf16.mxu0 0
      %447 = vmatmul.mubr.bf16.gmra.mrb[0].mxu0 %v299
      %v448 = vpop.f32.mrb[0].mxu0
      %v449 = vadd.f32 %v228, %v448
      %v450 = vpop.f32.mrb[0].mxu0
      %v451 = vpop.f32.mrb[0].mxu0
      %v452 = vadd.f32 %v228, %v451
      %v453 = vpop.f32.mrb[0].mxu0
      %454 = vmatprep.mubr.bf16.mxu0 0
      %455 = vmatmul.mubr.bf16.gmra.mrb[0].mxu0 %v300
      %v456 = vpop.f32.mrb[0].mxu0
      %v457 = vadd.f32 %v228, %v456
      %v458 = vpop.f32.mrb[0].mxu0
      %v459 = vpop.f32.mrb[0].mxu0
      %v460 = vadd.f32 %v228, %v459
      %v461 = vpop.f32.mrb[0].mxu0
      %462 = vmatprep.mubr.bf16.mxu0 0
      %463 = vmatmul.mubr.bf16.gmra.mrb[0].mxu0 %v301
      %v464 = vpop.f32.mrb[0].mxu0
      %v465 = vadd.f32 %v228, %v464
      %v466 = vpop.f32.mrb[0].mxu0
      %v467 = vpop.f32.mrb[0].mxu0
      %v468 = vadd.f32 %v228, %v467
      %v469 = vpop.f32.mrb[0].mxu0
      %470 = vmatprep.mubr.bf16.mxu0 0
      %471 = vmatmul.mubr.bf16.gmra.mrb[0].mxu0 %v302
      %v472 = vpop.f32.mrb[0].mxu0
      %v473 = vadd.f32 %v228, %v472
      %v474 = vpop.f32.mrb[0].mxu0
      %v475 = vpop.f32.mrb[0].mxu0
      %v476 = vadd.f32 %v228, %v475
      %v477 = vpop.f32.mrb[0].mxu0
      %478 = vmatprep.mubr.bf16.mxu0 0
      %479 = vmatmul.mubr.bf16.gmra.mrb[0].mxu0 %v303
      %v480 = vpop.f32.mrb[0].mxu0
      %v481 = vadd.f32 %v228, %v480
      %v482 = vpop.f32.mrb[0].mxu0
      %v483 = vpop.f32.mrb[0].mxu0
      %v484 = vadd.f32 %v228, %v483
      %v485 = vpop.f32.mrb[0].mxu0
      %486 = vmatprep.mubr.bf16.mxu0 0
      %487 = vmatmul.mubr.bf16.gmra.mrb[0].mxu0 %v304
      %v488 = vpop.f32.mrb[0].mxu0
      %v489 = vadd.f32 %v228, %v488
      %v490 = vpop.f32.mrb[0].mxu0
      %v491 = vpop.f32.mrb[0].mxu0
      %v492 = vadd.f32 %v228, %v491
      %v493 = vpop.f32.mrb[0].mxu0
      %494 = vmatprep.mubr.bf16.mxu0 0
      %495 = vmatmul.mubr.bf16.gmra.mrb[0].mxu0 %v305
      %v496 = vpop.f32.mrb[0].mxu0
      %v497 = vadd.f32 %v228, %v496
      %v498 = vpop.f32.mrb[0].mxu0
      %v499 = vpop.f32.mrb[0].mxu0
      %v500 = vadd.f32 %v228, %v499
      %v501 = vpop.f32.mrb[0].mxu0
      %502 = vmatprep.mubr.bf16.mxu0 0
      %503 = vmatmul.mubr.bf16.gmra.mrb[0].mxu0 %v306
      %v504 = vpop.f32.mrb[0].mxu0
      %v505 = vadd.f32 %v228, %v504
      %v506 = vpop.f32.mrb[0].mxu0
      %v507 = vpop.f32.mrb[0].mxu0
      %v508 = vadd.f32 %v228, %v507
      %v509 = vpop.f32.mrb[0].mxu0
      %510 = vmatprep.mubr.bf16.mxu0 0
      %511 = vmatmul.mubr.bf16.gmra.mrb[0].mxu0 %v307
      %v512 = vpop.f32.mrb[0].mxu0
      %v513 = vadd.f32 %v228, %v512
      %v514 = vpop.f32.mrb[0].mxu0
      %v515 = vpop.f32.mrb[0].mxu0
      %v516 = vadd.f32 %v228, %v515
      %v517 = vpop.f32.mrb[0].mxu0
      %518 = vmatprep.mubr.bf16.mxu0 0
      %519 = vmatmul.mubr.bf16.gmra.mrb[0].mxu0 %v308
      %v520 = vpop.f32.mrb[0].mxu0
      %v521 = vadd.f32 %v228, %v520
      %v522 = vpop.f32.mrb[0].mxu0
      %v523 = vpop.f32.mrb[0].mxu0
      %v524 = vadd.f32 %v228, %v523
      %v525 = vpop.f32.mrb[0].mxu0
      %526 = vmatprep.mubr.bf16.mxu0 0
      %527 = vmatmul.mubr.bf16.gmra.mrb[0].mxu0 %v309
      %v528 = vpop.f32.mrb[0].mxu0
      %v529 = vadd.f32 %v228, %v528
      %v530 = vpop.f32.mrb[0].mxu0
      %v531 = vpop.f32.mrb[0].mxu0
      %v532 = vadd.f32 %v228, %v531
      %v533 = vpop.f32.mrb[0].mxu0
      %534 = vdwg.mxu0
      %v535 = vmul.f32 %v409, 0.2
      %v536 = vmul.f32 %v412, 0.2
      %v537 = vmul.f32 %v417, 0.2
      %v538 = vmul.f32 %v420, 0.2
      %v539 = vmul.f32 %v425, 0.2
      %v540 = vmul.f32 %v428, 0.2
      %v541 = vmul.f32 %v433, 0.2
      %v542 = vmul.f32 %v436, 0.2
      %v543 = vmul.f32 %v441, 0.2
      %v544 = vmul.f32 %v444, 0.2
      %v545 = vmul.f32 %v449, 0.2
      %v546 = vmul.f32 %v452, 0.2
      %v547 = vmul.f32 %v457, 0.2
      %v548 = vmul.f32 %v460, 0.2
      %v549 = vmul.f32 %v465, 0.2
      %v550 = vmul.f32 %v468, 0.2
      %v551 = vmul.f32 %v473, 0.2
      %v552 = vmul.f32 %v476, 0.2
      %v553 = vmul.f32 %v481, 0.2
      %v554 = vmul.f32 %v484, 0.2
      %v555 = vmul.f32 %v489, 0.2
      %v556 = vmul.f32 %v492, 0.2
      %v557 = vmul.f32 %v497, 0.2
      %v558 = vmul.f32 %v500, 0.2
      %v559 = vmul.f32 %v505, 0.2
      %v560 = vmul.f32 %v508, 0.2
      %v561 = vmul.f32 %v513, 0.2
      %v562 = vmul.f32 %v516, 0.2
      %v563 = vmul.f32 %v521, 0.2
      %v564 = vmul.f32 %v524, 0.2
      %v565 = vmul.f32 %v529, 0.2
      %v566 = vmul.f32 %v532, 0.2
      %v567 = vmax.f32 %v409, %v535
      %v568 = vmax.f32 %v412, %v536
      %v569 = vmax.f32 %v417, %v537
      %v570 = vmax.f32 %v420, %v538
      %v571 = vmax.f32 %v425, %v539
      %v572 = vmax.f32 %v428, %v540
      %v573 = vmax.f32 %v433, %v541
      %v574 = vmax.f32 %v436, %v542
      %v575 = vmax.f32 %v441, %v543
      %v576 = vmax.f32 %v444, %v544
      %v577 = vmax.f32 %v449, %v545
      %v578 = vmax.f32 %v452, %v546
      %v579 = vmax.f32 %v457, %v547
      %v580 = vmax.f32 %v460, %v548
      %v581 = vmax.f32 %v465, %v549
      %v582 = vmax.f32 %v468, %v550
      %v583 = vmax.f32 %v473, %v551
      %v584 = vmax.f32 %v476, %v552
      %v585 = vmax.f32 %v481, %v553
      %v586 = vmax.f32 %v484, %v554
      %v587 = vmax.f32 %v489, %v555
      %v588 = vmax.f32 %v492, %v556
      %v589 = vmax.f32 %v497, %v557
      %v590 = vmax.f32 %v500, %v558
      %v591 = vmax.f32 %v505, %v559
      %v592 = vmax.f32 %v508, %v560
      %v593 = vmax.f32 %v513, %v561
      %v594 = vmax.f32 %v516, %v562
      %v595 = vmax.f32 %v521, %v563
      %v596 = vmax.f32 %v524, %v564
      %v597 = vmax.f32 %v529, %v565
      %v598 = vmax.f32 %v532, %v566
      %v599 = vpack.c.bf16 %v568, %v567
      %v600 = vpack.c.bf16 %v570, %v569
      %v601 = vpack.c.bf16 %v572, %v571
      %v602 = vpack.c.bf16 %v574, %v573
      %v603 = vpack.c.bf16 %v576, %v575
      %v604 = vpack.c.bf16 %v578, %v577
      %v605 = vpack.c.bf16 %v580, %v579
      %v606 = vpack.c.bf16 %v582, %v581
      %v607 = vpack.c.bf16 %v584, %v583
      %v608 = vpack.c.bf16 %v586, %v585
      %v609 = vpack.c.bf16 %v588, %v587
      %v610 = vpack.c.bf16 %v590, %v589
      %v611 = vpack.c.bf16 %v592, %v591
      %v612 = vpack.c.bf16 %v594, %v593
      %v613 = vpack.c.bf16 %v596, %v595
      %v614 = vpack.c.bf16 %v598, %v597
      %v631 = vunpack.c.l.b16 %v599
      %v632 = vunpack.c.h.b16 %v599
      %v633 = vunpack.c.l.b16 %v600
      %v634 = vunpack.c.h.b16 %v600
      %v635 = vunpack.c.l.b16 %v601
      %v636 = vunpack.c.h.b16 %v601
      %v637 = vunpack.c.l.b16 %v602
      %v638 = vunpack.c.h.b16 %v602
      %v639 = vunpack.c.l.b16 %v603
      %v640 = vunpack.c.h.b16 %v603
      %v641 = vunpack.c.l.b16 %v604
      %v642 = vunpack.c.h.b16 %v604
      %v643 = vunpack.c.l.b16 %v605
      %v644 = vunpack.c.h.b16 %v605
      %v645 = vunpack.c.l.b16 %v606
      %v646 = vunpack.c.h.b16 %v606
      %v647 = vunpack.c.l.b16 %v607
      %v648 = vunpack.c.h.b16 %v607
      %v649 = vunpack.c.l.b16 %v608
      %v650 = vunpack.c.h.b16 %v608
      %v651 = vunpack.c.l.b16 %v609
      %v652 = vunpack.c.h.b16 %v609
      %v653 = vunpack.c.l.b16 %v610
      %v654 = vunpack.c.h.b16 %v610
      %v655 = vunpack.c.l.b16 %v611
      %v656 = vunpack.c.h.b16 %v611
      %v657 = vunpack.c.l.b16 %v612
      %v658 = vunpack.c.h.b16 %v612
      %v659 = vunpack.c.l.b16 %v613
      %v660 = vunpack.c.h.b16 %v613
      %v661 = vunpack.c.l.b16 %v614
      %v662 = vunpack.c.h.b16 %v614
      %v663 = vpack.c.b16 %v631, %v631
      %v664 = vpack.c.b16 %v632, %v632
      %v665 = vpack.c.b16 %v633, %v633
      %v666 = vpack.c.b16 %v634, %v634
      %v667 = vpack.c.b16 %v635, %v635
      %v668 = vpack.c.b16 %v636, %v636
      %v669 = vpack.c.b16 %v637, %v637
      %v670 = vpack.c.b16 %v638, %v638
      %v671 = vpack.c.b16 %v639, %v639
      %v672 = vpack.c.b16 %v640, %v640
      %v673 = vpack.c.b16 %v641, %v641
      %v674 = vpack.c.b16 %v642, %v642
      %v675 = vpack.c.b16 %v643, %v643
      %v676 = vpack.c.b16 %v644, %v644
      %v677 = vpack.c.b16 %v645, %v645
      %v678 = vpack.c.b16 %v646, %v646
      %v679 = vpack.c.b16 %v647, %v647
      %v680 = vpack.c.b16 %v648, %v648
      %v681 = vpack.c.b16 %v649, %v649
      %v682 = vpack.c.b16 %v650, %v650
      %v683 = vpack.c.b16 %v651, %v651
      %v684 = vpack.c.b16 %v652, %v652
      %v685 = vpack.c.b16 %v653, %v653
      %v686 = vpack.c.b16 %v654, %v654
      %v687 = vpack.c.b16 %v655, %v655
      %v688 = vpack.c.b16 %v656, %v656
      %v689 = vpack.c.b16 %v657, %v657
      %v690 = vpack.c.b16 %v658, %v658
      %v691 = vpack.c.b16 %v659, %v659
      %v692 = vpack.c.b16 %v660, %v660
      %v693 = vpack.c.b16 %v661, %v661
      %v694 = vpack.c.b16 %v662, %v662
      %vm727 = vcmask 125952
      %728 = vst.msk [vmem:[%s172] sm:$0xf] %vm727, %v663
      %729 = vst.msk [vmem:[%s172 + $0x4] sm:$0xf] %vm727, %v664
      %730 = vst.msk [vmem:[%s172 + $0x8] sm:$0xf] %vm727, %v665
      %731 = vst.msk [vmem:[%s172 + $0xc] sm:$0xf] %vm727, %v666
      %732 = vst.msk [vmem:[%s172 + $0x10] sm:$0xf] %vm727, %v667
      %733 = vst.msk [vmem:[%s172 + $0x14] sm:$0xf] %vm727, %v668
      %734 = vst.msk [vmem:[%s172 + $0x18] sm:$0xf] %vm727, %v669
      %735 = vst.msk [vmem:[%s172 + $0x1c] sm:$0xf] %vm727, %v670
      %736 = vst.msk [vmem:[%s172 + $0x20] sm:$0xf] %vm727, %v671
      %737 = vst.msk [vmem:[%s172 + $0x24] sm:$0xf] %vm727, %v672
      %738 = vst.msk [vmem:[%s172 + $0x28] sm:$0xf] %vm727, %v673
      %739 = vst.msk [vmem:[%s172 + $0x2c] sm:$0xf] %vm727, %v674
      %740 = vst.msk [vmem:[%s172 + $0x30] sm:$0xf] %vm727, %v675
      %741 = vst.msk [vmem:[%s172 + $0x34] sm:$0xf] %vm727, %v676
      %742 = vst.msk [vmem:[%s172 + $0x38] sm:$0xf] %vm727, %v677
      %743 = vst.msk [vmem:[%s172 + $0x3c] sm:$0xf] %vm727, %v678
      %744 = vst.msk [vmem:[%s172 + $0x40] sm:$0xf] %vm727, %v679
      %745 = vst.msk [vmem:[%s172 + $0x44] sm:$0xf] %vm727, %v680
      %746 = vst.msk [vmem:[%s172 + $0x48] sm:$0xf] %vm727, %v681
      %747 = vst.msk [vmem:[%s172 + $0x4c] sm:$0xf] %vm727, %v682
      %748 = vst.msk [vmem:[%s172 + $0x50] sm:$0xf] %vm727, %v683
      %749 = vst.msk [vmem:[%s172 + $0x54] sm:$0xf] %vm727, %v684
      %750 = vst.msk [vmem:[%s172 + $0x58] sm:$0xf] %vm727, %v685
      %751 = vst.msk [vmem:[%s172 + $0x5c] sm:$0xf] %vm727, %v686
      %752 = vst.msk [vmem:[%s172 + $0x60] sm:$0xf] %vm727, %v687
      %753 = vst.msk [vmem:[%s172 + $0x64] sm:$0xf] %vm727, %v688
      %754 = vst.msk [vmem:[%s172 + $0x68] sm:$0xf] %vm727, %v689
      %755 = vst.msk [vmem:[%s172 + $0x6c] sm:$0xf] %vm727, %v690
      %756 = vst.msk [vmem:[%s172 + $0x70] sm:$0xf] %vm727, %v691
      %757 = vst.msk [vmem:[%s172 + $0x74] sm:$0xf] %vm727, %v692
      %758 = vst.msk [vmem:[%s172 + $0x78] sm:$0xf] %vm727, %v693
      %759 = vst.msk [vmem:[%s172 + $0x7c] sm:$0xf] %vm727, %v694
      %s760 = smul.u32 32, %s14
      %p761 = scmp.lt.s32.totalorder %s760, 63
      %s762 = scalar_select %p761, %s760, 63
      %s763 = smul.addr %s762, 4
      %s764 = scalar_lea.vmem %s3, %s763
      // Predicated region
      $region33: #{forward.5} parent=31 // pred_check
        %p765 = pneg %p100
      $region34: #{forward.5} parent=31 // pred_check_branch
        %767 = sbr.rel (%p765) target = $region36
      $region35: #{forward.5} parent=31 // pred_region
        %s768 = smul.u32 32, %s14
      $region36: #{forward.5} parent=31 // pred_fallthru
        _
    $region32: #{forward.5} parent=5 // pred_fallthru
      _
    %p769 = scmp.le.s32.totalorder 2, %s9
    // Predicated region
    $region37: #{forward.5} parent=5 // pred_check
      %p770 = pneg %p769
    $region38: #{forward.5} parent=5 // pred_check_branch
      %772 = sbr.rel (%p770) target = $region40
    $region39: #{forward.5} parent=5 // pred_region
      %s773 = ssub.s32 %s9, 2
      // Predicated region
      $region41: #{forward.5} parent=39 // pred_check
        %p774 = pneg %p106
      $region42: #{forward.5} parent=39 // pred_check_branch
        %776 = sbr.rel (%p774) target = $region44
      $region43: #{forward.5} parent=39 // pred_region
        %s777 = smul.u32 32, %s15
        %p778 = scmp.lt.s32.totalorder %s777, 63
        %s779 = scalar_select %p778, %s777, 63
        %s780 = smul.addr %s779, 4
        %s781 = scalar_lea.vmem %s3, %s780
      $region44: #{forward.5} parent=39 // pred_fallthru
        _
    $region40: #{forward.5} parent=5 // pred_fallthru
      _
  $region6: #{forward.5} parent=0 // loop_footer
    %s13 = sadd.s32 1, %s9
  $region7: #{forward.5} parent=0 // loop_footer_branch
    %8 = sbr.rel target = $region3
  $region8: #{forward.5} parent=0 // loop_exit
    _

// kernel: forward.6
$region0: #{forward.6}
  #allocation0 [shape = 'u32[]', space=smem, size = 0x4, offset = 0x4, fixed_abs, tag = 'smem constant byte address 0x4 - core index']
  #allocation1 [shape = 'u32[144,128]{1,0:T(1,128)}', space=vmem, size = 0x12000, scoped, tag = 'internal scratch']
  %s0 = inlined_call_operand.vmem [shape: bf16[128,256], index: 0, kind: input, shape index: {}]
  %s1 = inlined_call_operand.vmem [shape: bf16[256,32], index: 1, kind: input, shape index: {}]
  %s2 = inlined_call_operand.vmem [shape: f32[1,32], index: 2, kind: input, shape index: {}]
  %s3 = inlined_call_operand.vmem [shape: f32[1,32], index: 3, kind: input, shape index: {}]
  %s4 = inlined_call_operand.vmem [shape: bf16[128,32], index: 4, kind: output, shape index: {}]
  %s5 = sld [smem:[#allocation0]]
  $region26: #{forward.6} parent=0
    _
  %s7 = ssub.s32 1, %s5
  %s8 = scalar_select 0, %s7, %s5
  // Predicated region
  $region2: #{forward.6} parent=0 // pred_check
    _
  $region3: #{forward.6} parent=0 // pred_check_branch
    %10 = sbr.rel (0) target = $region5
  $region4: #{forward.6} parent=0 // pred_region
    _
  $region5: #{forward.6} parent=0 // pred_fallthru
    _
  // Predicated region
  $region6: #{forward.6} parent=0 // pred_check
    _
  $region7: #{forward.6} parent=0 // pred_check_branch
    %12 = sbr.rel (0) target = $region9
  $region8: #{forward.6} parent=0 // pred_region
    _
  $region9: #{forward.6} parent=0 // pred_fallthru
    _
  // Predicated region
  $region10: #{forward.6} parent=0 // pred_check
    _
  $region11: #{forward.6} parent=0 // pred_check_branch
    %14 = sbr.rel (0) target = $region13
  $region12: #{forward.6} parent=0 // pred_region
    _
  $region13: #{forward.6} parent=0 // pred_fallthru
    _
  // Predicated region
  $region14: #{forward.6} parent=0 // pred_check
    _
  $region15: #{forward.6} parent=0 // pred_check_branch
    %16 = sbr.rel (0) target = $region17
  $region16: #{forward.6} parent=0 // pred_region
    _
  $region17: #{forward.6} parent=0 // pred_fallthru
    _
  %v18 = vld [vmem:[%s0] sm:$0xff]
  %v19 = vld [vmem:[%s0 + $0x8] sm:$0xff]
  %v20 = vld [vmem:[%s0 + $0x10] sm:$0xff]
  %v21 = vld [vmem:[%s0 + $0x18] sm:$0xff]
  %v22 = vld [vmem:[%s0 + $0x20] sm:$0xff]
  %v23 = vld [vmem:[%s0 + $0x28] sm:$0xff]
  %v24 = vld [vmem:[%s0 + $0x30] sm:$0xff]
  %v25 = vld [vmem:[%s0 + $0x38] sm:$0xff]
  %v26 = vld [vmem:[%s0 + $0x40] sm:$0xff]
  %v27 = vld [vmem:[%s0 + $0x48] sm:$0xff]
  %v28 = vld [vmem:[%s0 + $0x50] sm:$0xff]
  %v29 = vld [vmem:[%s0 + $0x58] sm:$0xff]
  %v30 = vld [vmem:[%s0 + $0x60] sm:$0xff]
  %v31 = vld [vmem:[%s0 + $0x68] sm:$0xff]
  %v32 = vld [vmem:[%s0 + $0x70] sm:$0xff]
  %v33 = vld [vmem:[%s0 + $0x78] sm:$0xff]
  %v34 = vld [vmem:[%s1] sm:$0xf]
  %v35 = vld [vmem:[%s1 + $0x4] sm:$0xf]
  %v36 = vld [vmem:[%s1 + $0x8] sm:$0xf]
  %v37 = vld [vmem:[%s1 + $0xc] sm:$0xf]
  %v38 = vld [vmem:[%s1 + $0x10] sm:$0xf]
  %v39 = vld [vmem:[%s1 + $0x14] sm:$0xf]
  %v40 = vld [vmem:[%s1 + $0x18] sm:$0xf]
  %v41 = vld [vmem:[%s1 + $0x1c] sm:$0xf]
  %v42 = vld [vmem:[%s1 + $0x20] sm:$0xf]
  %v43 = vld [vmem:[%s1 + $0x24] sm:$0xf]
  %v44 = vld [vmem:[%s1 + $0x28] sm:$0xf]
  %v45 = vld [vmem:[%s1 + $0x2c] sm:$0xf]
  %v46 = vld [vmem:[%s1 + $0x30] sm:$0xf]
  %v47 = vld [vmem:[%s1 + $0x34] sm:$0xf]
  %v48 = vld [vmem:[%s1 + $0x38] sm:$0xf]
  %v49 = vld [vmem:[%s1 + $0x3c] sm:$0xf]
  %v50 = vld [vmem:[%s1 + $0x40] sm:$0xf]
  %v51 = vld [vmem:[%s1 + $0x44] sm:$0xf]
  %v52 = vld [vmem:[%s1 + $0x48] sm:$0xf]
  %v53 = vld [vmem:[%s1 + $0x4c] sm:$0xf]
  %v54 = vld [vmem:[%s1 + $0x50] sm:$0xf]
  %v55 = vld [vmem:[%s1 + $0x54] sm:$0xf]
  %v56 = vld [vmem:[%s1 + $0x58] sm:$0xf]
  %v57 = vld [vmem:[%s1 + $0x5c] sm:$0xf]
  %v58 = vld [vmem:[%s1 + $0x60] sm:$0xf]
  %v59 = vld [vmem:[%s1 + $0x64] sm:$0xf]
  %v60 = vld [vmem:[%s1 + $0x68] sm:$0xf]
  %v61 = vld [vmem:[%s1 + $0x6c] sm:$0xf]
  %v62 = vld [vmem:[%s1 + $0x70] sm:$0xf]
  %v63 = vld [vmem:[%s1 + $0x74] sm:$0xf]
  %v64 = vld [vmem:[%s1 + $0x78] sm:$0xf]
  %v65 = vld [vmem:[%s1 + $0x7c] sm:$0xf]
  %v82 = vunpack.c.l.b16 %v18
  %v83 = vunpack.c.h.b16 %v18
  %v84 = vunpack.c.l.b16 %v19
  %v85 = vunpack.c.h.b16 %v19
  %v86 = vunpack.c.l.b16 %v20
  %v87 = vunpack.c.h.b16 %v20
  %v88 = vunpack.c.l.b16 %v21
  %v89 = vunpack.c.h.b16 %v21
  %v90 = vunpack.c.l.b16 %v22
  %v91 = vunpack.c.h.b16 %v22
  %v92 = vunpack.c.l.b16 %v23
  %v93 = vunpack.c.h.b16 %v23
  %v94 = vunpack.c.l.b16 %v24
  %v95 = vunpack.c.h.b16 %v24
  %v96 = vunpack.c.l.b16 %v25
  %v97 = vunpack.c.h.b16 %v25
  %v98 = vunpack.c.l.b16 %v26
  %v99 = vunpack.c.h.b16 %v26
  %v100 = vunpack.c.l.b16 %v27
  %v101 = vunpack.c.h.b16 %v27
  %v102 = vunpack.c.l.b16 %v28
  %v103 = vunpack.c.h.b16 %v28
  %v104 = vunpack.c.l.b16 %v29
  %v105 = vunpack.c.h.b16 %v29
  %v106 = vunpack.c.l.b16 %v30
  %v107 = vunpack.c.h.b16 %v30
  %v108 = vunpack.c.l.b16 %v31
  %v109 = vunpack.c.h.b16 %v31
  %v110 = vunpack.c.l.b16 %v32
  %v111 = vunpack.c.h.b16 %v32
  %v112 = vunpack.c.l.b16 %v33
  %v113 = vunpack.c.h.b16 %v33
  %v114 = vpack.c.b16 %v84, %v82
  %v115 = vpack.c.b16 %v85, %v83
  %v116 = vpack.c.b16 %v88, %v86
  %v117 = vpack.c.b16 %v89, %v87
  %v118 = vpack.c.b16 %v92, %v90
  %v119 = vpack.c.b16 %v93, %v91
  %v120 = vpack.c.b16 %v96, %v94
  %v121 = vpack.c.b16 %v97, %v95
  %v122 = vpack.c.b16 %v100, %v98
  %v123 = vpack.c.b16 %v101, %v99
  %v124 = vpack.c.b16 %v104, %v102
  %v125 = vpack.c.b16 %v105, %v103
  %v126 = vpack.c.b16 %v108, %v106
  %v127 = vpack.c.b16 %v109, %v107
  %v128 = vpack.c.b16 %v112, %v110
  %v129 = vpack.c.b16 %v113, %v111
  %v178 = vunpack.c.l.b16 %v34
  %v179 = vunpack.c.l.b16 %v35
  %v180 = vunpack.c.l.b16 %v36
  %v181 = vunpack.c.l.b16 %v37
  %v182 = vunpack.c.l.b16 %v38
  %v183 = vunpack.c.l.b16 %v39
  %v184 = vunpack.c.l.b16 %v40
  %v185 = vunpack.c.l.b16 %v41
  %v186 = vunpack.c.l.b16 %v42
  %v187 = vunpack.c.l.b16 %v43
  %v188 = vunpack.c.l.b16 %v44
  %v189 = vunpack.c.l.b16 %v45
  %v190 = vunpack.c.l.b16 %v46
  %v191 = vunpack.c.l.b16 %v47
  %v192 = vunpack.c.l.b16 %v48
  %v193 = vunpack.c.l.b16 %v49
  %v194 = vunpack.c.l.b16 %v50
  %v195 = vunpack.c.l.b16 %v51
  %v196 = vunpack.c.l.b16 %v52
  %v197 = vunpack.c.l.b16 %v53
  %v198 = vunpack.c.l.b16 %v54
  %v199 = vunpack.c.l.b16 %v55
  %v200 = vunpack.c.l.b16 %v56
  %v201 = vunpack.c.l.b16 %v57
  %v202 = vunpack.c.l.b16 %v58
  %v203 = vunpack.c.l.b16 %v59
  %v204 = vunpack.c.l.b16 %v60
  %v205 = vunpack.c.l.b16 %v61
  %v206 = vunpack.c.l.b16 %v62
  %v207 = vunpack.c.l.b16 %v63
  %v208 = vunpack.c.l.b16 %v64
  %v209 = vunpack.c.l.b16 %v65
  %v210 = vpack.c.b16 %v179, %v178
  %v211 = vpack.c.b16 %v181, %v180
  %v212 = vpack.c.b16 %v183, %v182
  %v213 = vpack.c.b16 %v185, %v184
  %v214 = vpack.c.b16 %v187, %v186
  %v215 = vpack.c.b16 %v189, %v188
  %v216 = vpack.c.b16 %v191, %v190
  %v217 = vpack.c.b16 %v193, %v192
  %v218 = vpack.c.b16 %v195, %v194
  %v219 = vpack.c.b16 %v197, %v196
  %v220 = vpack.c.b16 %v199, %v198
  %v221 = vpack.c.b16 %v201, %v200
  %v222 = vpack.c.b16 %v203, %v202
  %v223 = vpack.c.b16 %v205, %v204
  %v224 = vpack.c.b16 %v207, %v206
  %v225 = vpack.c.b16 %v209, %v208
  %242 = vmatprep.subr.bf16.mxu0 0
  %243 = vmatpush1.bf16.msra.mxu0 %v210
  %244 = vmatprep.subr.bf16.mxu0 0
  %245 = vmatpush1.bf16.msra.mxu0 %v211
  %246 = vmatprep.subr.bf16.mxu0 0
  %247 = vmatpush1.bf16.msra.mxu0 %v212
  %248 = vmatprep.subr.bf16.mxu0 0
  %249 = vmatpush1.bf16.msra.mxu0 %v213
  %250 = vmatprep.subr.bf16.mxu0 0
  %251 = vmatpush1.bf16.msra.mxu0 %v214
  %252 = vmatprep.subr.bf16.mxu0 0
  %253 = vmatpush1.bf16.msra.mxu0 %v215
  %254 = vmatprep.subr.bf16.mxu0 0
  %255 = vmatpush1.bf16.msra.mxu0 %v216
  %256 = vmatprep.subr.bf16.mxu0 0
  %257 = vmatpush1.bf16.msra.mxu0 %v217
  %258 = vmatprep.subr.bf16.mxu0 0
  %259 = vmatpush1.bf16.msra.mxu0 %v218
  %260 = vmatprep.subr.bf16.mxu0 0
  %261 = vmatpush1.bf16.msra.mxu0 %v219
  %262 = vmatprep.subr.bf16.mxu0 0
  %263 = vmatpush1.bf16.msra.mxu0 %v220
  %264 = vmatprep.subr.bf16.mxu0 0
  %265 = vmatpush1.bf16.msra.mxu0 %v221
  %266 = vmatprep.subr.bf16.mxu0 0
  %267 = vmatpush1.bf16.msra.mxu0 %v222
  %268 = vmatprep.subr.bf16.mxu0 0
  %269 = vmatpush1.bf16.msra.mxu0 %v223
  %270 = vmatprep.subr.bf16.mxu0 0
  %271 = vmatpush1.bf16.msra.mxu0 %v224
  %272 = vmatprep.subr.bf16.mxu0 0
  %273 = vmatpush1.bf16.msra.mxu0 %v225
  %274 = vmatprep.mubr.bf16.mxu0 %v115
  %275 = vmatmul.mubr.bf16.gmra.mrb[0].mxu0 %v114
  %v276 = vpop.f32.mrb[0].mxu0
  %v277 = vadd.f32 0.0, %v276
  %v278 = vpop.f32.mrb[0].mxu0
  %v279 = vpop.f32.mrb[0].mxu0
  %v280 = vadd.f32 0.0, %v279
  %v281 = vpop.f32.mrb[0].mxu0
  %282 = vmatprep.mubr.bf16.mxu0 %v117
  %283 = vmatmul.mubr.bf16.gmra.mrb[0].mxu0 %v116
  %v284 = vpop.f32.mrb[0].mxu0
  %v285 = vadd.f32 0.0, %v284
  %v286 = vpop.f32.mrb[0].mxu0
  %v287 = vpop.f32.mrb[0].mxu0
  %v288 = vadd.f32 0.0, %v287
  %v289 = vpop.f32.mrb[0].mxu0
  %290 = vmatprep.mubr.bf16.mxu0 %v119
  %291 = vmatmul.mubr.bf16.gmra.mrb[0].mxu0 %v118
  %v292 = vpop.f32.mrb[0].mxu0
  %v293 = vadd.f32 0.0, %v292
  %v294 = vpop.f32.mrb[0].mxu0
  %v295 = vpop.f32.mrb[0].mxu0
  %v296 = vadd.f32 0.0, %v295
  %v297 = vpop.f32.mrb[0].mxu0
  %298 = vmatprep.mubr.bf16.mxu0 %v121
  %299 = vmatmul.mubr.bf16.gmra.mrb[0].mxu0 %v120
  %v300 = vpop.f32.mrb[0].mxu0
  %v301 = vadd.f32 0.0, %v300
  %v302 = vpop.f32.mrb[0].mxu0
  %v303 = vpop.f32.mrb[0].mxu0
  %v304 = vadd.f32 0.0, %v303
  %v305 = vpop.f32.mrb[0].mxu0
  %306 = vmatprep.mubr.bf16.mxu0 %v123
  %307 = vmatmul.mubr.bf16.gmra.mrb[0].mxu0 %v122
  %v308 = vpop.f32.mrb[0].mxu0
  %v309 = vadd.f32 0.0, %v308
  %v310 = vpop.f32.mrb[0].mxu0
  %v311 = vpop.f32.mrb[0].mxu0
  %v312 = vadd.f32 0.0, %v311
  %v313 = vpop.f32.mrb[0].mxu0
  %314 = vmatprep.mubr.bf16.mxu0 %v125
  %315 = vmatmul.mubr.bf16.gmra.mrb[0].mxu0 %v124
  %v316 = vpop.f32.mrb[0].mxu0
  %v317 = vadd.f32 0.0, %v316
  %v318 = vpop.f32.mrb[0].mxu0
  %v319 = vpop.f32.mrb[0].mxu0
  %v320 = vadd.f32 0.0, %v319
  %v321 = vpop.f32.mrb[0].mxu0
  %322 = vmatprep.mubr.bf16.mxu0 %v127
  %323 = vmatmul.mubr.bf16.gmra.mrb[0].mxu0 %v126
  %v324 = vpop.f32.mrb[0].mxu0
  %v325 = vadd.f32 0.0, %v324
  %v326 = vpop.f32.mrb[0].mxu0
  %v327 = vpop.f32.mrb[0].mxu0
  %v328 = vadd.f32 0.0, %v327
  %v329 = vpop.f32.mrb[0].mxu0
  %330 = vmatprep.mubr.bf16.mxu0 %v129
  %331 = vmatmul.mubr.bf16.gmra.mrb[0].mxu0 %v128
  %v332 = vpop.f32.mrb[0].mxu0
  %v333 = vadd.f32 0.0, %v332
  %v334 = vpop.f32.mrb[0].mxu0
  %v335 = vpop.f32.mrb[0].mxu0
  %v336 = vadd.f32 0.0, %v335
  %v337 = vpop.f32.mrb[0].mxu0
  %338 = vdwg.mxu0
  %vm339 = vcmask 261120
  %v340 = vsel %vm339, %v277, 0.0
  %v341 = vsel %vm339, %v280, 0.0
  %v342 = vadd.f32 %v340, %v341
  %v343 = vsel %vm339, %v285, 0.0
  %v344 = vadd.f32 %v342, %v343
  %v345 = vsel %vm339, %v288, 0.0
  %v346 = vadd.f32 %v344, %v345
  %v347 = vsel %vm339, %v293, 0.0
  %v348 = vadd.f32 %v346, %v347
  %v349 = vsel %vm339, %v296, 0.0
  %v350 = vadd.f32 %v348, %v349
  %v351 = vsel %vm339, %v301, 0.0
  %v352 = vadd.f32 %v350, %v351
  %v353 = vsel %vm339, %v304, 0.0
  %v354 = vadd.f32 %v352, %v353
  %v355 = vsel %vm339, %v309, 0.0
  %v356 = vadd.f32 %v354, %v355
  %v357 = vsel %vm339, %v312, 0.0
  %v358 = vadd.f32 %v356, %v357
  %v359 = vsel %vm339, %v317, 0.0
  %v360 = vadd.f32 %v358, %v359
  %v361 = vsel %vm339, %v320, 0.0
  %v362 = vadd.f32 %v360, %v361
  %v363 = vsel %vm339, %v325, 0.0
  %v364 = vadd.f32 %v362, %v363
  %v365 = vsel %vm339, %v328, 0.0
  %v366 = vadd.f32 %v364, %v365
  %v367 = vsel %vm339, %v333, 0.0
  %v368 = vadd.f32 %v366, %v367
  %v369 = vsel %vm339, %v336, 0.0
  %v370 = vadd.f32 %v368, %v369
  %v371 = vrot.slane %v370, 4
  %v372 = vadd.f32 %v370, %v371
  %v373 = vrot.slane %v372, 2
  %v374 = vadd.f32 %v372, %v373
  %v375 = vrot.slane %v374, 1
  %v376 = vadd.f32 %v374, %v375
  %v377 = vmul.f32 %v376, 0.0078125
  %v378 = vsub.f32 %v277, %v377
  %v379 = vsub.f32 %v280, %v377
  %v380 = vsub.f32 %v285, %v377
  %v381 = vsub.f32 %v288, %v377
  %v382 = vsub.f32 %v293, %v377
  %v383 = vsub.f32 %v296, %v377
  %v384 = vsub.f32 %v301, %v377
  %v385 = vsub.f32 %v304, %v377
  %v386 = vsub.f32 %v309, %v377
  %v387 = vsub.f32 %v312, %v377
  %v388 = vsub.f32 %v317, %v377
  %v389 = vsub.f32 %v320, %v377
  %v390 = vsub.f32 %v325, %v377
  %v391 = vsub.f32 %v328, %v377
  %v392 = vsub.f32 %v333, %v377
  %v393 = vsub.f32 %v336, %v377
  %v394 = vmul.f32 %v378, %v378
  %v395 = vmul.f32 %v379, %v379
  %v396 = vmul.f32 %v380, %v380
  %v397 = vmul.f32 %v381, %v381
  %v398 = vmul.f32 %v382, %v382
  %v399 = vmul.f32 %v383, %v383
  %v400 = vmul.f32 %v384, %v384
  %v401 = vmul.f32 %v385, %v385
  %v402 = vmul.f32 %v386, %v386
  %v403 = vmul.f32 %v387, %v387
  %v404 = vmul.f32 %v388, %v388
  %v405 = vmul.f32 %v389, %v389
  %v406 = vmul.f32 %v390, %v390
  %v407 = vmul.f32 %v391, %v391
  %v408 = vmul.f32 %v392, %v392
  %v409 = vmul.f32 %v393, %v393
  %v410 = vsel %vm339, %v394, 0.0
  %v411 = vsel %vm339, %v395, 0.0
  %v412 = vadd.f32 %v410, %v411
  %v413 = vsel %vm339, %v396, 0.0
  %v414 = vadd.f32 %v412, %v413
  %v415 = vsel %vm339, %v397, 0.0
  %v416 = vadd.f32 %v414, %v415
  %v417 = vsel %vm339, %v398, 0.0
  %v418 = vadd.f32 %v416, %v417
  %v419 = vsel %vm339, %v399, 0.0
  %v420 = vadd.f32 %v418, %v419
  %v421 = vsel %vm339, %v400, 0.0
  %v422 = vadd.f32 %v420, %v421
  %v423 = vsel %vm339, %v401, 0.0
  %v424 = vadd.f32 %v422, %v423
  %v425 = vsel %vm339, %v402, 0.0
  %v426 = vadd.f32 %v424, %v425
  %v427 = vsel %vm339, %v403, 0.0
  %v428 = vadd.f32 %v426, %v427
  %v429 = vsel %vm339, %v404, 0.0
  %v430 = vadd.f32 %v428, %v429
  %v431 = vsel %vm339, %v405, 0.0
  %v432 = vadd.f32 %v430, %v431
  %v433 = vsel %vm339, %v406, 0.0
  %v434 = vadd.f32 %v432, %v433
  %v435 = vsel %vm339, %v407, 0.0
  %v436 = vadd.f32 %v434, %v435
  %v437 = vsel %vm339, %v408, 0.0
  %v438 = vadd.f32 %v436, %v437
  %v439 = vsel %vm339, %v409, 0.0
  %v440 = vadd.f32 %v438, %v439
  %v441 = vrot.slane %v440, 4
  %v442 = vadd.f32 %v440, %v441
  %v443 = vrot.slane %v442, 2
  %v444 = vadd.f32 %v442, %v443
  %v445 = vrot.slane %v444, 1
  %v446 = vadd.f32 %v444, %v445
  %v447 = vmul.f32 %v446, 0.0078125
  %v448 = vld [vmem:[%s2] sm:$0x1]
  %v449 = vadd.f32 %v447, 1e-05
  %v450 = vrsqrt.pop %v449
  %v451 = vmul.f32 %v448, %v450
  %v453 = vlaneseq
  %v454 = vshrl.u32 %v453, 7
  %v455 = vsub.s32 0, %v454
  %v456 = vrot.slane %v451, %v455
  %v458 = vmul.f32 %v378, %v456
  %v459 = vmul.f32 %v379, %v456
  %v460 = vmul.f32 %v380, %v456
  %v461 = vmul.f32 %v381, %v456
  %v462 = vmul.f32 %v382, %v456
  %v463 = vmul.f32 %v383, %v456
  %v464 = vmul.f32 %v384, %v456
  %v465 = vmul.f32 %v385, %v456
  %v466 = vmul.f32 %v386, %v456
  %v467 = vmul.f32 %v387, %v456
  %v468 = vmul.f32 %v388, %v456
  %v469 = vmul.f32 %v389, %v456
  %v470 = vmul.f32 %v390, %v456
  %v471 = vmul.f32 %v391, %v456
  %v472 = vmul.f32 %v392, %v456
  %v473 = vmul.f32 %v393, %v456
  %v474 = vld [vmem:[%s3] sm:$0x1]
  %v476 = vlaneseq
  %v477 = vshrl.u32 %v476, 7
  %v478 = vsub.s32 0, %v477
  %v479 = vrot.slane %v474, %v478
  %v481 = vadd.f32 %v458, %v479
  %v482 = vadd.f32 %v459, %v479
  %v483 = vadd.f32 %v460, %v479
  %v484 = vadd.f32 %v461, %v479
  %v485 = vadd.f32 %v462, %v479
  %v486 = vadd.f32 %v463, %v479
  %v487 = vadd.f32 %v464, %v479
  %v488 = vadd.f32 %v465, %v479
  %v489 = vadd.f32 %v466, %v479
  %v490 = vadd.f32 %v467, %v479
  %v491 = vadd.f32 %v468, %v479
  %v492 = vadd.f32 %v469, %v479
  %v493 = vadd.f32 %v470, %v479
  %v494 = vadd.f32 %v471, %v479
  %v495 = vadd.f32 %v472, %v479
  %v496 = vadd.f32 %v473, %v479
  %v497 = vmul.f32 %v481, 0.2
  %v498 = vmul.f32 %v482, 0.2
  %v499 = vmul.f32 %v483, 0.2
  %v500 = vmul.f32 %v484, 0.2
  %v501 = vmul.f32 %v485, 0.2
  %v502 = vmul.f32 %v486, 0.2
  %v503 = vmul.f32 %v487, 0.2
  %v504 = vmul.f32 %v488, 0.2
  %v505 = vmul.f32 %v489, 0.2
  %v506 = vmul.f32 %v490, 0.2
  %v507 = vmul.f32 %v491, 0.2
  %v508 = vmul.f32 %v492, 0.2
  %v509 = vmul.f32 %v493, 0.2
  %v510 = vmul.f32 %v494, 0.2
  %v511 = vmul.f32 %v495, 0.2
  %v512 = vmul.f32 %v496, 0.2
  %v513 = vmax.f32 %v481, %v497
  %v514 = vmax.f32 %v482, %v498
  %v515 = vmax.f32 %v483, %v499
  %v516 = vmax.f32 %v484, %v500
  %v517 = vmax.f32 %v485, %v501
  %v518 = vmax.f32 %v486, %v502
  %v519 = vmax.f32 %v487, %v503
  %v520 = vmax.f32 %v488, %v504
  %v521 = vmax.f32 %v489, %v505
  %v522 = vmax.f32 %v490, %v506
  %v523 = vmax.f32 %v491, %v507
  %v524 = vmax.f32 %v492, %v508
  %v525 = vmax.f32 %v493, %v509
  %v526 = vmax.f32 %v494, %v510
  %v527 = vmax.f32 %v495, %v511
  %v528 = vmax.f32 %v496, %v512
  %v529 = vpack.c.bf16 %v514, %v513
  %v530 = vpack.c.bf16 %v516, %v515
  %v531 = vpack.c.bf16 %v518, %v517
  %v532 = vpack.c.bf16 %v520, %v519
  %v533 = vpack.c.bf16 %v522, %v521
  %v534 = vpack.c.bf16 %v524, %v523
  %v535 = vpack.c.bf16 %v526, %v525
  %v536 = vpack.c.bf16 %v528, %v527
  %v545 = vunpack.c.l.b16 %v529
  %v546 = vunpack.c.h.b16 %v529
  %v547 = vunpack.c.l.b16 %v530
  %v548 = vunpack.c.h.b16 %v530
  %v549 = vunpack.c.l.b16 %v531
  %v550 = vunpack.c.h.b16 %v531
  %v551 = vunpack.c.l.b16 %v532
  %v552 = vunpack.c.h.b16 %v532
  %v553 = vunpack.c.l.b16 %v533
  %v554 = vunpack.c.h.b16 %v533
  %v555 = vunpack.c.l.b16 %v534
  %v556 = vunpack.c.h.b16 %v534
  %v557 = vunpack.c.l.b16 %v535
  %v558 = vunpack.c.h.b16 %v535
  %v559 = vunpack.c.l.b16 %v536
  %v560 = vunpack.c.h.b16 %v536
  %v561 = vpack.c.b16 %v545, %v545
  %v562 = vpack.c.b16 %v546, %v546
  %v563 = vpack.c.b16 %v547, %v547
  %v564 = vpack.c.b16 %v548, %v548
  %v565 = vpack.c.b16 %v549, %v549
  %v566 = vpack.c.b16 %v550, %v550
  %v567 = vpack.c.b16 %v551, %v551
  %v568 = vpack.c.b16 %v552, %v552
  %v569 = vpack.c.b16 %v553, %v553
  %v570 = vpack.c.b16 %v554, %v554
  %v571 = vpack.c.b16 %v555, %v555
  %v572 = vpack.c.b16 %v556, %v556
  %v573 = vpack.c.b16 %v557, %v557
  %v574 = vpack.c.b16 %v558, %v558
  %v575 = vpack.c.b16 %v559, %v559
  %v576 = vpack.c.b16 %v560, %v560
  %vm593 = vcmask 257024
  %594 = vst.msk [vmem:[%s4] sm:$0xf] %vm593, %v561
  %595 = vst.msk [vmem:[%s4 + $0x4] sm:$0xf] %vm593, %v562
  %596 = vst.msk [vmem:[%s4 + $0x8] sm:$0xf] %vm593, %v563
  %597 = vst.msk [vmem:[%s4 + $0xc] sm:$0xf] %vm593, %v564
  %598 = vst.msk [vmem:[%s4 + $0x10] sm:$0xf] %vm593, %v565
  %599 = vst.msk [vmem:[%s4 + $0x14] sm:$0xf] %vm593, %v566
  %600 = vst.msk [vmem:[%s4 + $0x18] sm:$0xf] %vm593, %v567
  %601 = vst.msk [vmem:[%s4 + $0x1c] sm:$0xf] %vm593, %v568
  %602 = vst.msk [vmem:[%s4 + $0x20] sm:$0xf] %vm593, %v569
  %603 = vst.msk [vmem:[%s4 + $0x24] sm:$0xf] %vm593, %v570
  %604 = vst.msk [vmem:[%s4 + $0x28] sm:$0xf] %vm593, %v571
  %605 = vst.msk [vmem:[%s4 + $0x2c] sm:$0xf] %vm593, %v572
  %606 = vst.msk [vmem:[%s4 + $0x30] sm:$0xf] %vm593, %v573
  %607 = vst.msk [vmem:[%s4 + $0x34] sm:$0xf] %vm593, %v574
  %608 = vst.msk [vmem:[%s4 + $0x38] sm:$0xf] %vm593, %v575
  %609 = vst.msk [vmem:[%s4 + $0x3c] sm:$0xf] %vm593, %v576
  // Predicated region
  $region18: #{forward.6} parent=0 // pred_check
    _
  $region19: #{forward.6} parent=0 // pred_check_branch
    %611 = sbr.rel (0) target = $region21
  $region20: #{forward.6} parent=0 // pred_region
    _
  $region21: #{forward.6} parent=0 // pred_fallthru
    _
  // Predicated region
  $region22: #{forward.6} parent=0 // pred_check
    _
  $region23: #{forward.6} parent=0 // pred_check_branch
    %613 = sbr.rel (0) target = $region25
  $region24: #{forward.6} parent=0 // pred_region
    _
  $region25: #{forward.6} parent=0 // pred_fallthru
    _

// kernel: forward.7
$region0: #{forward.7}
  #allocation0 [shape = 'u32[]', space=smem, size = 0x4, offset = 0x4, fixed_abs, tag = 'smem constant byte address 0x4 - core index']
  #allocation1 [shape = 'u32[144,128]{1,0:T(1,128)}', space=vmem, size = 0x12000, scoped, tag = 'internal scratch']
  %s0 = inlined_call_operand.vmem [shape: bf16[32,512], index: 0, kind: input, shape index: {}]
  %s1 = inlined_call_operand.vmem [shape: bf16[512,64], index: 1, kind: input, shape index: {}]
  %s2 = inlined_call_operand.vmem [shape: f32[1,64], index: 2, kind: input, shape index: {}]
  %s3 = inlined_call_operand.vmem [shape: f32[1,64], index: 3, kind: input, shape index: {}]
  %s4 = inlined_call_operand.vmem [shape: bf16[32,64], index: 4, kind: output, shape index: {}]
  %s5 = sld [smem:[#allocation0]]
  $region26: #{forward.7} parent=0
    _
  %s7 = ssub.s32 1, %s5
  %s8 = scalar_select 0, %s7, %s5
  // Predicated region
  $region2: #{forward.7} parent=0 // pred_check
    _
  $region3: #{forward.7} parent=0 // pred_check_branch
    %10 = sbr.rel (0) target = $region5
  $region4: #{forward.7} parent=0 // pred_region
    _
  $region5: #{forward.7} parent=0 // pred_fallthru
    _
  // Predicated region
  $region6: #{forward.7} parent=0 // pred_check
    _
  $region7: #{forward.7} parent=0 // pred_check_branch
    %12 = sbr.rel (0) target = $region9
  $region8: #{forward.7} parent=0 // pred_region
    _
  $region9: #{forward.7} parent=0 // pred_fallthru
    _
  // Predicated region
  $region10: #{forward.7} parent=0 // pred_check
    _
  $region11: #{forward.7} parent=0 // pred_check_branch
    %14 = sbr.rel (0) target = $region13
  $region12: #{forward.7} parent=0 // pred_region
    _
  $region13: #{forward.7} parent=0 // pred_fallthru
    _
  // Predicated region
  $region14: #{forward.7} parent=0 // pred_check
    _
  $region15: #{forward.7} parent=0 // pred_check_branch
    %16 = sbr.rel (0) target = $region17
  $region16: #{forward.7} parent=0 // pred_region
    _
  $region17: #{forward.7} parent=0 // pred_fallthru
    _
  %v18 = vld [vmem:[%s0] sm:$0xff]
  %v19 = vld [vmem:[%s0 + $0x8] sm:$0xff]
  %v20 = vld [vmem:[%s0 + $0x10] sm:$0xff]
  %v21 = vld [vmem:[%s0 + $0x18] sm:$0xff]
  %v22 = vld [vmem:[%s0 + $0x20] sm:$0xff]
  %v23 = vld [vmem:[%s0 + $0x28] sm:$0xff]
  %v24 = vld [vmem:[%s0 + $0x30] sm:$0xff]
  %v25 = vld [vmem:[%s0 + $0x38] sm:$0xff]
  %v26 = vld [vmem:[%s1] sm:$0xf]
  %v27 = vld [vmem:[%s1 + $0x4] sm:$0xf]
  %v28 = vld [vmem:[%s1 + $0x8] sm:$0xf]
  %v29 = vld [vmem:[%s1 + $0xc] sm:$0xf]
  %v30 = vld [vmem:[%s1 + $0x10] sm:$0xf]
  %v31 = vld [vmem:[%s1 + $0x14] sm:$0xf]
  %v32 = vld [vmem:[%s1 + $0x18] sm:$0xf]
  %v33 = vld [vmem:[%s1 + $0x1c] sm:$0xf]
  %v34 = vld [vmem:[%s1 + $0x20] sm:$0xf]
  %v35 = vld [vmem:[%s1 + $0x24] sm:$0xf]
  %v36 = vld [vmem:[%s1 + $0x28] sm:$0xf]
  %v37 = vld [vmem:[%s1 + $0x2c] sm:$0xf]
  %v38 = vld [vmem:[%s1 + $0x30] sm:$0xf]
  %v39 = vld [vmem:[%s1 + $0x34] sm:$0xf]
  %v40 = vld [vmem:[%s1 + $0x38] sm:$0xf]
  %v41 = vld [vmem:[%s1 + $0x3c] sm:$0xf]
  %v42 = vld [vmem:[%s1 + $0x40] sm:$0xf]
  %v43 = vld [vmem:[%s1 + $0x44] sm:$0xf]
  %v44 = vld [vmem:[%s1 + $0x48] sm:$0xf]
  %v45 = vld [vmem:[%s1 + $0x4c] sm:$0xf]
  %v46 = vld [vmem:[%s1 + $0x50] sm:$0xf]
  %v47 = vld [vmem:[%s1 + $0x54] sm:$0xf]
  %v48 = vld [vmem:[%s1 + $0x58] sm:$0xf]
  %v49 = vld [vmem:[%s1 + $0x5c] sm:$0xf]
  %v50 = vld [vmem:[%s1 + $0x60] sm:$0xf]
  %v51 = vld [vmem:[%s1 + $0x64] sm:$0xf]
  %v52 = vld [vmem:[%s1 + $0x68] sm:$0xf]
  %v53 = vld [vmem:[%s1 + $0x6c] sm:$0xf]
  %v54 = vld [vmem:[%s1 + $0x70] sm:$0xf]
  %v55 = vld [vmem:[%s1 + $0x74] sm:$0xf]
  %v56 = vld [vmem:[%s1 + $0x78] sm:$0xf]
  %v57 = vld [vmem:[%s1 + $0x7c] sm:$0xf]
  %v58 = vld [vmem:[%s1 + $0x80] sm:$0xf]
  %v59 = vld [vmem:[%s1 + $0x84] sm:$0xf]
  %v60 = vld [vmem:[%s1 + $0x88] sm:$0xf]
  %v61 = vld [vmem:[%s1 + $0x8c] sm:$0xf]
  %v62 = vld [vmem:[%s1 + $0x90] sm:$0xf]
  %v63 = vld [vmem:[%s1 + $0x94] sm:$0xf]
  %v64 = vld [vmem:[%s1 + $0x98] sm:$0xf]
  %v65 = vld [vmem:[%s1 + $0x9c] sm:$0xf]
  %v66 = vld [vmem:[%s1 + $0xa0] sm:$0xf]
  %v67 = vld [vmem:[%s1 + $0xa4] sm:$0xf]
  %v68 = vld [vmem:[%s1 + $0xa8] sm:$0xf]
  %v69 = vld [vmem:[%s1 + $0xac] sm:$0xf]
  %v70 = vld [vmem:[%s1 + $0xb0] sm:$0xf]
  %v71 = vld [vmem:[%s1 + $0xb4] sm:$0xf]
  %v72 = vld [vmem:[%s1 + $0xb8] sm:$0xf]
  %v73 = vld [vmem:[%s1 + $0xbc] sm:$0xf]
  %v74 = vld [vmem:[%s1 + $0xc0] sm:$0xf]
  %v75 = vld [vmem:[%s1 + $0xc4] sm:$0xf]
  %v76 = vld [vmem:[%s1 + $0xc8] sm:$0xf]
  %v77 = vld [vmem:[%s1 + $0xcc] sm:$0xf]
  %v78 = vld [vmem:[%s1 + $0xd0] sm:$0xf]
  %v79 = vld [vmem:[%s1 + $0xd4] sm:$0xf]
  %v80 = vld [vmem:[%s1 + $0xd8] sm:$0xf]
  %v81 = vld [vmem:[%s1 + $0xdc] sm:$0xf]
  %v82 = vld [vmem:[%s1 + $0xe0] sm:$0xf]
  %v83 = vld [vmem:[%s1 + $0xe4] sm:$0xf]
  %v84 = vld [vmem:[%s1 + $0xe8] sm:$0xf]
  %v85 = vld [vmem:[%s1 + $0xec] sm:$0xf]
  %v86 = vld [vmem:[%s1 + $0xf0] sm:$0xf]
  %v87 = vld [vmem:[%s1 + $0xf4] sm:$0xf]
  %v88 = vld [vmem:[%s1 + $0xf8] sm:$0xf]
  %v89 = vld [vmem:[%s1 + $0xfc] sm:$0xf]
  %v98 = vunpack.c.l.b16 %v18
  %v99 = vunpack.c.h.b16 %v18
  %v100 = vunpack.c.l.b16 %v19
  %v101 = vunpack.c.h.b16 %v19
  %v102 = vunpack.c.l.b16 %v20
  %v103 = vunpack.c.h.b16 %v20
  %v104 = vunpack.c.l.b16 %v21
  %v105 = vunpack.c.h.b16 %v21
  %v106 = vunpack.c.l.b16 %v22
  %v107 = vunpack.c.h.b16 %v22
  %v108 = vunpack.c.l.b16 %v23
  %v109 = vunpack.c.h.b16 %v23
  %v110 = vunpack.c.l.b16 %v24
  %v111 = vunpack.c.h.b16 %v24
  %v112 = vunpack.c.l.b16 %v25
  %v113 = vunpack.c.h.b16 %v25
  %v114 = vpack.c.b16 %v102, %v98
  %v115 = vpack.c.b16 %v103, %v99
  %v116 = vpack.c.b16 %v104, %v100
  %v117 = vpack.c.b16 %v105, %v101
  %v118 = vpack.c.b16 %v110, %v106
  %v119 = vpack.c.b16 %v111, %v107
  %v120 = vpack.c.b16 %v112, %v108
  %v121 = vpack.c.b16 %v113, %v109
  %v194 = vunpack.c.l.b16 %v26
  %v195 = vunpack.c.l.b16 %v27
  %v196 = vunpack.c.l.b16 %v28
  %v197 = vunpack.c.l.b16 %v29
  %v198 = vunpack.c.l.b16 %v30
  %v199 = vunpack.c.l.b16 %v31
  %v200 = vunpack.c.l.b16 %v32
  %v201 = vunpack.c.l.b16 %v33
  %v202 = vunpack.c.l.b16 %v34
  %v203 = vunpack.c.l.b16 %v35
  %v204 = vunpack.c.l.b16 %v36
  %v205 = vunpack.c.l.b16 %v37
  %v206 = vunpack.c.l.b16 %v38
  %v207 = vunpack.c.l.b16 %v39
  %v208 = vunpack.c.l.b16 %v40
  %v209 = vunpack.c.l.b16 %v41
  %v210 = vunpack.c.l.b16 %v42
  %v211 = vunpack.c.l.b16 %v43
  %v212 = vunpack.c.l.b16 %v44
  %v213 = vunpack.c.l.b16 %v45
  %v214 = vunpack.c.l.b16 %v46
  %v215 = vunpack.c.l.b16 %v47
  %v216 = vunpack.c.l.b16 %v48
  %v217 = vunpack.c.l.b16 %v49
  %v218 = vunpack.c.l.b16 %v50
  %v219 = vunpack.c.l.b16 %v51
  %v220 = vunpack.c.l.b16 %v52
  %v221 = vunpack.c.l.b16 %v53
  %v222 = vunpack.c.l.b16 %v54
  %v223 = vunpack.c.l.b16 %v55
  %v224 = vunpack.c.l.b16 %v56
  %v225 = vunpack.c.l.b16 %v57
  %v226 = vunpack.c.l.b16 %v58
  %v227 = vunpack.c.l.b16 %v59
  %v228 = vunpack.c.l.b16 %v60
  %v229 = vunpack.c.l.b16 %v61
  %v230 = vunpack.c.l.b16 %v62
  %v231 = vunpack.c.l.b16 %v63
  %v232 = vunpack.c.l.b16 %v64
  %v233 = vunpack.c.l.b16 %v65
  %v234 = vunpack.c.l.b16 %v66
  %v235 = vunpack.c.l.b16 %v67
  %v236 = vunpack.c.l.b16 %v68
  %v237 = vunpack.c.l.b16 %v69
  %v238 = vunpack.c.l.b16 %v70
  %v239 = vunpack.c.l.b16 %v71
  %v240 = vunpack.c.l.b16 %v72
  %v241 = vunpack.c.l.b16 %v73
  %v242 = vunpack.c.l.b16 %v74
  %v243 = vunpack.c.l.b16 %v75
  %v244 = vunpack.c.l.b16 %v76
  %v245 = vunpack.c.l.b16 %v77
  %v246 = vunpack.c.l.b16 %v78
  %v247 = vunpack.c.l.b16 %v79
  %v248 = vunpack.c.l.b16 %v80
  %v249 = vunpack.c.l.b16 %v81
  %v250 = vunpack.c.l.b16 %v82
  %v251 = vunpack.c.l.b16 %v83
  %v252 = vunpack.c.l.b16 %v84
  %v253 = vunpack.c.l.b16 %v85
  %v254 = vunpack.c.l.b16 %v86
  %v255 = vunpack.c.l.b16 %v87
  %v256 = vunpack.c.l.b16 %v88
  %v257 = vunpack.c.l.b16 %v89
  %v258 = vpack.c.b16 %v195, %v194
  %v259 = vpack.c.b16 %v197, %v196
  %v260 = vpack.c.b16 %v199, %v198
  %v261 = vpack.c.b16 %v201, %v200
  %v262 = vpack.c.b16 %v203, %v202
  %v263 = vpack.c.b16 %v205, %v204
  %v264 = vpack.c.b16 %v207, %v206
  %v265 = vpack.c.b16 %v209, %v208
  %v266 = vpack.c.b16 %v211, %v210
  %v267 = vpack.c.b16 %v213, %v212
  %v268 = vpack.c.b16 %v215, %v214
  %v269 = vpack.c.b16 %v217, %v216
  %v270 = vpack.c.b16 %v219, %v218
  %v271 = vpack.c.b16 %v221, %v220
  %v272 = vpack.c.b16 %v223, %v222
  %v273 = vpack.c.b16 %v225, %v224
  %v274 = vpack.c.b16 %v227, %v226
  %v275 = vpack.c.b16 %v229, %v228
  %v276 = vpack.c.b16 %v231, %v230
  %v277 = vpack.c.b16 %v233, %v232
  %v278 = vpack.c.b16 %v235, %v234
  %v279 = vpack.c.b16 %v237, %v236
  %v280 = vpack.c.b16 %v239, %v238
  %v281 = vpack.c.b16 %v241, %v240
  %v282 = vpack.c.b16 %v243, %v242
  %v283 = vpack.c.b16 %v245, %v244
  %v284 = vpack.c.b16 %v247, %v246
  %v285 = vpack.c.b16 %v249, %v248
  %v286 = vpack.c.b16 %v251, %v250
  %v287 = vpack.c.b16 %v253, %v252
  %v288 = vpack.c.b16 %v255, %v254
  %v289 = vpack.c.b16 %v257, %v256
  %322 = vmatprep.subr.bf16.mxu0 0
  %323 = vmatpush1.bf16.msra.mxu0 %v258
  %324 = vmatprep.subr.bf16.mxu0 0
  %325 = vmatpush1.bf16.msra.mxu0 %v259
  %326 = vmatprep.subr.bf16.mxu0 0
  %327 = vmatpush1.bf16.msra.mxu0 %v260
  %328 = vmatprep.subr.bf16.mxu0 0
  %329 = vmatpush1.bf16.msra.mxu0 %v261
  %330 = vmatprep.subr.bf16.mxu0 0
  %331 = vmatpush1.bf16.msra.mxu0 %v262
  %332 = vmatprep.subr.bf16.mxu0 0
  %333 = vmatpush1.bf16.msra.mxu0 %v263
  %334 = vmatprep.subr.bf16.mxu0 0
  %335 = vmatpush1.bf16.msra.mxu0 %v264
  %336 = vmatprep.subr.bf16.mxu0 0
  %337 = vmatpush1.bf16.msra.mxu0 %v265
  %338 = vmatprep.subr.bf16.mxu0 0
  %339 = vmatpush1.bf16.msra.mxu0 %v266
  %340 = vmatprep.subr.bf16.mxu0 0
  %341 = vmatpush1.bf16.msra.mxu0 %v267
  %342 = vmatprep.subr.bf16.mxu0 0
  %343 = vmatpush1.bf16.msra.mxu0 %v268
  %344 = vmatprep.subr.bf16.mxu0 0
  %345 = vmatpush1.bf16.msra.mxu0 %v269
  %346 = vmatprep.subr.bf16.mxu0 0
  %347 = vmatpush1.bf16.msra.mxu0 %v270
  %348 = vmatprep.subr.bf16.mxu0 0
  %349 = vmatpush1.bf16.msra.mxu0 %v271
  %350 = vmatprep.subr.bf16.mxu0 0
  %351 = vmatpush1.bf16.msra.mxu0 %v272
  %352 = vmatprep.subr.bf16.mxu0 0
  %353 = vmatpush1.bf16.msra.mxu0 %v273
  %354 = vmatprep.mubr.bf16.mxu0 %v115
  %355 = vmatmul.mubr.bf16.gmra.mrb[0].mxu0 %v114
  %v356 = vpop.f32.mrb[0].mxu0
  %v357 = vadd.f32 0.0, %v356
  %v358 = vpop.f32.mrb[0].mxu0
  %v359 = vpop.f32.mrb[0].mxu0
  %v360 = vadd.f32 0.0, %v359
  %v361 = vpop.f32.mrb[0].mxu0
  %362 = vmatprep.mubr.bf16.mxu0 %v119
  %363 = vmatmul.mubr.bf16.gmra.mrb[0].mxu0 %v118
  %v364 = vpop.f32.mrb[0].mxu0
  %v365 = vadd.f32 0.0, %v364
  %v366 = vpop.f32.mrb[0].mxu0
  %v367 = vpop.f32.mrb[0].mxu0
  %v368 = vadd.f32 0.0, %v367
  %v369 = vpop.f32.mrb[0].mxu0
  %370 = vdwg.mxu0
  %371 = vmatprep.subr.bf16.mxu0 0
  %372 = vmatpush1.bf16.msra.mxu0 %v274
  %373 = vmatprep.subr.bf16.mxu0 0
  %374 = vmatpush1.bf16.msra.mxu0 %v275
  %375 = vmatprep.subr.bf16.mxu0 0
  %376 = vmatpush1.bf16.msra.mxu0 %v276
  %377 = vmatprep.subr.bf16.mxu0 0
  %378 = vmatpush1.bf16.msra.mxu0 %v277
  %379 = vmatprep.subr.bf16.mxu0 0
  %380 = vmatpush1.bf16.msra.mxu0 %v278
  %381 = vmatprep.subr.bf16.mxu0 0
  %382 = vmatpush1.bf16.msra.mxu0 %v279
  %383 = vmatprep.subr.bf16.mxu0 0
  %384 = vmatpush1.bf16.msra.mxu0 %v280
  %385 = vmatprep.subr.bf16.mxu0 0
  %386 = vmatpush1.bf16.msra.mxu0 %v281
  %387 = vmatprep.subr.bf16.mxu0 0
  %388 = vmatpush1.bf16.msra.mxu0 %v282
  %389 = vmatprep.subr.bf16.mxu0 0
  %390 = vmatpush1.bf16.msra.mxu0 %v283
  %391 = vmatprep.subr.bf16.mxu0 0
  %392 = vmatpush1.bf16.msra.mxu0 %v284
  %393 = vmatprep.subr.bf16.mxu0 0
  %394 = vmatpush1.bf16.msra.mxu0 %v285
  %395 = vmatprep.subr.bf16.mxu0 0
  %396 = vmatpush1.bf16.msra.mxu0 %v286
  %397 = vmatprep.subr.bf16.mxu0 0
  %398 = vmatpush1.bf16.msra.mxu0 %v287
  %399 = vmatprep.subr.bf16.mxu0 0
  %400 = vmatpush1.bf16.msra.mxu0 %v288
  %401 = vmatprep.subr.bf16.mxu0 0
  %402 = vmatpush1.bf16.msra.mxu0 %v289
  %403 = vmatprep.mubr.bf16.mxu0 %v117
  %404 = vmatmul.mubr.bf16.gmra.mrb[0].mxu0 %v116
  %v405 = vpop.f32.mrb[0].mxu0
  %v406 = vadd.f32 %v357, %v405
  %v407 = vpop.f32.mrb[0].mxu0
  %v408 = vpop.f32.mrb[0].mxu0
  %v409 = vadd.f32 %v360, %v408
  %v410 = vpop.f32.mrb[0].mxu0
  %411 = vmatprep.mubr.bf16.mxu0 %v121
  %412 = vmatmul.mubr.bf16.gmra.mrb[0].mxu0 %v120
  %v413 = vpop.f32.mrb[0].mxu0
  %v414 = vadd.f32 %v365, %v413
  %v415 = vpop.f32.mrb[0].mxu0
  %v416 = vpop.f32.mrb[0].mxu0
  %v417 = vadd.f32 %v368, %v416
  %v418 = vpop.f32.mrb[0].mxu0
  %419 = vdwg.mxu0
  %vm420 = vcmask 523264
  %v421 = vsel %vm420, %v406, 0.0
  %v422 = vsel %vm420, %v409, 0.0
  %v423 = vadd.f32 %v421, %v422
  %v424 = vsel %vm420, %v414, 0.0
  %v425 = vadd.f32 %v423, %v424
  %v426 = vsel %vm420, %v417, 0.0
  %v427 = vadd.f32 %v425, %v426
  %v428 = vrot.slane %v427, 4
  %v429 = vadd.f32 %v427, %v428
  %v430 = vrot.slane %v429, 2
  %v431 = vadd.f32 %v429, %v430
  %v432 = vrot.slane %v431, 1
  %v433 = vadd.f32 %v431, %v432
  %v434 = vmul.f32 %v433, 0.03125
  %v435 = vsub.f32 %v406, %v434
  %v436 = vsub.f32 %v409, %v434
  %v437 = vsub.f32 %v414, %v434
  %v438 = vsub.f32 %v417, %v434
  %v439 = vmul.f32 %v435, %v435
  %v440 = vmul.f32 %v436, %v436
  %v441 = vmul.f32 %v437, %v437
  %v442 = vmul.f32 %v438, %v438
  %v443 = vsel %vm420, %v439, 0.0
  %v444 = vsel %vm420, %v440, 0.0
  %v445 = vadd.f32 %v443, %v444
  %v446 = vsel %vm420, %v441, 0.0
  %v447 = vadd.f32 %v445, %v446
  %v448 = vsel %vm420, %v442, 0.0
  %v449 = vadd.f32 %v447, %v448
  %v450 = vrot.slane %v449, 4
  %v451 = vadd.f32 %v449, %v450
  %v452 = vrot.slane %v451, 2
  %v453 = vadd.f32 %v451, %v452
  %v454 = vrot.slane %v453, 1
  %v455 = vadd.f32 %v453, %v454
  %v456 = vmul.f32 %v455, 0.03125
  %v457 = vld [vmem:[%s2] sm:$0x1]
  %v458 = vadd.f32 %v456, 1e-05
  %v459 = vrsqrt.pop %v458
  %v460 = vmul.f32 %v457, %v459
  %v462 = vlaneseq
  %v463 = vshrl.u32 %v462, 7
  %v464 = vsub.s32 0, %v463
  %v465 = vrot.slane %v460, %v464
  %v467 = vmul.f32 %v435, %v465
  %v468 = vmul.f32 %v436, %v465
  %v469 = vmul.f32 %v437, %v465
  %v470 = vmul.f32 %v438, %v465
  %v471 = vld [vmem:[%s3] sm:$0x1]
  %v473 = vlaneseq
  %v474 = vshrl.u32 %v473, 7
  %v475 = vsub.s32 0, %v474
  %v476 = vrot.slane %v471, %v475
  %v478 = vadd.f32 %v467, %v476
  %v479 = vadd.f32 %v468, %v476
  %v480 = vadd.f32 %v469, %v476
  %v481 = vadd.f32 %v470, %v476
  %v482 = vmul.f32 %v478, 0.2
  %v483 = vmul.f32 %v479, 0.2
  %v484 = vmul.f32 %v480, 0.2
  %v485 = vmul.f32 %v481, 0.2
  %v486 = vmax.f32 %v478, %v482
  %v487 = vmax.f32 %v479, %v483
  %v488 = vmax.f32 %v480, %v484
  %v489 = vmax.f32 %v481, %v485
  %v490 = vpack.c.bf16 %v487, %v486
  %v491 = vpack.c.bf16 %v489, %v488
  %v494 = vunpack.c.l.b16 %v490
  %v495 = vunpack.c.h.b16 %v490
  %v496 = vunpack.c.l.b16 %v491
  %v497 = vunpack.c.h.b16 %v491
  %v498 = vpack.c.b16 %v494, %v494
  %v499 = vpack.c.b16 %v495, %v495
  %v500 = vpack.c.b16 %v496, %v496
  %v501 = vpack.c.b16 %v497, %v497
  %vm506 = vcmask 519168
  %507 = vst.msk [vmem:[%s4] sm:$0xf] %vm506, %v498
  %508 = vst.msk [vmem:[%s4 + $0x4] sm:$0xf] %vm506, %v499
  %509 = vst.msk [vmem:[%s4 + $0x8] sm:$0xf] %vm506, %v500
  %510 = vst.msk [vmem:[%s4 + $0xc] sm:$0xf] %vm506, %v501
  // Predicated region
  $region18: #{forward.7} parent=0 // pred_check
    _
  $region19: #{forward.7} parent=0 // pred_check_branch
    %512 = sbr.rel (0) target = $region21
  $region20: #{forward.7} parent=0 // pred_region
    _
  $region21: #{forward.7} parent=0 // pred_fallthru
    _
  // Predicated region
  $region22: #{forward.7} parent=0 // pred_check
    _
  $region23: #{forward.7} parent=0 // pred_check_branch
    %514 = sbr.rel (0) target = $region25
  $region24: #{forward.7} parent=0 // pred_region
    _
  $region25: #{forward.7} parent=0 // pred_fallthru
    _

// kernel: forward.8
$region0: #{forward.8}
  #allocation0 [shape = 'u32[]', space=smem, size = 0x4, offset = 0x4, fixed_abs, tag = 'smem constant byte address 0x4 - core index']
  #allocation1 [shape = 'u32[144,128]{1,0:T(1,128)}', space=vmem, size = 0x12000, scoped, tag = 'internal scratch']
  %s0 = inlined_call_operand.vmem [shape: bf16[18,1024], index: 0, kind: input, shape index: {}]
  %s1 = inlined_call_operand.vmem [shape: bf16[1024,128], index: 1, kind: input, shape index: {}]
  %s2 = inlined_call_operand.vmem [shape: f32[1,128], index: 2, kind: input, shape index: {}]
  %s3 = inlined_call_operand.vmem [shape: f32[1,128], index: 3, kind: input, shape index: {}]
  %s4 = inlined_call_operand.vmem [shape: bf16[18,128], index: 4, kind: output, shape index: {}]
  %s5 = sld [smem:[#allocation0]]
  $region26: #{forward.8} parent=0
    _
  %s7 = ssub.s32 1, %s5
  %s8 = scalar_select 0, %s7, %s5
  // Predicated region
  $region2: #{forward.8} parent=0 // pred_check
    _
  $region3: #{forward.8} parent=0 // pred_check_branch
    %10 = sbr.rel (0) target = $region5
  $region4: #{forward.8} parent=0 // pred_region
    _
  $region5: #{forward.8} parent=0 // pred_fallthru
    _
  // Predicated region
  $region6: #{forward.8} parent=0 // pred_check
    _
  $region7: #{forward.8} parent=0 // pred_check_branch
    %12 = sbr.rel (0) target = $region9
  $region8: #{forward.8} parent=0 // pred_region
    _
  $region9: #{forward.8} parent=0 // pred_fallthru
    _
  // Predicated region
  $region10: #{forward.8} parent=0 // pred_check
    _
  $region11: #{forward.8} parent=0 // pred_check_branch
    %14 = sbr.rel (0) target = $region13
  $region12: #{forward.8} parent=0 // pred_region
    _
  $region13: #{forward.8} parent=0 // pred_fallthru
    _
  // Predicated region
  $region14: #{forward.8} parent=0 // pred_check
    _
  $region15: #{forward.8} parent=0 // pred_check_branch
    %16 = sbr.rel (0) target = $region17
  $region16: #{forward.8} parent=0 // pred_region
    _
  $region17: #{forward.8} parent=0 // pred_fallthru
    _
  %v18 = vld [vmem:[%s0] sm:$0xff]
  %v19 = vld [vmem:[%s0 + $0x8] sm:$0xff]
  %v20 = vld [vmem:[%s0 + $0x10] sm:$0xff]
  %v21 = vld [vmem:[%s0 + $0x18] sm:$0xff]
  %v22 = vld [vmem:[%s0 + $0x20] sm:$0xff]
  %v23 = vld [vmem:[%s0 + $0x28] sm:$0xff]
  %v24 = vld [vmem:[%s0 + $0x30] sm:$0xff]
  %v25 = vld [vmem:[%s0 + $0x38] sm:$0xff]
  %v26 = vld [vmem:[%s0 + $0x40] sm:$0x11]
  %v27 = vld [vmem:[%s0 + $0x48] sm:$0x11]
  %v28 = vld [vmem:[%s0 + $0x50] sm:$0x11]
  %v29 = vld [vmem:[%s0 + $0x58] sm:$0x11]
  %v30 = vld [vmem:[%s1] sm:$0xf]
  %v31 = vld [vmem:[%s1 + $0x4] sm:$0xf]
  %v32 = vld [vmem:[%s1 + $0x8] sm:$0xf]
  %v33 = vld [vmem:[%s1 + $0xc] sm:$0xf]
  %v34 = vld [vmem:[%s1 + $0x10] sm:$0xf]
  %v35 = vld [vmem:[%s1 + $0x14] sm:$0xf]
  %v36 = vld [vmem:[%s1 + $0x18] sm:$0xf]
  %v37 = vld [vmem:[%s1 + $0x1c] sm:$0xf]
  %v38 = vld [vmem:[%s1 + $0x20] sm:$0xf]
  %v39 = vld [vmem:[%s1 + $0x24] sm:$0xf]
  %v40 = vld [vmem:[%s1 + $0x28] sm:$0xf]
  %v41 = vld [vmem:[%s1 + $0x2c] sm:$0xf]
  %v42 = vld [vmem:[%s1 + $0x30] sm:$0xf]
  %v43 = vld [vmem:[%s1 + $0x34] sm:$0xf]
  %v44 = vld [vmem:[%s1 + $0x38] sm:$0xf]
  %v45 = vld [vmem:[%s1 + $0x3c] sm:$0xf]
  %v46 = vld [vmem:[%s1 + $0x40] sm:$0xf]
  %v47 = vld [vmem:[%s1 + $0x44] sm:$0xf]
  %v48 = vld [vmem:[%s1 + $0x48] sm:$0xf]
  %v49 = vld [vmem:[%s1 + $0x4c] sm:$0xf]
  %v50 = vld [vmem:[%s1 + $0x50] sm:$0xf]
  %v51 = vld [vmem:[%s1 + $0x54] sm:$0xf]
  %v52 = vld [vmem:[%s1 + $0x58] sm:$0xf]
  %v53 = vld [vmem:[%s1 + $0x5c] sm:$0xf]
  %v54 = vld [vmem:[%s1 + $0x60] sm:$0xf]
  %v55 = vld [vmem:[%s1 + $0x64] sm:$0xf]
  %v56 = vld [vmem:[%s1 + $0x68] sm:$0xf]
  %v57 = vld [vmem:[%s1 + $0x6c] sm:$0xf]
  %v58 = vld [vmem:[%s1 + $0x70] sm:$0xf]
  %v59 = vld [vmem:[%s1 + $0x74] sm:$0xf]
  %v60 = vld [vmem:[%s1 + $0x78] sm:$0xf]
  %v61 = vld [vmem:[%s1 + $0x7c] sm:$0xf]
  %v62 = vld [vmem:[%s1 + $0x80] sm:$0xf]
  %v63 = vld [vmem:[%s1 + $0x84] sm:$0xf]
  %v64 = vld [vmem:[%s1 + $0x88] sm:$0xf]
  %v65 = vld [vmem:[%s1 + $0x8c] sm:$0xf]
  %v66 = vld [vmem:[%s1 + $0x90] sm:$0xf]
  %v67 = vld [vmem:[%s1 + $0x94] sm:$0xf]
  %v68 = vld [vmem:[%s1 + $0x98] sm:$0xf]
  %v69 = vld [vmem:[%s1 + $0x9c] sm:$0xf]
  %v70 = vld [vmem:[%s1 + $0xa0] sm:$0xf]
  %v71 = vld [vmem:[%s1 + $0xa4] sm:$0xf]
  %v72 = vld [vmem:[%s1 + $0xa8] sm:$0xf]
  %v73 = vld [vmem:[%s1 + $0xac] sm:$0xf]
  %v74 = vld [vmem:[%s1 + $0xb0] sm:$0xf]
  %v75 = vld [vmem:[%s1 + $0xb4] sm:$0xf]
  %v76 = vld [vmem:[%s1 + $0xb8] sm:$0xf]
  %v77 = vld [vmem:[%s1 + $0xbc] sm:$0xf]
  %v78 = vld [vmem:[%s1 + $0xc0] sm:$0xf]
  %v79 = vld [vmem:[%s1 + $0xc4] sm:$0xf]
  %v80 = vld [vmem:[%s1 + $0xc8] sm:$0xf]
  %v81 = vld [vmem:[%s1 + $0xcc] sm:$0xf]
  %v82 = vld [vmem:[%s1 + $0xd0] sm:$0xf]
  %v83 = vld [vmem:[%s1 + $0xd4] sm:$0xf]
  %v84 = vld [vmem:[%s1 + $0xd8] sm:$0xf]
  %v85 = vld [vmem:[%s1 + $0xdc] sm:$0xf]
  %v86 = vld [vmem:[%s1 + $0xe0] sm:$0xf]
  %v87 = vld [vmem:[%s1 + $0xe4] sm:$0xf]
  %v88 = vld [vmem:[%s1 + $0xe8] sm:$0xf]
  %v89 = vld [vmem:[%s1 + $0xec] sm:$0xf]
  %v90 = vld [vmem:[%s1 + $0xf0] sm:$0xf]
  %v91 = vld [vmem:[%s1 + $0xf4] sm:$0xf]
  %v92 = vld [vmem:[%s1 + $0xf8] sm:$0xf]
  %v93 = vld [vmem:[%s1 + $0xfc] sm:$0xf]
  %v94 = vld [vmem:[%s1 + $0x100] sm:$0xf]
  %v95 = vld [vmem:[%s1 + $0x104] sm:$0xf]
  %v96 = vld [vmem:[%s1 + $0x108] sm:$0xf]
  %v97 = vld [vmem:[%s1 + $0x10c] sm:$0xf]
  %v98 = vld [vmem:[%s1 + $0x110] sm:$0xf]
  %v99 = vld [vmem:[%s1 + $0x114] sm:$0xf]
  %v100 = vld [vmem:[%s1 + $0x118] sm:$0xf]
  %v101 = vld [vmem:[%s1 + $0x11c] sm:$0xf]
  %v102 = vld [vmem:[%s1 + $0x120] sm:$0xf]
  %v103 = vld [vmem:[%s1 + $0x124] sm:$0xf]
  %v104 = vld [vmem:[%s1 + $0x128] sm:$0xf]
  %v105 = vld [vmem:[%s1 + $0x12c] sm:$0xf]
  %v106 = vld [vmem:[%s1 + $0x130] sm:$0xf]
  %v107 = vld [vmem:[%s1 + $0x134] sm:$0xf]
  %v108 = vld [vmem:[%s1 + $0x138] sm:$0xf]
  %v109 = vld [vmem:[%s1 + $0x13c] sm:$0xf]
  %v110 = vld [vmem:[%s1 + $0x140] sm:$0xf]
  %v111 = vld [vmem:[%s1 + $0x144] sm:$0xf]
  %v112 = vld [vmem:[%s1 + $0x148] sm:$0xf]
  %v113 = vld [vmem:[%s1 + $0x14c] sm:$0xf]
  %v114 = vld [vmem:[%s1 + $0x150] sm:$0xf]
  %v115 = vld [vmem:[%s1 + $0x154] sm:$0xf]
  %v116 = vld [vmem:[%s1 + $0x158] sm:$0xf]
  %v117 = vld [vmem:[%s1 + $0x15c] sm:$0xf]
  %v118 = vld [vmem:[%s1 + $0x160] sm:$0xf]
  %v119 = vld [vmem:[%s1 + $0x164] sm:$0xf]
  %v120 = vld [vmem:[%s1 + $0x168] sm:$0xf]
  %v121 = vld [vmem:[%s1 + $0x16c] sm:$0xf]
  %v122 = vld [vmem:[%s1 + $0x170] sm:$0xf]
  %v123 = vld [vmem:[%s1 + $0x174] sm:$0xf]
  %v124 = vld [vmem:[%s1 + $0x178] sm:$0xf]
  %v125 = vld [vmem:[%s1 + $0x17c] sm:$0xf]
  %v126 = vld [vmem:[%s1 + $0x180] sm:$0xf]
  %v127 = vld [vmem:[%s1 + $0x184] sm:$0xf]
  %v128 = vld [vmem:[%s1 + $0x188] sm:$0xf]
  %v129 = vld [vmem:[%s1 + $0x18c] sm:$0xf]
  %v130 = vld [vmem:[%s1 + $0x190] sm:$0xf]
  %v131 = vld [vmem:[%s1 + $0x194] sm:$0xf]
  %v132 = vld [vmem:[%s1 + $0x198] sm:$0xf]
  %v133 = vld [vmem:[%s1 + $0x19c] sm:$0xf]
  %v134 = vld [vmem:[%s1 + $0x1a0] sm:$0xf]
  %v135 = vld [vmem:[%s1 + $0x1a4] sm:$0xf]
  %v136 = vld [vmem:[%s1 + $0x1a8] sm:$0xf]
  %v137 = vld [vmem:[%s1 + $0x1ac] sm:$0xf]
  %v138 = vld [vmem:[%s1 + $0x1b0] sm:$0xf]
  %v139 = vld [vmem:[%s1 + $0x1b4] sm:$0xf]
  %v140 = vld [vmem:[%s1 + $0x1b8] sm:$0xf]
  %v141 = vld [vmem:[%s1 + $0x1bc] sm:$0xf]
  %v142 = vld [vmem:[%s1 + $0x1c0] sm:$0xf]
  %v143 = vld [vmem:[%s1 + $0x1c4] sm:$0xf]
  %v144 = vld [vmem:[%s1 + $0x1c8] sm:$0xf]
  %v145 = vld [vmem:[%s1 + $0x1cc] sm:$0xf]
  %v146 = vld [vmem:[%s1 + $0x1d0] sm:$0xf]
  %v147 = vld [vmem:[%s1 + $0x1d4] sm:$0xf]
  %v148 = vld [vmem:[%s1 + $0x1d8] sm:$0xf]
  %v149 = vld [vmem:[%s1 + $0x1dc] sm:$0xf]
  %v150 = vld [vmem:[%s1 + $0x1e0] sm:$0xf]
  %v151 = vld [vmem:[%s1 + $0x1e4] sm:$0xf]
  %v152 = vld [vmem:[%s1 + $0x1e8] sm:$0xf]
  %v153 = vld [vmem:[%s1 + $0x1ec] sm:$0xf]
  %v154 = vld [vmem:[%s1 + $0x1f0] sm:$0xf]
  %v155 = vld [vmem:[%s1 + $0x1f4] sm:$0xf]
  %v156 = vld [vmem:[%s1 + $0x1f8] sm:$0xf]
  %v157 = vld [vmem:[%s1 + $0x1fc] sm:$0xf]
  %v170 = vunpack.c.l.b16 %v18
  %v171 = vunpack.c.h.b16 %v18
  %v172 = vunpack.c.l.b16 %v19
  %v173 = vunpack.c.h.b16 %v19
  %v174 = vunpack.c.l.b16 %v20
  %v175 = vunpack.c.h.b16 %v20
  %v176 = vunpack.c.l.b16 %v21
  %v177 = vunpack.c.h.b16 %v21
  %v178 = vunpack.c.l.b16 %v22
  %v179 = vunpack.c.h.b16 %v22
  %v180 = vunpack.c.l.b16 %v23
  %v181 = vunpack.c.h.b16 %v23
  %v182 = vunpack.c.l.b16 %v24
  %v183 = vunpack.c.h.b16 %v24
  %v184 = vunpack.c.l.b16 %v25
  %v185 = vunpack.c.h.b16 %v25
  %v186 = vunpack.c.l.b16 %v26
  %v187 = vunpack.c.h.b16 %v26
  %v188 = vunpack.c.l.b16 %v27
  %v189 = vunpack.c.h.b16 %v27
  %v190 = vunpack.c.l.b16 %v28
  %v191 = vunpack.c.h.b16 %v28
  %v192 = vunpack.c.l.b16 %v29
  %v193 = vunpack.c.h.b16 %v29
  %v194 = vpack.c.b16 %v178, %v170
  %v195 = vpack.c.b16 %v179, %v171
  %v196 = vpack.c.b16 %v180, %v172
  %v197 = vpack.c.b16 %v181, %v173
  %v198 = vpack.c.b16 %v182, %v174
  %v199 = vpack.c.b16 %v183, %v175
  %v200 = vpack.c.b16 %v184, %v176
  %v201 = vpack.c.b16 %v185, %v177
  %v202 = vpack.c.b16 %v186, %v186
  %v203 = vpack.c.b16 %v187, %v187
  %v204 = vpack.c.b16 %v188, %v188
  %v205 = vpack.c.b16 %v189, %v189
  %v206 = vpack.c.b16 %v190, %v190
  %v207 = vpack.c.b16 %v191, %v191
  %v208 = vpack.c.b16 %v192, %v192
  %v209 = vpack.c.b16 %v193, %v193
  %v354 = vunpack.c.l.b16 %v30
  %v355 = vunpack.c.l.b16 %v31
  %v356 = vunpack.c.l.b16 %v32
  %v357 = vunpack.c.l.b16 %v33
  %v358 = vunpack.c.l.b16 %v34
  %v359 = vunpack.c.l.b16 %v35
  %v360 = vunpack.c.l.b16 %v36
  %v361 = vunpack.c.l.b16 %v37
  %v362 = vunpack.c.l.b16 %v38
  %v363 = vunpack.c.l.b16 %v39
  %v364 = vunpack.c.l.b16 %v40
  %v365 = vunpack.c.l.b16 %v41
  %v366 = vunpack.c.l.b16 %v42
  %v367 = vunpack.c.l.b16 %v43
  %v368 = vunpack.c.l.b16 %v44
  %v369 = vunpack.c.l.b16 %v45
  %v370 = vunpack.c.l.b16 %v46
  %v371 = vunpack.c.l.b16 %v47
  %v372 = vunpack.c.l.b16 %v48
  %v373 = vunpack.c.l.b16 %v49
  %v374 = vunpack.c.l.b16 %v50
  %v375 = vunpack.c.l.b16 %v51
  %v376 = vunpack.c.l.b16 %v52
  %v377 = vunpack.c.l.b16 %v53
  %v378 = vunpack.c.l.b16 %v54
  %v379 = vunpack.c.l.b16 %v55
  %v380 = vunpack.c.l.b16 %v56
  %v381 = vunpack.c.l.b16 %v57
  %v382 = vunpack.c.l.b16 %v58
  %v383 = vunpack.c.l.b16 %v59
  %v384 = vunpack.c.l.b16 %v60
  %v385 = vunpack.c.l.b16 %v61
  %v386 = vunpack.c.l.b16 %v62
  %v387 = vunpack.c.l.b16 %v63
  %v388 = vunpack.c.l.b16 %v64
  %v389 = vunpack.c.l.b16 %v65
  %v390 = vunpack.c.l.b16 %v66
  %v391 = vunpack.c.l.b16 %v67
  %v392 = vunpack.c.l.b16 %v68
  %v393 = vunpack.c.l.b16 %v69
  %v394 = vunpack.c.l.b16 %v70
  %v395 = vunpack.c.l.b16 %v71
  %v396 = vunpack.c.l.b16 %v72
  %v397 = vunpack.c.l.b16 %v73
  %v398 = vunpack.c.l.b16 %v74
  %v399 = vunpack.c.l.b16 %v75
  %v400 = vunpack.c.l.b16 %v76
  %v401 = vunpack.c.l.b16 %v77
  %v402 = vunpack.c.l.b16 %v78
  %v403 = vunpack.c.l.b16 %v79
  %v404 = vunpack.c.l.b16 %v80
  %v405 = vunpack.c.l.b16 %v81
  %v406 = vunpack.c.l.b16 %v82
  %v407 = vunpack.c.l.b16 %v83
  %v408 = vunpack.c.l.b16 %v84
  %v409 = vunpack.c.l.b16 %v85
  %v410 = vunpack.c.l.b16 %v86
  %v411 = vunpack.c.l.b16 %v87
  %v412 = vunpack.c.l.b16 %v88
  %v413 = vunpack.c.l.b16 %v89
  %v414 = vunpack.c.l.b16 %v90
  %v415 = vunpack.c.l.b16 %v91
  %v416 = vunpack.c.l.b16 %v92
  %v417 = vunpack.c.l.b16 %v93
  %v418 = vunpack.c.l.b16 %v94
  %v419 = vunpack.c.l.b16 %v95
  %v420 = vunpack.c.l.b16 %v96
  %v421 = vunpack.c.l.b16 %v97
  %v422 = vunpack.c.l.b16 %v98
  %v423 = vunpack.c.l.b16 %v99
  %v424 = vunpack.c.l.b16 %v100
  %v425 = vunpack.c.l.b16 %v101
  %v426 = vunpack.c.l.b16 %v102
  %v427 = vunpack.c.l.b16 %v103
  %v428 = vunpack.c.l.b16 %v104
  %v429 = vunpack.c.l.b16 %v105
  %v430 = vunpack.c.l.b16 %v106
  %v431 = vunpack.c.l.b16 %v107
  %v432 = vunpack.c.l.b16 %v108
  %v433 = vunpack.c.l.b16 %v109
  %v434 = vunpack.c.l.b16 %v110
  %v435 = vunpack.c.l.b16 %v111
  %v436 = vunpack.c.l.b16 %v112
  %v437 = vunpack.c.l.b16 %v113
  %v438 = vunpack.c.l.b16 %v114
  %v439 = vunpack.c.l.b16 %v115
  %v440 = vunpack.c.l.b16 %v116
  %v441 = vunpack.c.l.b16 %v117
  %v442 = vunpack.c.l.b16 %v118
  %v443 = vunpack.c.l.b16 %v119
  %v444 = vunpack.c.l.b16 %v120
  %v445 = vunpack.c.l.b16 %v121
  %v446 = vunpack.c.l.b16 %v122
  %v447 = vunpack.c.l.b16 %v123
  %v448 = vunpack.c.l.b16 %v124
  %v449 = vunpack.c.l.b16 %v125
  %v450 = vunpack.c.l.b16 %v126
  %v451 = vunpack.c.l.b16 %v127
  %v452 = vunpack.c.l.b16 %v128
  %v453 = vunpack.c.l.b16 %v129
  %v454 = vunpack.c.l.b16 %v130
  %v455 = vunpack.c.l.b16 %v131
  %v456 = vunpack.c.l.b16 %v132
  %v457 = vunpack.c.l.b16 %v133
  %v458 = vunpack.c.l.b16 %v134
  %v459 = vunpack.c.l.b16 %v135
  %v460 = vunpack.c.l.b16 %v136
  %v461 = vunpack.c.l.b16 %v137
  %v462 = vunpack.c.l.b16 %v138
  %v463 = vunpack.c.l.b16 %v139
  %v464 = vunpack.c.l.b16 %v140
  %v465 = vunpack.c.l.b16 %v141
  %v466 = vunpack.c.l.b16 %v142
  %v467 = vunpack.c.l.b16 %v143
  %v468 = vunpack.c.l.b16 %v144
  %v469 = vunpack.c.l.b16 %v145
  %v470 = vunpack.c.l.b16 %v146
  %v471 = vunpack.c.l.b16 %v147
  %v472 = vunpack.c.l.b16 %v148
  %v473 = vunpack.c.l.b16 %v149
  %v474 = vunpack.c.l.b16 %v150
  %v475 = vunpack.c.l.b16 %v151
  %v476 = vunpack.c.l.b16 %v152
  %v477 = vunpack.c.l.b16 %v153
  %v478 = vunpack.c.l.b16 %v154
  %v479 = vunpack.c.l.b16 %v155
  %v480 = vunpack.c.l.b16 %v156
  %v481 = vunpack.c.l.b16 %v157
  %v482 = vpack.c.b16 %v355, %v354
  %v483 = vpack.c.b16 %v357, %v356
  %v484 = vpack.c.b16 %v359, %v358
  %v485 = vpack.c.b16 %v361, %v360
  %v486 = vpack.c.b16 %v363, %v362
  %v487 = vpack.c.b16 %v365, %v364
  %v488 = vpack.c.b16 %v367, %v366
  %v489 = vpack.c.b16 %v369, %v368
  %v490 = vpack.c.b16 %v371, %v370
  %v491 = vpack.c.b16 %v373, %v372
  %v492 = vpack.c.b16 %v375, %v374
  %v493 = vpack.c.b16 %v377, %v376
  %v494 = vpack.c.b16 %v379, %v378
  %v495 = vpack.c.b16 %v381, %v380
  %v496 = vpack.c.b16 %v383, %v382
  %v497 = vpack.c.b16 %v385, %v384
  %v498 = vpack.c.b16 %v387, %v386
  %v499 = vpack.c.b16 %v389, %v388
  %v500 = vpack.c.b16 %v391, %v390
  %v501 = vpack.c.b16 %v393, %v392
  %v502 = vpack.c.b16 %v395, %v394
  %v503 = vpack.c.b16 %v397, %v396
  %v504 = vpack.c.b16 %v399, %v398
  %v505 = vpack.c.b16 %v401, %v400
  %v506 = vpack.c.b16 %v403, %v402
  %v507 = vpack.c.b16 %v405, %v404
  %v508 = vpack.c.b16 %v407, %v406
  %v509 = vpack.c.b16 %v409, %v408
  %v510 = vpack.c.b16 %v411, %v410
  %v511 = vpack.c.b16 %v413, %v412
  %v512 = vpack.c.b16 %v415, %v414
  %v513 = vpack.c.b16 %v417, %v416
  %v514 = vpack.c.b16 %v419, %v418
  %v515 = vpack.c.b16 %v421, %v420
  %v516 = vpack.c.b16 %v423, %v422
  %v517 = vpack.c.b16 %v425, %v424
  %v518 = vpack.c.b16 %v427, %v426
  %v519 = vpack.c.b16 %v429, %v428
  %v520 = vpack.c.b16 %v431, %v430
  %v521 = vpack.c.b16 %v433, %v432
  %v522 = vpack.c.b16 %v435, %v434
  %v523 = vpack.c.b16 %v437, %v436
  %v524 = vpack.c.b16 %v439, %v438
  %v525 = vpack.c.b16 %v441, %v440
  %v526 = vpack.c.b16 %v443, %v442
  %v527 = vpack.c.b16 %v445, %v444
  %v528 = vpack.c.b16 %v447, %v446
  %v529 = vpack.c.b16 %v449, %v448
  %v530 = vpack.c.b16 %v451, %v450
  %v531 = vpack.c.b16 %v453, %v452
  %v532 = vpack.c.b16 %v455, %v454
  %v533 = vpack.c.b16 %v457, %v456
  %v534 = vpack.c.b16 %v459, %v458
  %v535 = vpack.c.b16 %v461, %v460
  %v536 = vpack.c.b16 %v463, %v462
  %v537 = vpack.c.b16 %v465, %v464
  %v538 = vpack.c.b16 %v467, %v466
  %v539 = vpack.c.b16 %v469, %v468
  %v540 = vpack.c.b16 %v471, %v470
  %v541 = vpack.c.b16 %v473, %v472
  %v542 = vpack.c.b16 %v475, %v474
  %v543 = vpack.c.b16 %v477, %v476
  %v544 = vpack.c.b16 %v479, %v478
  %v545 = vpack.c.b16 %v481, %v480
  %610 = vmatprep.subr.bf16.mxu0 0
  %611 = vmatpush1.bf16.msra.mxu0 %v482
  %612 = vmatprep.subr.bf16.mxu0 0
  %613 = vmatpush1.bf16.msra.mxu0 %v483
  %614 = vmatprep.subr.bf16.mxu0 0
  %615 = vmatpush1.bf16.msra.mxu0 %v484
  %616 = vmatprep.subr.bf16.mxu0 0
  %617 = vmatpush1.bf16.msra.mxu0 %v485
  %618 = vmatprep.subr.bf16.mxu0 0
  %619 = vmatpush1.bf16.msra.mxu0 %v486
  %620 = vmatprep.subr.bf16.mxu0 0
  %621 = vmatpush1.bf16.msra.mxu0 %v487
  %622 = vmatprep.subr.bf16.mxu0 0
  %623 = vmatpush1.bf16.msra.mxu0 %v488
  %624 = vmatprep.subr.bf16.mxu0 0
  %625 = vmatpush1.bf16.msra.mxu0 %v489
  %626 = vmatprep.subr.bf16.mxu0 0
  %627 = vmatpush1.bf16.msra.mxu0 %v490
  %628 = vmatprep.subr.bf16.mxu0 0
  %629 = vmatpush1.bf16.msra.mxu0 %v491
  %630 = vmatprep.subr.bf16.mxu0 0
  %631 = vmatpush1.bf16.msra.mxu0 %v492
  %632 = vmatprep.subr.bf16.mxu0 0
  %633 = vmatpush1.bf16.msra.mxu0 %v493
  %634 = vmatprep.subr.bf16.mxu0 0
  %635 = vmatpush1.bf16.msra.mxu0 %v494
  %636 = vmatprep.subr.bf16.mxu0 0
  %637 = vmatpush1.bf16.msra.mxu0 %v495
  %638 = vmatprep.subr.bf16.mxu0 0
  %639 = vmatpush1.bf16.msra.mxu0 %v496
  %640 = vmatprep.subr.bf16.mxu0 0
  %641 = vmatpush1.bf16.msra.mxu0 %v497
  %642 = vmatprep.mubr.bf16.mxu0 %v195
  %643 = vmatmul.mubr.bf16.gmra.mrb[0].mxu0 %v194
  %v644 = vpop.f32.mrb[0].mxu0
  %v645 = vadd.f32 0.0, %v644
  %v646 = vpop.f32.mrb[0].mxu0
  %v647 = vpop.f32.mrb[0].mxu0
  %v648 = vadd.f32 0.0, %v647
  %v649 = vpop.f32.mrb[0].mxu0
  %650 = vmatprep.mubr.bf16.mxu0 %v203
  %651 = vmatmul.mubr.bf16.gmra.mrb[0].mxu0 %v202
  %v652 = vpop.f32.mrb[0].mxu0
  %v653 = vadd.f32 0.0, %v652
  %v654 = vpop.f32.mrb[0].mxu0
  %v655 = vpop.f32.mrb[0].mxu0
  %v656 = vpop.f32.mrb[0].mxu0
  %657 = vdwg.mxu0
  %658 = vmatprep.subr.bf16.mxu0 0
  %659 = vmatpush1.bf16.msra.mxu0 %v498
  %660 = vmatprep.subr.bf16.mxu0 0
  %661 = vmatpush1.bf16.msra.mxu0 %v499
  %662 = vmatprep.subr.bf16.mxu0 0
  %663 = vmatpush1.bf16.msra.mxu0 %v500
  %664 = vmatprep.subr.bf16.mxu0 0
  %665 = vmatpush1.bf16.msra.mxu0 %v501
  %666 = vmatprep.subr.bf16.mxu0 0
  %667 = vmatpush1.bf16.msra.mxu0 %v502
  %668 = vmatprep.subr.bf16.mxu0 0
  %669 = vmatpush1.bf16.msra.mxu0 %v503
  %670 = vmatprep.subr.bf16.mxu0 0
  %671 = vmatpush1.bf16.msra.mxu0 %v504
  %672 = vmatprep.subr.bf16.mxu0 0
  %673 = vmatpush1.bf16.msra.mxu0 %v505
  %674 = vmatprep.subr.bf16.mxu0 0
  %675 = vmatpush1.bf16.msra.mxu0 %v506
  %676 = vmatprep.subr.bf16.mxu0 0
  %677 = vmatpush1.bf16.msra.mxu0 %v507
  %678 = vmatprep.subr.bf16.mxu0 0
  %679 = vmatpush1.bf16.msra.mxu0 %v508
  %680 = vmatprep.subr.bf16.mxu0 0
  %681 = vmatpush1.bf16.msra.mxu0 %v509
  %682 = vmatprep.subr.bf16.mxu0 0
  %683 = vmatpush1.bf16.msra.mxu0 %v510
  %684 = vmatprep.subr.bf16.mxu0 0
  %685 = vmatpush1.bf16.msra.mxu0 %v511
  %686 = vmatprep.subr.bf16.mxu0 0
  %687 = vmatpush1.bf16.msra.mxu0 %v512
  %688 = vmatprep.subr.bf16.mxu0 0
  %689 = vmatpush1.bf16.msra.mxu0 %v513
  %690 = vmatprep.mubr.bf16.mxu0 %v197
  %691 = vmatmul.mubr.bf16.gmra.mrb[0].mxu0 %v196
  %v692 = vpop.f32.mrb[0].mxu0
  %v693 = vadd.f32 %v645, %v692
  %v694 = vpop.f32.mrb[0].mxu0
  %v695 = vpop.f32.mrb[0].mxu0
  %v696 = vadd.f32 %v648, %v695
  %v697 = vpop.f32.mrb[0].mxu0
  %698 = vmatprep.mubr.bf16.mxu0 %v205
  %699 = vmatmul.mubr.bf16.gmra.mrb[0].mxu0 %v204
  %v700 = vpop.f32.mrb[0].mxu0
  %v701 = vadd.f32 %v653, %v700
  %v702 = vpop.f32.mrb[0].mxu0
  %v703 = vpop.f32.mrb[0].mxu0
  %v704 = vpop.f32.mrb[0].mxu0
  %705 = vdwg.mxu0
  %706 = vmatprep.subr.bf16.mxu0 0
  %707 = vmatpush1.bf16.msra.mxu0 %v514
  %708 = vmatprep.subr.bf16.mxu0 0
  %709 = vmatpush1.bf16.msra.mxu0 %v515
  %710 = vmatprep.subr.bf16.mxu0 0
  %711 = vmatpush1.bf16.msra.mxu0 %v516
  %712 = vmatprep.subr.bf16.mxu0 0
  %713 = vmatpush1.bf16.msra.mxu0 %v517
  %714 = vmatprep.subr.bf16.mxu0 0
  %715 = vmatpush1.bf16.msra.mxu0 %v518
  %716 = vmatprep.subr.bf16.mxu0 0
  %717 = vmatpush1.bf16.msra.mxu0 %v519
  %718 = vmatprep.subr.bf16.mxu0 0
  %719 = vmatpush1.bf16.msra.mxu0 %v520
  %720 = vmatprep.subr.bf16.mxu0 0
  %721 = vmatpush1.bf16.msra.mxu0 %v521
  %722 = vmatprep.subr.bf16.mxu0 0
  %723 = vmatpush1.bf16.msra.mxu0 %v522
  %724 = vmatprep.subr.bf16.mxu0 0
  %725 = vmatpush1.bf16.msra.mxu0 %v523
  %726 = vmatprep.subr.bf16.mxu0 0
  %727 = vmatpush1.bf16.msra.mxu0 %v524
  %728 = vmatprep.subr.bf16.mxu0 0
  %729 = vmatpush1.bf16.msra.mxu0 %v525
  %730 = vmatprep.subr.bf16.mxu0 0
  %731 = vmatpush1.bf16.msra.mxu0 %v526
  %732 = vmatprep.subr.bf16.mxu0 0
  %733 = vmatpush1.bf16.msra.mxu0 %v527
  %734 = vmatprep.subr.bf16.mxu0 0
  %735 = vmatpush1.bf16.msra.mxu0 %v528
  %736 = vmatprep.subr.bf16.mxu0 0
  %737 = vmatpush1.bf16.msra.mxu0 %v529
  %738 = vmatprep.mubr.bf16.mxu0 %v199
  %739 = vmatmul.mubr.bf16.gmra.mrb[0].mxu0 %v198
  %v740 = vpop.f32.mrb[0].mxu0
  %v741 = vadd.f32 %v693, %v740
  %v742 = vpop.f32.mrb[0].mxu0
  %v743 = vpop.f32.mrb[0].mxu0
  %v744 = vadd.f32 %v696, %v743
  %v745 = vpop.f32.mrb[0].mxu0
  %746 = vmatprep.mubr.bf16.mxu0 %v207
  %747 = vmatmul.mubr.bf16.gmra.mrb[0].mxu0 %v206
  %v748 = vpop.f32.mrb[0].mxu0
  %v749 = vadd.f32 %v701, %v748
  %v750 = vpop.f32.mrb[0].mxu0
  %v751 = vpop.f32.mrb[0].mxu0
  %v752 = vpop.f32.mrb[0].mxu0
  %753 = vdwg.mxu0
  %754 = vmatprep.subr.bf16.mxu0 0
  %755 = vmatpush1.bf16.msra.mxu0 %v530
  %756 = vmatprep.subr.bf16.mxu0 0
  %757 = vmatpush1.bf16.msra.mxu0 %v531
  %758 = vmatprep.subr.bf16.mxu0 0
  %759 = vmatpush1.bf16.msra.mxu0 %v532
  %760 = vmatprep.subr.bf16.mxu0 0
  %761 = vmatpush1.bf16.msra.mxu0 %v533
  %762 = vmatprep.subr.bf16.mxu0 0
  %763 = vmatpush1.bf16.msra.mxu0 %v534
  %764 = vmatprep.subr.bf16.mxu0 0
  %765 = vmatpush1.bf16.msra.mxu0 %v535
  %766 = vmatprep.subr.bf16.mxu0 0
  %767 = vmatpush1.bf16.msra.mxu0 %v536
  %768 = vmatprep.subr.bf16.mxu0 0
  %769 = vmatpush1.bf16.msra.mxu0 %v537
  %770 = vmatprep.subr.bf16.mxu0 0
  %771 = vmatpush1.bf16.msra.mxu0 %v538
  %772 = vmatprep.subr.bf16.mxu0 0
  %773 = vmatpush1.bf16.msra.mxu0 %v539
  %774 = vmatprep.subr.bf16.mxu0 0
  %775 = vmatpush1.bf16.msra.mxu0 %v540
  %776 = vmatprep.subr.bf16.mxu0 0
  %777 = vmatpush1.bf16.msra.mxu0 %v541
  %778 = vmatprep.subr.bf16.mxu0 0
  %779 = vmatpush1.bf16.msra.mxu0 %v542
  %780 = vmatprep.subr.bf16.mxu0 0
  %781 = vmatpush1.bf16.msra.mxu0 %v543
  %782 = vmatprep.subr.bf16.mxu0 0
  %783 = vmatpush1.bf16.msra.mxu0 %v544
  %784 = vmatprep.subr.bf16.mxu0 0
  %785 = vmatpush1.bf16.msra.mxu0 %v545
  %786 = vmatprep.mubr.bf16.mxu0 %v201
  %787 = vmatmul.mubr.bf16.gmra.mrb[0].mxu0 %v200
  %v788 = vpop.f32.mrb[0].mxu0
  %v789 = vadd.f32 %v741, %v788
  %v790 = vpop.f32.mrb[0].mxu0
  %v791 = vpop.f32.mrb[0].mxu0
  %v792 = vadd.f32 %v744, %v791
  %v793 = vpop.f32.mrb[0].mxu0
  %794 = vmatprep.mubr.bf16.mxu0 %v209
  %795 = vmatmul.mubr.bf16.gmra.mrb[0].mxu0 %v208
  %v796 = vpop.f32.mrb[0].mxu0
  %v797 = vadd.f32 %v749, %v796
  %v798 = vpop.f32.mrb[0].mxu0
  %v799 = vpop.f32.mrb[0].mxu0
  %v800 = vpop.f32.mrb[0].mxu0
  %801 = vdwg.mxu0
  %v802 = vadd.f32 %v789, %v792
  %vm803 = vcmask 1041408
  %v804 = vsel %vm803, %v797, 0.0
  %v805 = vadd.f32 %v802, %v804
  %v806 = vrot.slane %v805, 4
  %v807 = vadd.f32 %v805, %v806
  %v808 = vrot.slane %v807, 2
  %v809 = vadd.f32 %v807, %v808
  %v810 = vrot.slane %v809, 1
  %v811 = vadd.f32 %v809, %v810
  %v812 = vmul.f32 %v811, 0.055555556
  %v813 = vsub.f32 %v789, %v812
  %v814 = vsub.f32 %v792, %v812
  %v815 = vsub.f32 %v797, %v812
  %v816 = vmul.f32 %v813, %v813
  %v817 = vmul.f32 %v814, %v814
  %v818 = vmul.f32 %v815, %v815
  %v819 = vadd.f32 %v816, %v817
  %v820 = vsel %vm803, %v818, 0.0
  %v821 = vadd.f32 %v819, %v820
  %v822 = vrot.slane %v821, 4
  %v823 = vadd.f32 %v821, %v822
  %v824 = vrot.slane %v823, 2
  %v825 = vadd.f32 %v823, %v824
  %v826 = vrot.slane %v825, 1
  %v827 = vadd.f32 %v825, %v826
  %v828 = vmul.f32 %v827, 0.055555556
  %v829 = vld [vmem:[%s2] sm:$0x1]
  %v830 = vadd.f32 %v828, 1e-05
  %v831 = vrsqrt.pop %v830
  %v832 = vmul.f32 %v829, %v831
  %v834 = vlaneseq
  %v835 = vshrl.u32 %v834, 7
  %v836 = vsub.s32 0, %v835
  %v837 = vrot.slane %v832, %v836
  %v839 = vmul.f32 %v813, %v837
  %v840 = vmul.f32 %v814, %v837
  %v841 = vmul.f32 %v815, %v837
  %v842 = vld [vmem:[%s3] sm:$0x1]
  %v844 = vlaneseq
  %v845 = vshrl.u32 %v844, 7
  %v846 = vsub.s32 0, %v845
  %v847 = vrot.slane %v842, %v846
  %v849 = vadd.f32 %v839, %v847
  %v850 = vadd.f32 %v840, %v847
  %v851 = vadd.f32 %v841, %v847
  %v852 = vmul.f32 %v849, 0.2
  %v853 = vmul.f32 %v850, 0.2
  %v854 = vmul.f32 %v851, 0.2
  %v855 = vmax.f32 %v849, %v852
  %v856 = vmax.f32 %v850, %v853
  %v857 = vmax.f32 %v851, %v854
  %v858 = vpack.c.bf16 %v856, %v855
  %v859 = vpack.c.bf16 %v857, %v857
  %v862 = vunpack.c.l.b16 %v858
  %v863 = vunpack.c.h.b16 %v858
  %v864 = vunpack.c.l.b16 %v859
  %v865 = vpack.c.b16 %v862, %v862
  %v866 = vpack.c.b16 %v863, %v863
  %v867 = vpack.c.b16 %v864, %v864
  %871 = vst [vmem:[%s4] sm:$0xf] %v865
  %872 = vst [vmem:[%s4 + $0x4] sm:$0xf] %v866
  %873 = vst [vmem:[%s4 + $0x8] sm:$0x1] %v867
  // Predicated region
  $region18: #{forward.8} parent=0 // pred_check
    _
  $region19: #{forward.8} parent=0 // pred_check_branch
    %875 = sbr.rel (0) target = $region21
  $region20: #{forward.8} parent=0 // pred_region
    _
  $region21: #{forward.8} parent=0 // pred_fallthru
    _
  // Predicated region
  $region22: #{forward.8} parent=0 // pred_check
    _
  $region23: #{forward.8} parent=0 // pred_check_branch
    %877 = sbr.rel (0) target = $region25
  $region24: #{forward.8} parent=0 // pred_region
    _
  $region25: #{forward.8} parent=0 // pred_fallthru
    _

// kernel: forward.9
$region0: #{forward.9}
  #allocation0 [shape = 'u32[]', space=smem, size = 0x4, offset = 0x4, fixed_abs, tag = 'smem constant byte address 0x4 - core index']
  #allocation1 [shape = 'u32[144,128]{1,0:T(1,128)}', space=vmem, size = 0x12000, scoped, tag = 'internal scratch']
  #allocation2 [shape = 'f32[1,1]{1,0:T(1,128)S(1)}', space=vmem, size = 0x200, scoped, tag = 'scoped memory for forward.9']
  %s0 = inlined_call_operand.vmem [shape: bf16[8,2048], index: 0, kind: input, shape index: {}]
  %s1 = inlined_call_operand.vmem [shape: bf16[2048,1], index: 1, kind: input, shape index: {}]
  %s2 = inlined_call_operand.<no memory space> [shape: f32[1,1], index: 2, kind: input, shape index: {}]
  %s3 = inlined_call_operand.vmem [shape: f32[8,1], index: 3, kind: output, shape index: {}]
  %s4 = sld [smem:[#allocation0]]
  $region22: #{forward.9} parent=0
    _
  %s6 = ssub.s32 1, %s4
  %s7 = scalar_select 0, %s6, %s4
  %v8 = vstv %s2
  %9 = vst [vmem:[#allocation2] sm:$0x1] %v8
  // Predicated region
  $region2: #{forward.9} parent=0 // pred_check
    _
  $region3: #{forward.9} parent=0 // pred_check_branch
    %11 = sbr.rel (0) target = $region5
  $region4: #{forward.9} parent=0 // pred_region
    _
  $region5: #{forward.9} parent=0 // pred_fallthru
    _
  // Predicated region
  $region6: #{forward.9} parent=0 // pred_check
    _
  $region7: #{forward.9} parent=0 // pred_check_branch
    %13 = sbr.rel (0) target = $region9
  $region8: #{forward.9} parent=0 // pred_region
    _
  $region9: #{forward.9} parent=0 // pred_fallthru
    _
  // Predicated region
  $region10: #{forward.9} parent=0 // pred_check
    _
  $region11: #{forward.9} parent=0 // pred_check_branch
    %15 = sbr.rel (0) target = $region13
  $region12: #{forward.9} parent=0 // pred_region
    _
  $region13: #{forward.9} parent=0 // pred_fallthru
    _
  %v17 = vld [vmem:[%s0] sm:$0xff]
  %v18 = vld [vmem:[%s0 + $0x8] sm:$0xff]
  %v19 = vld [vmem:[%s0 + $0x10] sm:$0xff]
  %v20 = vld [vmem:[%s0 + $0x18] sm:$0xff]
  %v21 = vld [vmem:[%s0 + $0x20] sm:$0xff]
  %v22 = vld [vmem:[%s0 + $0x28] sm:$0xff]
  %v23 = vld [vmem:[%s0 + $0x30] sm:$0xff]
  %v24 = vld [vmem:[%s0 + $0x38] sm:$0xff]
  %v25 = vld [vmem:[%s1] sm:$0xf]
  %v26 = vld [vmem:[%s1 + $0x4] sm:$0xf]
  %v27 = vld [vmem:[%s1 + $0x8] sm:$0xf]
  %v28 = vld [vmem:[%s1 + $0xc] sm:$0xf]
  %v29 = vld [vmem:[%s1 + $0x10] sm:$0xf]
  %v30 = vld [vmem:[%s1 + $0x14] sm:$0xf]
  %v31 = vld [vmem:[%s1 + $0x18] sm:$0xf]
  %v32 = vld [vmem:[%s1 + $0x1c] sm:$0xf]
  %v33 = vld [vmem:[%s1 + $0x20] sm:$0xf]
  %v34 = vld [vmem:[%s1 + $0x24] sm:$0xf]
  %v35 = vld [vmem:[%s1 + $0x28] sm:$0xf]
  %v36 = vld [vmem:[%s1 + $0x2c] sm:$0xf]
  %v37 = vld [vmem:[%s1 + $0x30] sm:$0xf]
  %v38 = vld [vmem:[%s1 + $0x34] sm:$0xf]
  %v39 = vld [vmem:[%s1 + $0x38] sm:$0xf]
  %v40 = vld [vmem:[%s1 + $0x3c] sm:$0xf]
  %v41 = vld [vmem:[%s1 + $0x40] sm:$0xf]
  %v42 = vld [vmem:[%s1 + $0x44] sm:$0xf]
  %v43 = vld [vmem:[%s1 + $0x48] sm:$0xf]
  %v44 = vld [vmem:[%s1 + $0x4c] sm:$0xf]
  %v45 = vld [vmem:[%s1 + $0x50] sm:$0xf]
  %v46 = vld [vmem:[%s1 + $0x54] sm:$0xf]
  %v47 = vld [vmem:[%s1 + $0x58] sm:$0xf]
  %v48 = vld [vmem:[%s1 + $0x5c] sm:$0xf]
  %v49 = vld [vmem:[%s1 + $0x60] sm:$0xf]
  %v50 = vld [vmem:[%s1 + $0x64] sm:$0xf]
  %v51 = vld [vmem:[%s1 + $0x68] sm:$0xf]
  %v52 = vld [vmem:[%s1 + $0x6c] sm:$0xf]
  %v53 = vld [vmem:[%s1 + $0x70] sm:$0xf]
  %v54 = vld [vmem:[%s1 + $0x74] sm:$0xf]
  %v55 = vld [vmem:[%s1 + $0x78] sm:$0xf]
  %v56 = vld [vmem:[%s1 + $0x7c] sm:$0xf]
  %v57 = vld [vmem:[%s1 + $0x80] sm:$0xf]
  %v58 = vld [vmem:[%s1 + $0x84] sm:$0xf]
  %v59 = vld [vmem:[%s1 + $0x88] sm:$0xf]
  %v60 = vld [vmem:[%s1 + $0x8c] sm:$0xf]
  %v61 = vld [vmem:[%s1 + $0x90] sm:$0xf]
  %v62 = vld [vmem:[%s1 + $0x94] sm:$0xf]
  %v63 = vld [vmem:[%s1 + $0x98] sm:$0xf]
  %v64 = vld [vmem:[%s1 + $0x9c] sm:$0xf]
  %v65 = vld [vmem:[%s1 + $0xa0] sm:$0xf]
  %v66 = vld [vmem:[%s1 + $0xa4] sm:$0xf]
  %v67 = vld [vmem:[%s1 + $0xa8] sm:$0xf]
  %v68 = vld [vmem:[%s1 + $0xac] sm:$0xf]
  %v69 = vld [vmem:[%s1 + $0xb0] sm:$0xf]
  %v70 = vld [vmem:[%s1 + $0xb4] sm:$0xf]
  %v71 = vld [vmem:[%s1 + $0xb8] sm:$0xf]
  %v72 = vld [vmem:[%s1 + $0xbc] sm:$0xf]
  %v73 = vld [vmem:[%s1 + $0xc0] sm:$0xf]
  %v74 = vld [vmem:[%s1 + $0xc4] sm:$0xf]
  %v75 = vld [vmem:[%s1 + $0xc8] sm:$0xf]
  %v76 = vld [vmem:[%s1 + $0xcc] sm:$0xf]
  %v77 = vld [vmem:[%s1 + $0xd0] sm:$0xf]
  %v78 = vld [vmem:[%s1 + $0xd4] sm:$0xf]
  %v79 = vld [vmem:[%s1 + $0xd8] sm:$0xf]
  %v80 = vld [vmem:[%s1 + $0xdc] sm:$0xf]
  %v81 = vld [vmem:[%s1 + $0xe0] sm:$0xf]
  %v82 = vld [vmem:[%s1 + $0xe4] sm:$0xf]
  %v83 = vld [vmem:[%s1 + $0xe8] sm:$0xf]
  %v84 = vld [vmem:[%s1 + $0xec] sm:$0xf]
  %v85 = vld [vmem:[%s1 + $0xf0] sm:$0xf]
  %v86 = vld [vmem:[%s1 + $0xf4] sm:$0xf]
  %v87 = vld [vmem:[%s1 + $0xf8] sm:$0xf]
  %v88 = vld [vmem:[%s1 + $0xfc] sm:$0xf]
  %v89 = vld [vmem:[%s1 + $0x100] sm:$0xf]
  %v90 = vld [vmem:[%s1 + $0x104] sm:$0xf]
  %v91 = vld [vmem:[%s1 + $0x108] sm:$0xf]
  %v92 = vld [vmem:[%s1 + $0x10c] sm:$0xf]
  %v93 = vld [vmem:[%s1 + $0x110] sm:$0xf]
  %v94 = vld [vmem:[%s1 + $0x114] sm:$0xf]
  %v95 = vld [vmem:[%s1 + $0x118] sm:$0xf]
  %v96 = vld [vmem:[%s1 + $0x11c] sm:$0xf]
  %v97 = vld [vmem:[%s1 + $0x120] sm:$0xf]
  %v98 = vld [vmem:[%s1 + $0x124] sm:$0xf]
  %v99 = vld [vmem:[%s1 + $0x128] sm:$0xf]
  %v100 = vld [vmem:[%s1 + $0x12c] sm:$0xf]
  %v101 = vld [vmem:[%s1 + $0x130] sm:$0xf]
  %v102 = vld [vmem:[%s1 + $0x134] sm:$0xf]
  %v103 = vld [vmem:[%s1 + $0x138] sm:$0xf]
  %v104 = vld [vmem:[%s1 + $0x13c] sm:$0xf]
  %v105 = vld [vmem:[%s1 + $0x140] sm:$0xf]
  %v106 = vld [vmem:[%s1 + $0x144] sm:$0xf]
  %v107 = vld [vmem:[%s1 + $0x148] sm:$0xf]
  %v108 = vld [vmem:[%s1 + $0x14c] sm:$0xf]
  %v109 = vld [vmem:[%s1 + $0x150] sm:$0xf]
  %v110 = vld [vmem:[%s1 + $0x154] sm:$0xf]
  %v111 = vld [vmem:[%s1 + $0x158] sm:$0xf]
  %v112 = vld [vmem:[%s1 + $0x15c] sm:$0xf]
  %v113 = vld [vmem:[%s1 + $0x160] sm:$0xf]
  %v114 = vld [vmem:[%s1 + $0x164] sm:$0xf]
  %v115 = vld [vmem:[%s1 + $0x168] sm:$0xf]
  %v116 = vld [vmem:[%s1 + $0x16c] sm:$0xf]
  %v117 = vld [vmem:[%s1 + $0x170] sm:$0xf]
  %v118 = vld [vmem:[%s1 + $0x174] sm:$0xf]
  %v119 = vld [vmem:[%s1 + $0x178] sm:$0xf]
  %v120 = vld [vmem:[%s1 + $0x17c] sm:$0xf]
  %v121 = vld [vmem:[%s1 + $0x180] sm:$0xf]
  %v122 = vld [vmem:[%s1 + $0x184] sm:$0xf]
  %v123 = vld [vmem:[%s1 + $0x188] sm:$0xf]
  %v124 = vld [vmem:[%s1 + $0x18c] sm:$0xf]
  %v125 = vld [vmem:[%s1 + $0x190] sm:$0xf]
  %v126 = vld [vmem:[%s1 + $0x194] sm:$0xf]
  %v127 = vld [vmem:[%s1 + $0x198] sm:$0xf]
  %v128 = vld [vmem:[%s1 + $0x19c] sm:$0xf]
  %v129 = vld [vmem:[%s1 + $0x1a0] sm:$0xf]
  %v130 = vld [vmem:[%s1 + $0x1a4] sm:$0xf]
  %v131 = vld [vmem:[%s1 + $0x1a8] sm:$0xf]
  %v132 = vld [vmem:[%s1 + $0x1ac] sm:$0xf]
  %v133 = vld [vmem:[%s1 + $0x1b0] sm:$0xf]
  %v134 = vld [vmem:[%s1 + $0x1b4] sm:$0xf]
  %v135 = vld [vmem:[%s1 + $0x1b8] sm:$0xf]
  %v136 = vld [vmem:[%s1 + $0x1bc] sm:$0xf]
  %v137 = vld [vmem:[%s1 + $0x1c0] sm:$0xf]
  %v138 = vld [vmem:[%s1 + $0x1c4] sm:$0xf]
  %v139 = vld [vmem:[%s1 + $0x1c8] sm:$0xf]
  %v140 = vld [vmem:[%s1 + $0x1cc] sm:$0xf]
  %v141 = vld [vmem:[%s1 + $0x1d0] sm:$0xf]
  %v142 = vld [vmem:[%s1 + $0x1d4] sm:$0xf]
  %v143 = vld [vmem:[%s1 + $0x1d8] sm:$0xf]
  %v144 = vld [vmem:[%s1 + $0x1dc] sm:$0xf]
  %v145 = vld [vmem:[%s1 + $0x1e0] sm:$0xf]
  %v146 = vld [vmem:[%s1 + $0x1e4] sm:$0xf]
  %v147 = vld [vmem:[%s1 + $0x1e8] sm:$0xf]
  %v148 = vld [vmem:[%s1 + $0x1ec] sm:$0xf]
  %v149 = vld [vmem:[%s1 + $0x1f0] sm:$0xf]
  %v150 = vld [vmem:[%s1 + $0x1f4] sm:$0xf]
  %v151 = vld [vmem:[%s1 + $0x1f8] sm:$0xf]
  %v152 = vld [vmem:[%s1 + $0x1fc] sm:$0xf]
  %v153 = vld [vmem:[%s1 + $0x200] sm:$0xf]
  %v154 = vld [vmem:[%s1 + $0x204] sm:$0xf]
  %v155 = vld [vmem:[%s1 + $0x208] sm:$0xf]
  %v156 = vld [vmem:[%s1 + $0x20c] sm:$0xf]
  %v157 = vld [vmem:[%s1 + $0x210] sm:$0xf]
  %v158 = vld [vmem:[%s1 + $0x214] sm:$0xf]
  %v159 = vld [vmem:[%s1 + $0x218] sm:$0xf]
  %v160 = vld [vmem:[%s1 + $0x21c] sm:$0xf]
  %v161 = vld [vmem:[%s1 + $0x220] sm:$0xf]
  %v162 = vld [vmem:[%s1 + $0x224] sm:$0xf]
  %v163 = vld [vmem:[%s1 + $0x228] sm:$0xf]
  %v164 = vld [vmem:[%s1 + $0x22c] sm:$0xf]
  %v165 = vld [vmem:[%s1 + $0x230] sm:$0xf]
  %v166 = vld [vmem:[%s1 + $0x234] sm:$0xf]
  %v167 = vld [vmem:[%s1 + $0x238] sm:$0xf]
  %v168 = vld [vmem:[%s1 + $0x23c] sm:$0xf]
  %v169 = vld [vmem:[%s1 + $0x240] sm:$0xf]
  %v170 = vld [vmem:[%s1 + $0x244] sm:$0xf]
  %v171 = vld [vmem:[%s1 + $0x248] sm:$0xf]
  %v172 = vld [vmem:[%s1 + $0x24c] sm:$0xf]
  %v173 = vld [vmem:[%s1 + $0x250] sm:$0xf]
  %v174 = vld [vmem:[%s1 + $0x254] sm:$0xf]
  %v175 = vld [vmem:[%s1 + $0x258] sm:$0xf]
  %v176 = vld [vmem:[%s1 + $0x25c] sm:$0xf]
  %v177 = vld [vmem:[%s1 + $0x260] sm:$0xf]
  %v178 = vld [vmem:[%s1 + $0x264] sm:$0xf]
  %v179 = vld [vmem:[%s1 + $0x268] sm:$0xf]
  %v180 = vld [vmem:[%s1 + $0x26c] sm:$0xf]
  %v181 = vld [vmem:[%s1 + $0x270] sm:$0xf]
  %v182 = vld [vmem:[%s1 + $0x274] sm:$0xf]
  %v183 = vld [vmem:[%s1 + $0x278] sm:$0xf]
  %v184 = vld [vmem:[%s1 + $0x27c] sm:$0xf]
  %v185 = vld [vmem:[%s1 + $0x280] sm:$0xf]
  %v186 = vld [vmem:[%s1 + $0x284] sm:$0xf]
  %v187 = vld [vmem:[%s1 + $0x288] sm:$0xf]
  %v188 = vld [vmem:[%s1 + $0x28c] sm:$0xf]
  %v189 = vld [vmem:[%s1 + $0x290] sm:$0xf]
  %v190 = vld [vmem:[%s1 + $0x294] sm:$0xf]
  %v191 = vld [vmem:[%s1 + $0x298] sm:$0xf]
  %v192 = vld [vmem:[%s1 + $0x29c] sm:$0xf]
  %v193 = vld [vmem:[%s1 + $0x2a0] sm:$0xf]
  %v194 = vld [vmem:[%s1 + $0x2a4] sm:$0xf]
  %v195 = vld [vmem:[%s1 + $0x2a8] sm:$0xf]
  %v196 = vld [vmem:[%s1 + $0x2ac] sm:$0xf]
  %v197 = vld [vmem:[%s1 + $0x2b0] sm:$0xf]
  %v198 = vld [vmem:[%s1 + $0x2b4] sm:$0xf]
  %v199 = vld [vmem:[%s1 + $0x2b8] sm:$0xf]
  %v200 = vld [vmem:[%s1 + $0x2bc] sm:$0xf]
  %v201 = vld [vmem:[%s1 + $0x2c0] sm:$0xf]
  %v202 = vld [vmem:[%s1 + $0x2c4] sm:$0xf]
  %v203 = vld [vmem:[%s1 + $0x2c8] sm:$0xf]
  %v204 = vld [vmem:[%s1 + $0x2cc] sm:$0xf]
  %v205 = vld [vmem:[%s1 + $0x2d0] sm:$0xf]
  %v206 = vld [vmem:[%s1 + $0x2d4] sm:$0xf]
  %v207 = vld [vmem:[%s1 + $0x2d8] sm:$0xf]
  %v208 = vld [vmem:[%s1 + $0x2dc] sm:$0xf]
  %v209 = vld [vmem:[%s1 + $0x2e0] sm:$0xf]
  %v210 = vld [vmem:[%s1 + $0x2e4] sm:$0xf]
  %v211 = vld [vmem:[%s1 + $0x2e8] sm:$0xf]
  %v212 = vld [vmem:[%s1 + $0x2ec] sm:$0xf]
  %v213 = vld [vmem:[%s1 + $0x2f0] sm:$0xf]
  %v214 = vld [vmem:[%s1 + $0x2f4] sm:$0xf]
  %v215 = vld [vmem:[%s1 + $0x2f8] sm:$0xf]
  %v216 = vld [vmem:[%s1 + $0x2fc] sm:$0xf]
  %v217 = vld [vmem:[%s1 + $0x300] sm:$0xf]
  %v218 = vld [vmem:[%s1 + $0x304] sm:$0xf]
  %v219 = vld [vmem:[%s1 + $0x308] sm:$0xf]
  %v220 = vld [vmem:[%s1 + $0x30c] sm:$0xf]
  %v221 = vld [vmem:[%s1 + $0x310] sm:$0xf]
  %v222 = vld [vmem:[%s1 + $0x314] sm:$0xf]
  %v223 = vld [vmem:[%s1 + $0x318] sm:$0xf]
  %v224 = vld [vmem:[%s1 + $0x31c] sm:$0xf]
  %v225 = vld [vmem:[%s1 + $0x320] sm:$0xf]
  %v226 = vld [vmem:[%s1 + $0x324] sm:$0xf]
  %v227 = vld [vmem:[%s1 + $0x328] sm:$0xf]
  %v228 = vld [vmem:[%s1 + $0x32c] sm:$0xf]
  %v229 = vld [vmem:[%s1 + $0x330] sm:$0xf]
  %v230 = vld [vmem:[%s1 + $0x334] sm:$0xf]
  %v231 = vld [vmem:[%s1 + $0x338] sm:$0xf]
  %v232 = vld [vmem:[%s1 + $0x33c] sm:$0xf]
  %v233 = vld [vmem:[%s1 + $0x340] sm:$0xf]
  %v234 = vld [vmem:[%s1 + $0x344] sm:$0xf]
  %v235 = vld [vmem:[%s1 + $0x348] sm:$0xf]
  %v236 = vld [vmem:[%s1 + $0x34c] sm:$0xf]
  %v237 = vld [vmem:[%s1 + $0x350] sm:$0xf]
  %v238 = vld [vmem:[%s1 + $0x354] sm:$0xf]
  %v239 = vld [vmem:[%s1 + $0x358] sm:$0xf]
  %v240 = vld [vmem:[%s1 + $0x35c] sm:$0xf]
  %v241 = vld [vmem:[%s1 + $0x360] sm:$0xf]
  %v242 = vld [vmem:[%s1 + $0x364] sm:$0xf]
  %v243 = vld [vmem:[%s1 + $0x368] sm:$0xf]
  %v244 = vld [vmem:[%s1 + $0x36c] sm:$0xf]
  %v245 = vld [vmem:[%s1 + $0x370] sm:$0xf]
  %v246 = vld [vmem:[%s1 + $0x374] sm:$0xf]
  %v247 = vld [vmem:[%s1 + $0x378] sm:$0xf]
  %v248 = vld [vmem:[%s1 + $0x37c] sm:$0xf]
  %v249 = vld [vmem:[%s1 + $0x380] sm:$0xf]
  %v250 = vld [vmem:[%s1 + $0x384] sm:$0xf]
  %v251 = vld [vmem:[%s1 + $0x388] sm:$0xf]
  %v252 = vld [vmem:[%s1 + $0x38c] sm:$0xf]
  %v253 = vld [vmem:[%s1 + $0x390] sm:$0xf]
  %v254 = vld [vmem:[%s1 + $0x394] sm:$0xf]
  %v255 = vld [vmem:[%s1 + $0x398] sm:$0xf]
  %v256 = vld [vmem:[%s1 + $0x39c] sm:$0xf]
  %v257 = vld [vmem:[%s1 + $0x3a0] sm:$0xf]
  %v258 = vld [vmem:[%s1 + $0x3a4] sm:$0xf]
  %v259 = vld [vmem:[%s1 + $0x3a8] sm:$0xf]
  %v260 = vld [vmem:[%s1 + $0x3ac] sm:$0xf]
  %v261 = vld [vmem:[%s1 + $0x3b0] sm:$0xf]
  %v262 = vld [vmem:[%s1 + $0x3b4] sm:$0xf]
  %v263 = vld [vmem:[%s1 + $0x3b8] sm:$0xf]
  %v264 = vld [vmem:[%s1 + $0x3bc] sm:$0xf]
  %v265 = vld [vmem:[%s1 + $0x3c0] sm:$0xf]
  %v266 = vld [vmem:[%s1 + $0x3c4] sm:$0xf]
  %v267 = vld [vmem:[%s1 + $0x3c8] sm:$0xf]
  %v268 = vld [vmem:[%s1 + $0x3cc] sm:$0xf]
  %v269 = vld [vmem:[%s1 + $0x3d0] sm:$0xf]
  %v270 = vld [vmem:[%s1 + $0x3d4] sm:$0xf]
  %v271 = vld [vmem:[%s1 + $0x3d8] sm:$0xf]
  %v272 = vld [vmem:[%s1 + $0x3dc] sm:$0xf]
  %v273 = vld [vmem:[%s1 + $0x3e0] sm:$0xf]
  %v274 = vld [vmem:[%s1 + $0x3e4] sm:$0xf]
  %v275 = vld [vmem:[%s1 + $0x3e8] sm:$0xf]
  %v276 = vld [vmem:[%s1 + $0x3ec] sm:$0xf]
  %v277 = vld [vmem:[%s1 + $0x3f0] sm:$0xf]
  %v278 = vld [vmem:[%s1 + $0x3f4] sm:$0xf]
  %v279 = vld [vmem:[%s1 + $0x3f8] sm:$0xf]
  %v280 = vld [vmem:[%s1 + $0x3fc] sm:$0xf]
  %v281 = vld [vmem:[#allocation2] sm:$0x1]
  %v283 = vlaneseq
  %v284 = vshrl.u32 %v283, 7
  %v285 = vsub.s32 0, %v284
  %v286 = vrot.slane %v281, %v285
  %v296 = vunpack.c.l.b16 %v17
  %v297 = vunpack.c.h.b16 %v17
  %v298 = vunpack.c.l.b16 %v18
  %v299 = vunpack.c.h.b16 %v18
  %v300 = vunpack.c.l.b16 %v19
  %v301 = vunpack.c.h.b16 %v19
  %v302 = vunpack.c.l.b16 %v20
  %v303 = vunpack.c.h.b16 %v20
  %v304 = vunpack.c.l.b16 %v21
  %v305 = vunpack.c.h.b16 %v21
  %v306 = vunpack.c.l.b16 %v22
  %v307 = vunpack.c.h.b16 %v22
  %v308 = vunpack.c.l.b16 %v23
  %v309 = vunpack.c.h.b16 %v23
  %v310 = vunpack.c.l.b16 %v24
  %v311 = vunpack.c.h.b16 %v24
  %v312 = vpack.c.b16 %v296, %v296
  %v313 = vpack.c.b16 %v297, %v297
  %v314 = vpack.c.b16 %v298, %v298
  %v315 = vpack.c.b16 %v299, %v299
  %v316 = vpack.c.b16 %v300, %v300
  %v317 = vpack.c.b16 %v301, %v301
  %v318 = vpack.c.b16 %v302, %v302
  %v319 = vpack.c.b16 %v303, %v303
  %v320 = vpack.c.b16 %v304, %v304
  %v321 = vpack.c.b16 %v305, %v305
  %v322 = vpack.c.b16 %v306, %v306
  %v323 = vpack.c.b16 %v307, %v307
  %v324 = vpack.c.b16 %v308, %v308
  %v325 = vpack.c.b16 %v309, %v309
  %v326 = vpack.c.b16 %v310, %v310
  %v327 = vpack.c.b16 %v311, %v311
  %v600 = vunpack.c.l.b16 %v25
  %v601 = vunpack.c.l.b16 %v26
  %v602 = vunpack.c.l.b16 %v27
  %v603 = vunpack.c.l.b16 %v28
  %v604 = vunpack.c.l.b16 %v29
  %v605 = vunpack.c.l.b16 %v30
  %v606 = vunpack.c.l.b16 %v31
  %v607 = vunpack.c.l.b16 %v32
  %v608 = vunpack.c.l.b16 %v33
  %v609 = vunpack.c.l.b16 %v34
  %v610 = vunpack.c.l.b16 %v35
  %v611 = vunpack.c.l.b16 %v36
  %v612 = vunpack.c.l.b16 %v37
  %v613 = vunpack.c.l.b16 %v38
  %v614 = vunpack.c.l.b16 %v39
  %v615 = vunpack.c.l.b16 %v40
  %v616 = vunpack.c.l.b16 %v41
  %v617 = vunpack.c.l.b16 %v42
  %v618 = vunpack.c.l.b16 %v43
  %v619 = vunpack.c.l.b16 %v44
  %v620 = vunpack.c.l.b16 %v45
  %v621 = vunpack.c.l.b16 %v46
  %v622 = vunpack.c.l.b16 %v47
  %v623 = vunpack.c.l.b16 %v48
  %v624 = vunpack.c.l.b16 %v49
  %v625 = vunpack.c.l.b16 %v50
  %v626 = vunpack.c.l.b16 %v51
  %v627 = vunpack.c.l.b16 %v52
  %v628 = vunpack.c.l.b16 %v53
  %v629 = vunpack.c.l.b16 %v54
  %v630 = vunpack.c.l.b16 %v55
  %v631 = vunpack.c.l.b16 %v56
  %v632 = vunpack.c.l.b16 %v57
  %v633 = vunpack.c.l.b16 %v58
  %v634 = vunpack.c.l.b16 %v59
  %v635 = vunpack.c.l.b16 %v60
  %v636 = vunpack.c.l.b16 %v61
  %v637 = vunpack.c.l.b16 %v62
  %v638 = vunpack.c.l.b16 %v63
  %v639 = vunpack.c.l.b16 %v64
  %v640 = vunpack.c.l.b16 %v65
  %v641 = vunpack.c.l.b16 %v66
  %v642 = vunpack.c.l.b16 %v67
  %v643 = vunpack.c.l.b16 %v68
  %v644 = vunpack.c.l.b16 %v69
  %v645 = vunpack.c.l.b16 %v70
  %v646 = vunpack.c.l.b16 %v71
  %v647 = vunpack.c.l.b16 %v72
  %v648 = vunpack.c.l.b16 %v73
  %v649 = vunpack.c.l.b16 %v74
  %v650 = vunpack.c.l.b16 %v75
  %v651 = vunpack.c.l.b16 %v76
  %v652 = vunpack.c.l.b16 %v77
  %v653 = vunpack.c.l.b16 %v78
  %v654 = vunpack.c.l.b16 %v79
  %v655 = vunpack.c.l.b16 %v80
  %v656 = vunpack.c.l.b16 %v81
  %v657 = vunpack.c.l.b16 %v82
  %v658 = vunpack.c.l.b16 %v83
  %v659 = vunpack.c.l.b16 %v84
  %v660 = vunpack.c.l.b16 %v85
  %v661 = vunpack.c.l.b16 %v86
  %v662 = vunpack.c.l.b16 %v87
  %v663 = vunpack.c.l.b16 %v88
  %v664 = vunpack.c.l.b16 %v89
  %v665 = vunpack.c.l.b16 %v90
  %v666 = vunpack.c.l.b16 %v91
  %v667 = vunpack.c.l.b16 %v92
  %v668 = vunpack.c.l.b16 %v93
  %v669 = vunpack.c.l.b16 %v94
  %v670 = vunpack.c.l.b16 %v95
  %v671 = vunpack.c.l.b16 %v96
  %v672 = vunpack.c.l.b16 %v97
  %v673 = vunpack.c.l.b16 %v98
  %v674 = vunpack.c.l.b16 %v99
  %v675 = vunpack.c.l.b16 %v100
  %v676 = vunpack.c.l.b16 %v101
  %v677 = vunpack.c.l.b16 %v102
  %v678 = vunpack.c.l.b16 %v103
  %v679 = vunpack.c.l.b16 %v104
  %v680 = vunpack.c.l.b16 %v105
  %v681 = vunpack.c.l.b16 %v106
  %v682 = vunpack.c.l.b16 %v107
  %v683 = vunpack.c.l.b16 %v108
  %v684 = vunpack.c.l.b16 %v109
  %v685 = vunpack.c.l.b16 %v110
  %v686 = vunpack.c.l.b16 %v111
  %v687 = vunpack.c.l.b16 %v112
  %v688 = vunpack.c.l.b16 %v113
  %v689 = vunpack.c.l.b16 %v114
  %v690 = vunpack.c.l.b16 %v115
  %v691 = vunpack.c.l.b16 %v116
  %v692 = vunpack.c.l.b16 %v117
  %v693 = vunpack.c.l.b16 %v118
  %v694 = vunpack.c.l.b16 %v119
  %v695 = vunpack.c.l.b16 %v120
  %v696 = vunpack.c.l.b16 %v121
  %v697 = vunpack.c.l.b16 %v122
  %v698 = vunpack.c.l.b16 %v123
  %v699 = vunpack.c.l.b16 %v124
  %v700 = vunpack.c.l.b16 %v125
  %v701 = vunpack.c.l.b16 %v126
  %v702 = vunpack.c.l.b16 %v127
  %v703 = vunpack.c.l.b16 %v128
  %v704 = vunpack.c.l.b16 %v129
  %v705 = vunpack.c.l.b16 %v130
  %v706 = vunpack.c.l.b16 %v131
  %v707 = vunpack.c.l.b16 %v132
  %v708 = vunpack.c.l.b16 %v133
  %v709 = vunpack.c.l.b16 %v134
  %v710 = vunpack.c.l.b16 %v135
  %v711 = vunpack.c.l.b16 %v136
  %v712 = vunpack.c.l.b16 %v137
  %v713 = vunpack.c.l.b16 %v138
  %v714 = vunpack.c.l.b16 %v139
  %v715 = vunpack.c.l.b16 %v140
  %v716 = vunpack.c.l.b16 %v141
  %v717 = vunpack.c.l.b16 %v142
  %v718 = vunpack.c.l.b16 %v143
  %v719 = vunpack.c.l.b16 %v144
  %v720 = vunpack.c.l.b16 %v145
  %v721 = vunpack.c.l.b16 %v146
  %v722 = vunpack.c.l.b16 %v147
  %v723 = vunpack.c.l.b16 %v148
  %v724 = vunpack.c.l.b16 %v149
  %v725 = vunpack.c.l.b16 %v150
  %v726 = vunpack.c.l.b16 %v151
  %v727 = vunpack.c.l.b16 %v152
  %v728 = vunpack.c.l.b16 %v153
  %v729 = vunpack.c.l.b16 %v154
  %v730 = vunpack.c.l.b16 %v155
  %v731 = vunpack.c.l.b16 %v156
  %v732 = vunpack.c.l.b16 %v157
  %v733 = vunpack.c.l.b16 %v158
  %v734 = vunpack.c.l.b16 %v159
  %v735 = vunpack.c.l.b16 %v160
  %v736 = vunpack.c.l.b16 %v161
  %v737 = vunpack.c.l.b16 %v162
  %v738 = vunpack.c.l.b16 %v163
  %v739 = vunpack.c.l.b16 %v164
  %v740 = vunpack.c.l.b16 %v165
  %v741 = vunpack.c.l.b16 %v166
  %v742 = vunpack.c.l.b16 %v167
  %v743 = vunpack.c.l.b16 %v168
  %v744 = vunpack.c.l.b16 %v169
  %v745 = vunpack.c.l.b16 %v170
  %v746 = vunpack.c.l.b16 %v171
  %v747 = vunpack.c.l.b16 %v172
  %v748 = vunpack.c.l.b16 %v173
  %v749 = vunpack.c.l.b16 %v174
  %v750 = vunpack.c.l.b16 %v175
  %v751 = vunpack.c.l.b16 %v176
  %v752 = vunpack.c.l.b16 %v177
  %v753 = vunpack.c.l.b16 %v178
  %v754 = vunpack.c.l.b16 %v179
  %v755 = vunpack.c.l.b16 %v180
  %v756 = vunpack.c.l.b16 %v181
  %v757 = vunpack.c.l.b16 %v182
  %v758 = vunpack.c.l.b16 %v183
  %v759 = vunpack.c.l.b16 %v184
  %v760 = vunpack.c.l.b16 %v185
  %v761 = vunpack.c.l.b16 %v186
  %v762 = vunpack.c.l.b16 %v187
  %v763 = vunpack.c.l.b16 %v188
  %v764 = vunpack.c.l.b16 %v189
  %v765 = vunpack.c.l.b16 %v190
  %v766 = vunpack.c.l.b16 %v191
  %v767 = vunpack.c.l.b16 %v192
  %v768 = vunpack.c.l.b16 %v193
  %v769 = vunpack.c.l.b16 %v194
  %v770 = vunpack.c.l.b16 %v195
  %v771 = vunpack.c.l.b16 %v196
  %v772 = vunpack.c.l.b16 %v197
  %v773 = vunpack.c.l.b16 %v198
  %v774 = vunpack.c.l.b16 %v199
  %v775 = vunpack.c.l.b16 %v200
  %v776 = vunpack.c.l.b16 %v201
  %v777 = vunpack.c.l.b16 %v202
  %v778 = vunpack.c.l.b16 %v203
  %v779 = vunpack.c.l.b16 %v204
  %v780 = vunpack.c.l.b16 %v205
  %v781 = vunpack.c.l.b16 %v206
  %v782 = vunpack.c.l.b16 %v207
  %v783 = vunpack.c.l.b16 %v208
  %v784 = vunpack.c.l.b16 %v209
  %v785 = vunpack.c.l.b16 %v210
  %v786 = vunpack.c.l.b16 %v211
  %v787 = vunpack.c.l.b16 %v212
  %v788 = vunpack.c.l.b16 %v213
  %v789 = vunpack.c.l.b16 %v214
  %v790 = vunpack.c.l.b16 %v215
  %v791 = vunpack.c.l.b16 %v216
  %v792 = vunpack.c.l.b16 %v217
  %v793 = vunpack.c.l.b16 %v218
  %v794 = vunpack.c.l.b16 %v219
  %v795 = vunpack.c.l.b16 %v220
  %v796 = vunpack.c.l.b16 %v221
  %v797 = vunpack.c.l.b16 %v222
  %v798 = vunpack.c.l.b16 %v223
  %v799 = vunpack.c.l.b16 %v224
  %v800 = vunpack.c.l.b16 %v225
  %v801 = vunpack.c.l.b16 %v226
  %v802 = vunpack.c.l.b16 %v227
  %v803 = vunpack.c.l.b16 %v228
  %v804 = vunpack.c.l.b16 %v229
  %v805 = vunpack.c.l.b16 %v230
  %v806 = vunpack.c.l.b16 %v231
  %v807 = vunpack.c.l.b16 %v232
  %v808 = vunpack.c.l.b16 %v233
  %v809 = vunpack.c.l.b16 %v234
  %v810 = vunpack.c.l.b16 %v235
  %v811 = vunpack.c.l.b16 %v236
  %v812 = vunpack.c.l.b16 %v237
  %v813 = vunpack.c.l.b16 %v238
  %v814 = vunpack.c.l.b16 %v239
  %v815 = vunpack.c.l.b16 %v240
  %v816 = vunpack.c.l.b16 %v241
  %v817 = vunpack.c.l.b16 %v242
  %v818 = vunpack.c.l.b16 %v243
  %v819 = vunpack.c.l.b16 %v244
  %v820 = vunpack.c.l.b16 %v245
  %v821 = vunpack.c.l.b16 %v246
  %v822 = vunpack.c.l.b16 %v247
  %v823 = vunpack.c.l.b16 %v248
  %v824 = vunpack.c.l.b16 %v249
  %v825 = vunpack.c.l.b16 %v250
  %v826 = vunpack.c.l.b16 %v251
  %v827 = vunpack.c.l.b16 %v252
  %v828 = vunpack.c.l.b16 %v253
  %v829 = vunpack.c.l.b16 %v254
  %v830 = vunpack.c.l.b16 %v255
  %v831 = vunpack.c.l.b16 %v256
  %v832 = vunpack.c.l.b16 %v257
  %v833 = vunpack.c.l.b16 %v258
  %v834 = vunpack.c.l.b16 %v259
  %v835 = vunpack.c.l.b16 %v260
  %v836 = vunpack.c.l.b16 %v261
  %v837 = vunpack.c.l.b16 %v262
  %v838 = vunpack.c.l.b16 %v263
  %v839 = vunpack.c.l.b16 %v264
  %v840 = vunpack.c.l.b16 %v265
  %v841 = vunpack.c.l.b16 %v266
  %v842 = vunpack.c.l.b16 %v267
  %v843 = vunpack.c.l.b16 %v268
  %v844 = vunpack.c.l.b16 %v269
  %v845 = vunpack.c.l.b16 %v270
  %v846 = vunpack.c.l.b16 %v271
  %v847 = vunpack.c.l.b16 %v272
  %v848 = vunpack.c.l.b16 %v273
  %v849 = vunpack.c.l.b16 %v274
  %v850 = vunpack.c.l.b16 %v275
  %v851 = vunpack.c.l.b16 %v276
  %v852 = vunpack.c.l.b16 %v277
  %v853 = vunpack.c.l.b16 %v278
  %v854 = vunpack.c.l.b16 %v279
  %v855 = vunpack.c.l.b16 %v280
  %v856 = vpack.c.b16 %v601, %v600
  %v857 = vpack.c.b16 %v603, %v602
  %v858 = vpack.c.b16 %v605, %v604
  %v859 = vpack.c.b16 %v607, %v606
  %v860 = vpack.c.b16 %v609, %v608
  %v861 = vpack.c.b16 %v611, %v610
  %v862 = vpack.c.b16 %v613, %v612
  %v863 = vpack.c.b16 %v615, %v614
  %v864 = vpack.c.b16 %v617, %v616
  %v865 = vpack.c.b16 %v619, %v618
  %v866 = vpack.c.b16 %v621, %v620
  %v867 = vpack.c.b16 %v623, %v622
  %v868 = vpack.c.b16 %v625, %v624
  %v869 = vpack.c.b16 %v627, %v626
  %v870 = vpack.c.b16 %v629, %v628
  %v871 = vpack.c.b16 %v631, %v630
  %v872 = vpack.c.b16 %v633, %v632
  %v873 = vpack.c.b16 %v635, %v634
  %v874 = vpack.c.b16 %v637, %v636
  %v875 = vpack.c.b16 %v639, %v638
  %v876 = vpack.c.b16 %v641, %v640
  %v877 = vpack.c.b16 %v643, %v642
  %v878 = vpack.c.b16 %v645, %v644
  %v879 = vpack.c.b16 %v647, %v646
  %v880 = vpack.c.b16 %v649, %v648
  %v881 = vpack.c.b16 %v651, %v650
  %v882 = vpack.c.b16 %v653, %v652
  %v883 = vpack.c.b16 %v655, %v654
  %v884 = vpack.c.b16 %v657, %v656
  %v885 = vpack.c.b16 %v659, %v658
  %v886 = vpack.c.b16 %v661, %v660
  %v887 = vpack.c.b16 %v663, %v662
  %v888 = vpack.c.b16 %v665, %v664
  %v889 = vpack.c.b16 %v667, %v666
  %v890 = vpack.c.b16 %v669, %v668
  %v891 = vpack.c.b16 %v671, %v670
  %v892 = vpack.c.b16 %v673, %v672
  %v893 = vpack.c.b16 %v675, %v674
  %v894 = vpack.c.b16 %v677, %v676
  %v895 = vpack.c.b16 %v679, %v678
  %v896 = vpack.c.b16 %v681, %v680
  %v897 = vpack.c.b16 %v683, %v682
  %v898 = vpack.c.b16 %v685, %v684
  %v899 = vpack.c.b16 %v687, %v686
  %v900 = vpack.c.b16 %v689, %v688
  %v901 = vpack.c.b16 %v691, %v690
  %v902 = vpack.c.b16 %v693, %v692
  %v903 = vpack.c.b16 %v695, %v694
  %v904 = vpack.c.b16 %v697, %v696
  %v905 = vpack.c.b16 %v699, %v698
  %v906 = vpack.c.b16 %v701, %v700
  %v907 = vpack.c.b16 %v703, %v702
  %v908 = vpack.c.b16 %v705, %v704
  %v909 = vpack.c.b16 %v707, %v706
  %v910 = vpack.c.b16 %v709, %v708
  %v911 = vpack.c.b16 %v711, %v710
  %v912 = vpack.c.b16 %v713, %v712
  %v913 = vpack.c.b16 %v715, %v714
  %v914 = vpack.c.b16 %v717, %v716
  %v915 = vpack.c.b16 %v719, %v718
  %v916 = vpack.c.b16 %v721, %v720
  %v917 = vpack.c.b16 %v723, %v722
  %v918 = vpack.c.b16 %v725, %v724
  %v919 = vpack.c.b16 %v727, %v726
  %v920 = vpack.c.b16 %v729, %v728
  %v921 = vpack.c.b16 %v731, %v730
  %v922 = vpack.c.b16 %v733, %v732
  %v923 = vpack.c.b16 %v735, %v734
  %v924 = vpack.c.b16 %v737, %v736
  %v925 = vpack.c.b16 %v739, %v738
  %v926 = vpack.c.b16 %v741, %v740
  %v927 = vpack.c.b16 %v743, %v742
  %v928 = vpack.c.b16 %v745, %v744
  %v929 = vpack.c.b16 %v747, %v746
  %v930 = vpack.c.b16 %v749, %v748
  %v931 = vpack.c.b16 %v751, %v750
  %v932 = vpack.c.b16 %v753, %v752
  %v933 = vpack.c.b16 %v755, %v754
  %v934 = vpack.c.b16 %v757, %v756
  %v935 = vpack.c.b16 %v759, %v758
  %v936 = vpack.c.b16 %v761, %v760
  %v937 = vpack.c.b16 %v763, %v762
  %v938 = vpack.c.b16 %v765, %v764
  %v939 = vpack.c.b16 %v767, %v766
  %v940 = vpack.c.b16 %v769, %v768
  %v941 = vpack.c.b16 %v771, %v770
  %v942 = vpack.c.b16 %v773, %v772
  %v943 = vpack.c.b16 %v775, %v774
  %v944 = vpack.c.b16 %v777, %v776
  %v945 = vpack.c.b16 %v779, %v778
  %v946 = vpack.c.b16 %v781, %v780
  %v947 = vpack.c.b16 %v783, %v782
  %v948 = vpack.c.b16 %v785, %v784
  %v949 = vpack.c.b16 %v787, %v786
  %v950 = vpack.c.b16 %v789, %v788
  %v951 = vpack.c.b16 %v791, %v790
  %v952 = vpack.c.b16 %v793, %v792
  %v953 = vpack.c.b16 %v795, %v794
  %v954 = vpack.c.b16 %v797, %v796
  %v955 = vpack.c.b16 %v799, %v798
  %v956 = vpack.c.b16 %v801, %v800
  %v957 = vpack.c.b16 %v803, %v802
  %v958 = vpack.c.b16 %v805, %v804
  %v959 = vpack.c.b16 %v807, %v806
  %v960 = vpack.c.b16 %v809, %v808
  %v961 = vpack.c.b16 %v811, %v810
  %v962 = vpack.c.b16 %v813, %v812
  %v963 = vpack.c.b16 %v815, %v814
  %v964 = vpack.c.b16 %v817, %v816
  %v965 = vpack.c.b16 %v819, %v818
  %v966 = vpack.c.b16 %v821, %v820
  %v967 = vpack.c.b16 %v823, %v822
  %v968 = vpack.c.b16 %v825, %v824
  %v969 = vpack.c.b16 %v827, %v826
  %v970 = vpack.c.b16 %v829, %v828
  %v971 = vpack.c.b16 %v831, %v830
  %v972 = vpack.c.b16 %v833, %v832
  %v973 = vpack.c.b16 %v835, %v834
  %v974 = vpack.c.b16 %v837, %v836
  %v975 = vpack.c.b16 %v839, %v838
  %v976 = vpack.c.b16 %v841, %v840
  %v977 = vpack.c.b16 %v843, %v842
  %v978 = vpack.c.b16 %v845, %v844
  %v979 = vpack.c.b16 %v847, %v846
  %v980 = vpack.c.b16 %v849, %v848
  %v981 = vpack.c.b16 %v851, %v850
  %v982 = vpack.c.b16 %v853, %v852
  %v983 = vpack.c.b16 %v855, %v854
  %1112 = vmatprep.subr.bf16.mxu0 0
  %1113 = vmatpush1.bf16.msra.mxu0 %v856
  %1114 = vmatprep.subr.bf16.mxu0 0
  %1115 = vmatpush1.bf16.msra.mxu0 %v857
  %1116 = vmatprep.subr.bf16.mxu0 0
  %1117 = vmatpush1.bf16.msra.mxu0 %v858
  %1118 = vmatprep.subr.bf16.mxu0 0
  %1119 = vmatpush1.bf16.msra.mxu0 %v859
  %1120 = vmatprep.subr.bf16.mxu0 0
  %1121 = vmatpush1.bf16.msra.mxu0 %v860
  %1122 = vmatprep.subr.bf16.mxu0 0
  %1123 = vmatpush1.bf16.msra.mxu0 %v861
  %1124 = vmatprep.subr.bf16.mxu0 0
  %1125 = vmatpush1.bf16.msra.mxu0 %v862
  %1126 = vmatprep.subr.bf16.mxu0 0
  %1127 = vmatpush1.bf16.msra.mxu0 %v863
  %1128 = vmatprep.subr.bf16.mxu0 0
  %1129 = vmatpush1.bf16.msra.mxu0 %v864
  %1130 = vmatprep.subr.bf16.mxu0 0
  %1131 = vmatpush1.bf16.msra.mxu0 %v865
  %1132 = vmatprep.subr.bf16.mxu0 0
  %1133 = vmatpush1.bf16.msra.mxu0 %v866
  %1134 = vmatprep.subr.bf16.mxu0 0
  %1135 = vmatpush1.bf16.msra.mxu0 %v867
  %1136 = vmatprep.subr.bf16.mxu0 0
  %1137 = vmatpush1.bf16.msra.mxu0 %v868
  %1138 = vmatprep.subr.bf16.mxu0 0
  %1139 = vmatpush1.bf16.msra.mxu0 %v869
  %1140 = vmatprep.subr.bf16.mxu0 0
  %1141 = vmatpush1.bf16.msra.mxu0 %v870
  %1142 = vmatprep.subr.bf16.mxu0 0
  %1143 = vmatpush1.bf16.msra.mxu0 %v871
  %1144 = vmatprep.mubr.bf16.mxu0 %v313
  %1145 = vmatmul.mubr.bf16.gmra.mrb[0].mxu0 %v312
  %v1146 = vpop.f32.mrb[0].mxu0
  %v1147 = vadd.f32 %v286, %v1146
  %v1148 = vpop.f32.mrb[0].mxu0
  %v1149 = vpop.f32.mrb[0].mxu0
  %v1150 = vpop.f32.mrb[0].mxu0
  %1151 = vdwg.mxu0
  %1152 = vmatprep.subr.bf16.mxu0 0
  %1153 = vmatpush1.bf16.msra.mxu0 %v872
  %1154 = vmatprep.subr.bf16.mxu0 0
  %1155 = vmatpush1.bf16.msra.mxu0 %v873
  %1156 = vmatprep.subr.bf16.mxu0 0
  %1157 = vmatpush1.bf16.msra.mxu0 %v874
  %1158 = vmatprep.subr.bf16.mxu0 0
  %1159 = vmatpush1.bf16.msra.mxu0 %v875
  %1160 = vmatprep.subr.bf16.mxu0 0
  %1161 = vmatpush1.bf16.msra.mxu0 %v876
  %1162 = vmatprep.subr.bf16.mxu0 0
  %1163 = vmatpush1.bf16.msra.mxu0 %v877
  %1164 = vmatprep.subr.bf16.mxu0 0
  %1165 = vmatpush1.bf16.msra.mxu0 %v878
  %1166 = vmatprep.subr.bf16.mxu0 0
  %1167 = vmatpush1.bf16.msra.mxu0 %v879
  %1168 = vmatprep.subr.bf16.mxu0 0
  %1169 = vmatpush1.bf16.msra.mxu0 %v880
  %1170 = vmatprep.subr.bf16.mxu0 0
  %1171 = vmatpush1.bf16.msra.mxu0 %v881
  %1172 = vmatprep.subr.bf16.mxu0 0
  %1173 = vmatpush1.bf16.msra.mxu0 %v882
  %1174 = vmatprep.subr.bf16.mxu0 0
  %1175 = vmatpush1.bf16.msra.mxu0 %v883
  %1176 = vmatprep.subr.bf16.mxu0 0
  %1177 = vmatpush1.bf16.msra.mxu0 %v884
  %1178 = vmatprep.subr.bf16.mxu0 0
  %1179 = vmatpush1.bf16.msra.mxu0 %v885
  %1180 = vmatprep.subr.bf16.mxu0 0
  %1181 = vmatpush1.bf16.msra.mxu0 %v886
  %1182 = vmatprep.subr.bf16.mxu0 0
  %1183 = vmatpush1.bf16.msra.mxu0 %v887
  %1184 = vmatprep.mubr.bf16.mxu0 %v315
  %1185 = vmatmul.mubr.bf16.gmra.mrb[0].mxu0 %v314
  %v1186 = vpop.f32.mrb[0].mxu0
  %v1187 = vadd.f32 %v1147, %v1186
  %v1188 = vpop.f32.mrb[0].mxu0
  %v1189 = vpop.f32.mrb[0].mxu0
  %v1190 = vpop.f32.mrb[0].mxu0
  %1191 = vdwg.mxu0
  %1192 = vmatprep.subr.bf16.mxu0 0
  %1193 = vmatpush1.bf16.msra.mxu0 %v888
  %1194 = vmatprep.subr.bf16.mxu0 0
  %1195 = vmatpush1.bf16.msra.mxu0 %v889
  %1196 = vmatprep.subr.bf16.mxu0 0
  %1197 = vmatpush1.bf16.msra.mxu0 %v890
  %1198 = vmatprep.subr.bf16.mxu0 0
  %1199 = vmatpush1.bf16.msra.mxu0 %v891
  %1200 = vmatprep.subr.bf16.mxu0 0
  %1201 = vmatpush1.bf16.msra.mxu0 %v892
  %1202 = vmatprep.subr.bf16.mxu0 0
  %1203 = vmatpush1.bf16.msra.mxu0 %v893
  %1204 = vmatprep.subr.bf16.mxu0 0
  %1205 = vmatpush1.bf16.msra.mxu0 %v894
  %1206 = vmatprep.subr.bf16.mxu0 0
  %1207 = vmatpush1.bf16.msra.mxu0 %v895
  %1208 = vmatprep.subr.bf16.mxu0 0
  %1209 = vmatpush1.bf16.msra.mxu0 %v896
  %1210 = vmatprep.subr.bf16.mxu0 0
  %1211 = vmatpush1.bf16.msra.mxu0 %v897
  %1212 = vmatprep.subr.bf16.mxu0 0
  %1213 = vmatpush1.bf16.msra.mxu0 %v898
  %1214 = vmatprep.subr.bf16.mxu0 0
  %1215 = vmatpush1.bf16.msra.mxu0 %v899
  %1216 = vmatprep.subr.bf16.mxu0 0
  %1217 = vmatpush1.bf16.msra.mxu0 %v900
  %1218 = vmatprep.subr.bf16.mxu0 0
  %1219 = vmatpush1.bf16.msra.mxu0 %v901
  %1220 = vmatprep.subr.bf16.mxu0 0
  %1221 = vmatpush1.bf16.msra.mxu0 %v902
  %1222 = vmatprep.subr.bf16.mxu0 0
  %1223 = vmatpush1.bf16.msra.mxu0 %v903
  %1224 = vmatprep.mubr.bf16.mxu0 %v317
  %1225 = vmatmul.mubr.bf16.gmra.mrb[0].mxu0 %v316
  %v1226 = vpop.f32.mrb[0].mxu0
  %v1227 = vadd.f32 %v1187, %v1226
  %v1228 = vpop.f32.mrb[0].mxu0
  %v1229 = vpop.f32.mrb[0].mxu0
  %v1230 = vpop.f32.mrb[0].mxu0
  %1231 = vdwg.mxu0
  %1232 = vmatprep.subr.bf16.mxu0 0
  %1233 = vmatpush1.bf16.msra.mxu0 %v904
  %1234 = vmatprep.subr.bf16.mxu0 0
  %1235 = vmatpush1.bf16.msra.mxu0 %v905
  %1236 = vmatprep.subr.bf16.mxu0 0
  %1237 = vmatpush1.bf16.msra.mxu0 %v906
  %1238 = vmatprep.subr.bf16.mxu0 0
  %1239 = vmatpush1.bf16.msra.mxu0 %v907
  %1240 = vmatprep.subr.bf16.mxu0 0
  %1241 = vmatpush1.bf16.msra.mxu0 %v908
  %1242 = vmatprep.subr.bf16.mxu0 0
  %1243 = vmatpush1.bf16.msra.mxu0 %v909
  %1244 = vmatprep.subr.bf16.mxu0 0
  %1245 = vmatpush1.bf16.msra.mxu0 %v910
  %1246 = vmatprep.subr.bf16.mxu0 0
  %1247 = vmatpush1.bf16.msra.mxu0 %v911
  %1248 = vmatprep.subr.bf16.mxu0 0
  %1249 = vmatpush1.bf16.msra.mxu0 %v912
  %1250 = vmatprep.subr.bf16.mxu0 0
  %1251 = vmatpush1.bf16.msra.mxu0 %v913
  %1252 = vmatprep.subr.bf16.mxu0 0
  %1253 = vmatpush1.bf16.msra.mxu0 %v914
  %1254 = vmatprep.subr.bf16.mxu0 0
  %1255 = vmatpush1.bf16.msra.mxu0 %v915
  %1256 = vmatprep.subr.bf16.mxu0 0
  %1257 = vmatpush1.bf16.msra.mxu0 %v916
  %1258 = vmatprep.subr.bf16.mxu0 0
  %1259 = vmatpush1.bf16.msra.mxu0 %v917
  %1260 = vmatprep.subr.bf16.mxu0 0
  %1261 = vmatpush1.bf16.msra.mxu0 %v918
  %1262 = vmatprep.subr.bf16.mxu0 0
  %1263 = vmatpush1.bf16.msra.mxu0 %v919
  %1264 = vmatprep.mubr.bf16.mxu0 %v319
  %1265 = vmatmul.mubr.bf16.gmra.mrb[0].mxu0 %v318
  %v1266 = vpop.f32.mrb[0].mxu0
  %v1267 = vadd.f32 %v1227, %v1266
  %v1268 = vpop.f32.mrb[0].mxu0
  %v1269 = vpop.f32.mrb[0].mxu0
  %v1270 = vpop.f32.mrb[0].mxu0
  %1271 = vdwg.mxu0
  %1272 = vmatprep.subr.bf16.mxu0 0
  %1273 = vmatpush1.bf16.msra.mxu0 %v920
  %1274 = vmatprep.subr.bf16.mxu0 0
  %1275 = vmatpush1.bf16.msra.mxu0 %v921
  %1276 = vmatprep.subr.bf16.mxu0 0
  %1277 = vmatpush1.bf16.msra.mxu0 %v922
  %1278 = vmatprep.subr.bf16.mxu0 0
  %1279 = vmatpush1.bf16.msra.mxu0 %v923
  %1280 = vmatprep.subr.bf16.mxu0 0
  %1281 = vmatpush1.bf16.msra.mxu0 %v924
  %1282 = vmatprep.subr.bf16.mxu0 0
  %1283 = vmatpush1.bf16.msra.mxu0 %v925
  %1284 = vmatprep.subr.bf16.mxu0 0
  %1285 = vmatpush1.bf16.msra.mxu0 %v926
  %1286 = vmatprep.subr.bf16.mxu0 0
  %1287 = vmatpush1.bf16.msra.mxu0 %v927
  %1288 = vmatprep.subr.bf16.mxu0 0
  %1289 = vmatpush1.bf16.msra.mxu0 %v928
  %1290 = vmatprep.subr.bf16.mxu0 0
  %1291 = vmatpush1.bf16.msra.mxu0 %v929
  %1292 = vmatprep.subr.bf16.mxu0 0
  %1293 = vmatpush1.bf16.msra.mxu0 %v930
  %1294 = vmatprep.subr.bf16.mxu0 0
  %1295 = vmatpush1.bf16.msra.mxu0 %v931
  %1296 = vmatprep.subr.bf16.mxu0 0
  %1297 = vmatpush1.bf16.msra.mxu0 %v932
  %1298 = vmatprep.subr.bf16.mxu0 0
  %1299 = vmatpush1.bf16.msra.mxu0 %v933
  %1300 = vmatprep.subr.bf16.mxu0 0
  %1301 = vmatpush1.bf16.msra.mxu0 %v934
  %1302 = vmatprep.subr.bf16.mxu0 0
  %1303 = vmatpush1.bf16.msra.mxu0 %v935
  %1304 = vmatprep.mubr.bf16.mxu0 %v321
  %1305 = vmatmul.mubr.bf16.gmra.mrb[0].mxu0 %v320
  %v1306 = vpop.f32.mrb[0].mxu0
  %v1307 = vadd.f32 %v1267, %v1306
  %v1308 = vpop.f32.mrb[0].mxu0
  %v1309 = vpop.f32.mrb[0].mxu0
  %v1310 = vpop.f32.mrb[0].mxu0
  %1311 = vdwg.mxu0
  %1312 = vmatprep.subr.bf16.mxu0 0
  %1313 = vmatpush1.bf16.msra.mxu0 %v936
  %1314 = vmatprep.subr.bf16.mxu0 0
  %1315 = vmatpush1.bf16.msra.mxu0 %v937
  %1316 = vmatprep.subr.bf16.mxu0 0
  %1317 = vmatpush1.bf16.msra.mxu0 %v938
  %1318 = vmatprep.subr.bf16.mxu0 0
  %1319 = vmatpush1.bf16.msra.mxu0 %v939
  %1320 = vmatprep.subr.bf16.mxu0 0
  %1321 = vmatpush1.bf16.msra.mxu0 %v940
  %1322 = vmatprep.subr.bf16.mxu0 0
  %1323 = vmatpush1.bf16.msra.mxu0 %v941
  %1324 = vmatprep.subr.bf16.mxu0 0
  %1325 = vmatpush1.bf16.msra.mxu0 %v942
  %1326 = vmatprep.subr.bf16.mxu0 0
  %1327 = vmatpush1.bf16.msra.mxu0 %v943
  %1328 = vmatprep.subr.bf16.mxu0 0
  %1329 = vmatpush1.bf16.msra.mxu0 %v944
  %1330 = vmatprep.subr.bf16.mxu0 0
  %1331 = vmatpush1.bf16.msra.mxu0 %v945
  %1332 = vmatprep.subr.bf16.mxu0 0
  %1333 = vmatpush1.bf16.msra.mxu0 %v946
  %1334 = vmatprep.subr.bf16.mxu0 0
  %1335 = vmatpush1.bf16.msra.mxu0 %v947
  %1336 = vmatprep.subr.bf16.mxu0 0
  %1337 = vmatpush1.bf16.msra.mxu0 %v948
  %1338 = vmatprep.subr.bf16.mxu0 0
  %1339 = vmatpush1.bf16.msra.mxu0 %v949
  %1340 = vmatprep.subr.bf16.mxu0 0
  %1341 = vmatpush1.bf16.msra.mxu0 %v950
  %1342 = vmatprep.subr.bf16.mxu0 0
  %1343 = vmatpush1.bf16.msra.mxu0 %v951
  %1344 = vmatprep.mubr.bf16.mxu0 %v323
  %1345 = vmatmul.mubr.bf16.gmra.mrb[0].mxu0 %v322
  %v1346 = vpop.f32.mrb[0].mxu0
  %v1347 = vadd.f32 %v1307, %v1346
  %v1348 = vpop.f32.mrb[0].mxu0
  %v1349 = vpop.f32.mrb[0].mxu0
  %v1350 = vpop.f32.mrb[0].mxu0
  %1351 = vdwg.mxu0
  %1352 = vmatprep.subr.bf16.mxu0 0
  %1353 = vmatpush1.bf16.msra.mxu0 %v952
  %1354 = vmatprep.subr.bf16.mxu0 0
  %1355 = vmatpush1.bf16.msra.mxu0 %v953
  %1356 = vmatprep.subr.bf16.mxu0 0
  %1357 = vmatpush1.bf16.msra.mxu0 %v954
  %1358 = vmatprep.subr.bf16.mxu0 0
  %1359 = vmatpush1.bf16.msra.mxu0 %v955
  %1360 = vmatprep.subr.bf16.mxu0 0
  %1361 = vmatpush1.bf16.msra.mxu0 %v956
  %1362 = vmatprep.subr.bf16.mxu0 0
  %1363 = vmatpush1.bf16.msra.mxu0 %v957
  %1364 = vmatprep.subr.bf16.mxu0 0
  %1365 = vmatpush1.bf16.msra.mxu0 %v958
  %1366 = vmatprep.subr.bf16.mxu0 0
  %1367 = vmatpush1.bf16.msra.mxu0 %v959
  %1368 = vmatprep.subr.bf16.mxu0 0
  %1369 = vmatpush1.bf16.msra.mxu0 %v960
  %1370 = vmatprep.subr.bf16.mxu0 0
  %1371 = vmatpush1.bf16.msra.mxu0 %v961
  %1372 = vmatprep.subr.bf16.mxu0 0
  %1373 = vmatpush1.bf16.msra.mxu0 %v962
  %1374 = vmatprep.subr.bf16.mxu0 0
  %1375 = vmatpush1.bf16.msra.mxu0 %v963
  %1376 = vmatprep.subr.bf16.mxu0 0
  %1377 = vmatpush1.bf16.msra.mxu0 %v964
  %1378 = vmatprep.subr.bf16.mxu0 0
  %1379 = vmatpush1.bf16.msra.mxu0 %v965
  %1380 = vmatprep.subr.bf16.mxu0 0
  %1381 = vmatpush1.bf16.msra.mxu0 %v966
  %1382 = vmatprep.subr.bf16.mxu0 0
  %1383 = vmatpush1.bf16.msra.mxu0 %v967
  %1384 = vmatprep.mubr.bf16.mxu0 %v325
  %1385 = vmatmul.mubr.bf16.gmra.mrb[0].mxu0 %v324
  %v1386 = vpop.f32.mrb[0].mxu0
  %v1387 = vadd.f32 %v1347, %v1386
  %v1388 = vpop.f32.mrb[0].mxu0
  %v1389 = vpop.f32.mrb[0].mxu0
  %v1390 = vpop.f32.mrb[0].mxu0
  %1391 = vdwg.mxu0
  %1392 = vmatprep.subr.bf16.mxu0 0
  %1393 = vmatpush1.bf16.msra.mxu0 %v968
  %1394 = vmatprep.subr.bf16.mxu0 0
  %1395 = vmatpush1.bf16.msra.mxu0 %v969
  %1396 = vmatprep.subr.bf16.mxu0 0
  %1397 = vmatpush1.bf16.msra.mxu0 %v970
  %1398 = vmatprep.subr.bf16.mxu0 0
  %1399 = vmatpush1.bf16.msra.mxu0 %v971
  %1400 = vmatprep.subr.bf16.mxu0 0
  %1401 = vmatpush1.bf16.msra.mxu0 %v972
  %1402 = vmatprep.subr.bf16.mxu0 0
  %1403 = vmatpush1.bf16.msra.mxu0 %v973
  %1404 = vmatprep.subr.bf16.mxu0 0
  %1405 = vmatpush1.bf16.msra.mxu0 %v974
  %1406 = vmatprep.subr.bf16.mxu0 0
  %1407 = vmatpush1.bf16.msra.mxu0 %v975
  %1408 = vmatprep.subr.bf16.mxu0 0
  %1409 = vmatpush1.bf16.msra.mxu0 %v976
  %1410 = vmatprep.subr.bf16.mxu0 0
  %1411 = vmatpush1.bf16.msra.mxu0 %v977
  %1412 = vmatprep.subr.bf16.mxu0 0
  %1413 = vmatpush1.bf16.msra.mxu0 %v978
  %1414 = vmatprep.subr.bf16.mxu0 0
  %1415 = vmatpush1.bf16.msra.mxu0 %v979
  %1416 = vmatprep.subr.bf16.mxu0 0
  %1417 = vmatpush1.bf16.msra.mxu0 %v980
  %1418 = vmatprep.subr.bf16.mxu0 0
  %1419 = vmatpush1.bf16.msra.mxu0 %v981
  %1420 = vmatprep.subr.bf16.mxu0 0
  %1421 = vmatpush1.bf16.msra.mxu0 %v982
  %1422 = vmatprep.subr.bf16.mxu0 0
  %1423 = vmatpush1.bf16.msra.mxu0 %v983
  %1424 = vmatprep.mubr.bf16.mxu0 %v327
  %1425 = vmatmul.mubr.bf16.gmra.mrb[0].mxu0 %v326
  %v1426 = vpop.f32.mrb[0].mxu0
  %v1427 = vadd.f32 %v1387, %v1426
  %v1428 = vpop.f32.mrb[0].mxu0
  %v1429 = vpop.f32.mrb[0].mxu0
  %v1430 = vpop.f32.mrb[0].mxu0
  %1431 = vdwg.mxu0
  %vm1432 = vcmask 7168
  %1433 = vst.msk [vmem:[%s3] sm:$0xff] %vm1432, %v1427
  // Predicated region
  $region14: #{forward.9} parent=0 // pred_check
    _
  $region15: #{forward.9} parent=0 // pred_check_branch
    %1435 = sbr.rel (0) target = $region17
  $region16: #{forward.9} parent=0 // pred_region
    _
  $region17: #{forward.9} parent=0 // pred_fallthru
    _
  // Predicated region
  $region18: #{forward.9} parent=0 // pred_check
    _
  $region19: #{forward.9} parent=0 // pred_check_branch
    %1437 = sbr.rel (0) target = $region21
  $region20: #{forward.9} parent=0 // pred_region
    _
  $region21: #{forward.9} parent=0 // pred_fallthru
    _

</llo_original>
